<compile_context>
chip_gen: v7x
topology: tpu7x:2x2x1
jax: 0.10.0
libtpu: 0.0.40
codegen_flags: <defaults>
</compile_context>

<pallas_src>
import functools

import jax
import jax.numpy as jnp
from jax.experimental import pallas as pl
from jax.experimental.pallas import tpu as pltpu


_VMEM_LIMIT = 48 * 1024 * 1024  # explicit; well below v7x 64 MiB physical


# ----------------------------------------------------------------------------
# Kernels
# ----------------------------------------------------------------------------
def _stem_conv_kernel(taps, x_ref, w_ref, b_ref, mask_ref, o_ref):
    """4x4 / stride-2 / pad-1 conv + ReLU, rewritten as a 2x2 valid conv on a
    space-to-depth(2) input.

    x_ref   : (Msf, 4*Cin)    bf16 flat s2d activation (one image)
    w_ref   : (4, 4*Cin, Cout) bf16, one weight matrix per tap
    b_ref   : (1, Cout)        f32
    mask_ref: (M, 1)           f32; zeroes the wrap column so it can serve as
                               zero padding for the next stage (no XLA slice)
    o_ref   : (M, Cout)        bf16
    """
    M, Cout = o_ref.shape
    acc = jnp.zeros((M, Cout), jnp.float32)
    for t, off in enumerate(taps):
        acc = acc + jnp.dot(x_ref[pl.ds(off, M), :], w_ref[t],
                            preferred_element_type=jnp.float32)
    acc = jnp.maximum(acc + b_ref[...], 0.0) * mask_ref[...]
    o_ref[...] = acc.astype(o_ref.dtype)


def _tail_kernel(taps, off, n_res, *refs):
    """Fused tail: 3x3 'same' conv -> n_res x ResBlock -> final ReLU.

    All intermediates stay in VMEM scratch:
      a_scr (Mf, C) f32  : current activation in zero-bordered padded layout
                           (also the residual source, read at the centre tap)
      b_scr (Mf, C) bf16 : ReLU(a_scr), computed once per ResBlock (not per tap)
    """
    if n_res > 0:
        (x_ref, w0_ref, b0_ref, mask_ref,
         wa_ref, ba_ref, wb_ref, bb_ref, o_ref, a_scr, b_scr) = refs
    else:
        x_ref, w0_ref, b0_ref, mask_ref, o_ref = refs

    M, C = o_ref.shape
    ntap = len(taps)

    # --- leading 3x3 conv (no pre-ReLU) -------------------------------------
    acc = jnp.zeros((M, C), jnp.float32)
    for t, o in enumerate(taps):
        acc = acc + jnp.dot(x_ref[pl.ds(o, M), :], w0_ref[t],
                            preferred_element_type=jnp.float32)
    acc = acc + b0_ref[...]

    if n_res == 0:
        # Encoder ends with a ReLU right after this conv; wrap columns are
        # discarded by the caller, no masking needed.
        o_ref[...] = jnp.maximum(acc, 0.0).astype(o_ref.dtype)
        return

    # Store as a zero-bordered padded activation in the f32 scratch.
    a_scr[...] = jnp.zeros_like(a_scr)
    a_scr[pl.ds(off, M), :] = acc * mask_ref[...]

    Cmid = wa_ref.shape[-1]
    for r in range(n_res):
        # ResBlock leading ReLU: one pass over the whole padded block.
        b_scr[...] = jnp.maximum(a_scr[...], 0.0).astype(b_scr.dtype)

        h = jnp.zeros((M, Cmid), jnp.float32)
        for t, o in enumerate(taps):
            h = h + jnp.dot(b_scr[pl.ds(o, M), :], wa_ref[r * ntap + t],
                            preferred_element_type=jnp.float32)
        h = jnp.maximum(h + ba_ref[r], 0.0)                   # bias + inner ReLU

        resid = a_scr[pl.ds(off, M), :]                       # centre tap == x
        y = (jnp.dot(h.astype(jnp.bfloat16), wb_ref[r],
                     preferred_element_type=jnp.float32)
             + bb_ref[r] + resid)

        if r == n_res - 1:
            o_ref[...] = jnp.maximum(y, 0.0).astype(o_ref.dtype)   # final ReLU
        else:
            a_scr[pl.ds(off, M), :] = y * mask_ref[...]


# ----------------------------------------------------------------------------
# pallas_call wrappers
# ----------------------------------------------------------------------------
def _stem_conv(xf, w_taps, b, mask, taps, M):
    N, Msf, Cin4 = xf.shape
    T, _, Cout = w_taps.shape
    b2 = b.reshape(1, Cout).astype(jnp.float32)

    flops = 2 * N * M * Cin4 * Cout * T
    bytes_accessed = (xf.size * 2 + w_taps.size * 2 + b2.size * 4
                      + mask.size * 4 + N * M * Cout * 2)
    return pl.pallas_call(
        functools.partial(_stem_conv_kernel, tuple(taps)),
        out_shape=jax.ShapeDtypeStruct((N, M, Cout), jnp.bfloat16),
        grid=(N,),
        in_specs=[
            pl.BlockSpec((None, Msf, Cin4), lambda n: (n, 0, 0)),
            pl.BlockSpec((T, Cin4, Cout), lambda n: (0, 0, 0)),
            pl.BlockSpec((1, Cout), lambda n: (0, 0)),
            pl.BlockSpec((M, 1), lambda n: (0, 0)),
        ],
        out_specs=pl.BlockSpec((None, M, Cout), lambda n: (n, 0, 0)),
        compiler_params=pltpu.CompilerParams(
            dimension_semantics=("parallel",),
            vmem_limit_bytes=_VMEM_LIMIT),
        cost_estimate=pl.CostEstimate(flops=int(flops), transcendentals=0,
                                      bytes_accessed=int(bytes_accessed)),
    )(xf, w_taps, b2, mask)


def _tail_fused(xf, mask, taps, off, M, conv_w, conv_b, res_params):
    N, Mf, C = xf.shape
    n_res = len(res_params)

    w0 = _same_weight(conv_w).astype(jnp.bfloat16)             # (9, C, C)
    b0 = conv_b.reshape(1, C).astype(jnp.float32)

    in_specs = [
        pl.BlockSpec((None, Mf, C), lambda n: (n, 0, 0)),
        pl.BlockSpec(w0.shape, lambda n: (0, 0, 0)),
        pl.BlockSpec((1, C), lambda n: (0, 0)),
        pl.BlockSpec((M, 1), lambda n: (0, 0)),
    ]
    args = [xf, w0, b0, mask]
    scratch = []
    flops = 2 * N * M * C * C * len(taps)

    if n_res > 0:
        Cmid = res_params[0][0].shape[0]
        wa = jnp.concatenate(
            [_same_weight(p[0]) for p in res_params], axis=0
        ).astype(jnp.bfloat16)                                  # (R*9, C, Cmid)
        ba = jnp.stack([p[1].reshape(1, Cmid) for p in res_params]
                       ).astype(jnp.float32)                    # (R, 1, Cmid)
        wb = jnp.stack([jnp.transpose(p[2][:, :, 0, 0], (1, 0))
                        for p in res_params]).astype(jnp.bfloat16)   # (R, Cmid, C)
        bb = jnp.stack([p[3].reshape(1, C) for p in res_params]
                       ).astype(jnp.float32)                    # (R, 1, C)
        in_specs += [
            pl.BlockSpec(wa.shape, lambda n: (0, 0, 0)),
            pl.BlockSpec(ba.shape, lambda n: (0, 0, 0)),
            pl.BlockSpec(wb.shape, lambda n: (0, 0, 0)),
            pl.BlockSpec(bb.shape, lambda n: (0, 0, 0)),
        ]
        args += [wa, ba, wb, bb]
        scratch = [pltpu.VMEM((Mf, C), jnp.float32),
                   pltpu.VMEM((Mf, C), jnp.bfloat16)]
        flops += 2 * N * M * n_res * (C * Cmid * len(taps) + Cmid * C)

    bytes_accessed = sum(int(a.size) * a.dtype.itemsize for a in args) + N * M * C * 4
    return pl.pallas_call(
        functools.partial(_tail_kernel, tuple(taps), off, n_res),
        out_shape=jax.ShapeDtypeStruct((N, M, C), jnp.float32),
        grid=(N,),
        in_specs=in_specs,
        out_specs=pl.BlockSpec((None, M, C), lambda n: (n, 0, 0)),
        scratch_shapes=scratch,
        compiler_params=pltpu.CompilerParams(
            dimension_semantics=("parallel",),
            vmem_limit_bytes=_VMEM_LIMIT),
        cost_estimate=pl.CostEstimate(flops=int(flops), transcendentals=0,
                                      bytes_accessed=int(bytes_accessed)),
    )(*args)


# ----------------------------------------------------------------------------
# Data-prep helpers (cheap JAX glue: one pad / one s2d reshape per stage)
# ----------------------------------------------------------------------------
def _s2d_prep(x, valid_w):
    """Set up a 4x4/stride-2/pad-1 conv as a 2x2 stride-1 valid conv on the
    space-to-depth(2) padded input.

    x: (N, Hx, Wx, C).  Columns >= valid_w (if any) are guaranteed zero and
    act as right padding, so the previous kernel's wrap column is consumed
    directly (no XLA slice).  Extra bottom pad rows provide the flat-window
    slack so no per-tap masking is needed in the kernel.
    """
    N, Hx, Wx, C = x.shape
    assert Hx % 2 == 0 and valid_w % 2 == 0
    Ho, Wo = Hx // 2, valid_w // 2
    Ws = Wo + 1                       # (valid_w + 2) // 2
    Hs = Ho + 2                       # 1 pad row pair + 1 slack row pair
    pad_r = (valid_w + 2) - 1 - Wx    # right pad after the single left pad col
    assert pad_r >= 0
    xp = jnp.pad(x, ((0, 0), (1, 3), (1, pad_r), (0, 0)))
    xs = xp.reshape(N, Hs, 2, Ws, 2, C).transpose(0, 1, 3, 2, 4, 5)
    xf = xs.reshape(N, Hs * Ws, 4 * C)
    taps = (0, 1, Ws, Ws + 1)
    return xf, taps, Ho, Wo, Ws


def _stem_mask(Ho, Wo, Ws):
    M = Ho * Ws
    return (jnp.arange(M, dtype=jnp.int32) % Ws < Wo).astype(jnp.float32
                                                             ).reshape(M, 1)


def _tail_prep(x, valid_w):
    """Flat zero-bordered layout for the stride-1 'same' tail:
    (N, (H+3)*Wp, C) with Wp = valid_w + 2 (1 top pad row, 1 bottom pad row,
    1 slack row).  Every 3x3 tap is then a contiguous flat-shift window."""
    N, H, Wx, C = x.shape
    W = valid_w
    Wp = W + 2
    pad_r = Wp - 1 - Wx
    assert pad_r >= 0
    xp = jnp.pad(x, ((0, 0), (1, 2), (1, pad_r), (0, 0)))
    xf = xp.reshape(N, (H + 3) * Wp, C)
    taps = tuple(i * Wp + j for i in range(3) for j in range(3))
    off = Wp + 1                      # centre-tap offset == residual window
    M = H * Wp
    mask = (jnp.arange(M, dtype=jnp.int32) % Wp < W).astype(jnp.float32
                                                            ).reshape(M, 1)
    return xf, taps, off, M, Wp, mask


def _s2d_weight(w):
    """(Cout, Cin, 4, 4) OIHW -> (4, 4*Cin, Cout) tap matrices matching
    _s2d_prep's (pi, pj, Cin) channel layout and (a, b) tap order."""
    Cout, Cin, _, _ = w.shape
    w_hwio = jnp.transpose(w, (2, 3, 1, 0))                 # (i, j, Cin, Cout)
    w6 = w_hwio.reshape(2, 2, 2, 2, Cin, Cout)              # (a, pi, b, pj, ..)
    w6 = jnp.transpose(w6, (0, 2, 1, 3, 4, 5))              # (a, b, pi, pj, ..)
    return w6.reshape(4, 4 * Cin, Cout)


def _same_weight(w):
    """(Cout, Cin, k, k) OIHW -> (k*k, Cin, Cout), taps row-major in (i, j)."""
    Cout, Cin, kh, kw = w.shape
    return jnp.transpose(w, (2, 3, 1, 0)).reshape(kh * kw, Cin, Cout)


# ----------------------------------------------------------------------------
# Encoder parameters (deterministic init, PyTorch Conv2d weight layout OIHW)
# ----------------------------------------------------------------------------
def init_encoder_params(key, in_channel, channel, n_res_block, n_res_channel,
                        stride):
    def conv_init(k, cout, cin, kh, kw):
        kw_, kb_ = jax.random.split(k)
        fan_in = cin * kh * kw
        bound = 1.0 / float(fan_in) ** 0.5
        w = jax.random.uniform(kw_, (cout, cin, kh, kw), jnp.float32, -bound, bound)
        b = jax.random.uniform(kb_, (cout,), jnp.float32, -bound, bound)
        return w, b

    n_main = 3 if stride == 4 else 2
    keys = jax.random.split(key, n_main + 2 * n_res_block)
    params = {}
    if stride == 4:
        params["conv0"] = conv_init(keys[0], channel // 2, in_channel, 4, 4)
        params["conv1"] = conv_init(keys[1], channel, channel // 2, 4, 4)
        params["conv2"] = conv_init(keys[2], channel, channel, 3, 3)
    elif stride == 2:
        params["conv0"] = conv_init(keys[0], channel // 2, in_channel, 4, 4)
        params["conv1"] = conv_init(keys[1], channel, channel // 2, 3, 3)
    else:
        raise ValueError("stride must be 2 or 4")
    for r in range(n_res_block):
        params[f"res{r}_a"] = conv_init(keys[n_main + 2 * r],
                                        n_res_channel, channel, 3, 3)
        params[f"res{r}_b"] = conv_init(keys[n_main + 2 * r + 1],
                                        channel, n_res_channel, 3 - 2, 3 - 2)
    return params


# ----------------------------------------------------------------------------
# Encoder forward (all conv/relu/residual math runs inside Pallas kernels)
# ----------------------------------------------------------------------------
def encoder_forward(x_nchw, params, *, stride, n_res_block):
    x = jnp.transpose(x_nchw, (0, 2, 3, 1)).astype(jnp.bfloat16)   # NHWC once
    N = x.shape[0]

    def stem(y, valid_w, w, b):
        xf, taps, Ho, Wo, Ws = _s2d_prep(y, valid_w)
        mask = _stem_mask(Ho, Wo, Ws)
        out = _stem_conv(xf, _s2d_weight(w).astype(jnp.bfloat16), b, mask,
                         taps, Ho * Ws)
        return out.reshape(N, Ho, Ws, w.shape[0]), Wo

    if stride == 4:
        y, wv = stem(x, x.shape[2], *params["conv0"])
        y, wv = stem(y, wv, *params["conv1"])
        tail_w, tail_b = params["conv2"]
    elif stride == 2:
        y, wv = stem(x, x.shape[2], *params["conv0"])
        tail_w, tail_b = params["conv1"]
    else:
        raise ValueError("stride must be 2 or 4")

    # Fused tail: 3x3 conv -> all ResBlocks -> final ReLU, one pallas_call.
    res_params = [params[f"res{r}_a"] + params[f"res{r}_b"]
                  for r in range(n_res_block)]
    xf, taps, off, M, Wp, mask = _tail_prep(y, wv)
    out = _tail_fused(xf, mask, taps, off, M, tail_w, tail_b, res_params)

    H2, W2, C = y.shape[1], wv, tail_w.shape[0]
    out = out.reshape(N, H2, Wp, C)[:, :, :W2, :]          # drop wrap columns
    return jnp.transpose(out, (0, 3, 1, 2))                # NHWC -> NCHW once


# ----------------------------------------------------------------------------
# Pure-JAX reference (mirrors the PyTorch module exactly) for verification
# ----------------------------------------------------------------------------
def ref_encoder(x, params, *, stride, n_res_block):
    def conv(x, w, b, s, p):
        y = jax.lax.conv_general_dilated(
            x, w, (s, s), ((p, p), (p, p)),
            dimension_numbers=("NCHW", "OIHW", "NCHW"))
        return y + b.reshape(1, -1, 1, 1)

    relu = lambda v: jnp.maximum(v, 0.0)
    if stride == 4:
        x = relu(conv(x, *params["conv0"], 2, 1))
        x = relu(conv(x, *params["conv1"], 2, 1))
        x = conv(x, *params["conv2"], 1, 1)
    else:
        x = relu(conv(x, *params["conv0"], 2, 1))
        x = conv(x, *params["conv1"], 1, 1)
    for r in range(n_res_block):
        h = relu(conv(relu(x), *params[f"res{r}_a"], 1, 1))
        x = conv(h, *params[f"res{r}_b"], 1, 0) + x
    return relu(x)


if __name__ == "__main__":
    key = jax.random.PRNGKey(0)
    kx, kp = jax.random.split(key)

    in_channel, channel, n_res_block, n_res_channel, stride = 4, 32, 2, 8, 4
    x = jax.random.normal(kx, (2, in_channel, 16, 16), jnp.float32)
    params = init_encoder_params(kp, in_channel, channel, n_res_block,
                                 n_res_channel, stride)

    fwd = jax.jit(functools.partial(encoder_forward, stride=stride,
                                    n_res_block=n_res_block))
    out = jax.block_until_ready(fwd(x, params))

    ref = ref_encoder(x, params, stride=stride, n_res_block=n_res_block)
    assert out.shape == ref.shape == (2, channel, 4, 4), (out.shape, ref.shape)
    # bf16 MXU inputs (f32 accumulation / residual path): ~1e-3..1e-2 abs err.
    err = float(jnp.max(jnp.abs(out - ref)))
    assert err < 5e-2, err

    print("KERNEL_OK")
</pallas_src>

<mosaic_0001>
module attributes {stable_mosaic.version = 11 : i64} {
  func.func @_stem_conv_kernel(%arg0: i32, %arg1: memref<1x90x16xbf16, #tpu.memory_space<vmem>>, %arg2: memref<4x16x16xbf16, #tpu.memory_space<vmem>>, %arg3: memref<1x16xf32, #tpu.memory_space<vmem>>, %arg4: memref<72x1xf32, #tpu.memory_space<vmem>>, %arg5: memref<1x72x16xbf16, #tpu.memory_space<vmem>>) attributes {dimension_semantics = [#tpu.dimension_semantics<parallel>], iteration_bounds = array<i64: 2>, scalar_prefetch = 0 : i64, scratch_operands = 0 : i64, tpu.core_type = #tpu.core_type<tc>, window_params = [{transform_indices = @transform_0, window_bounds = array<i64: 1, 90, 16>}, {pipeline_mode = #tpu.pipeline_mode<synchronous>, transform_indices = @transform_1, window_bounds = array<i64: 4, 16, 16>}, {pipeline_mode = #tpu.pipeline_mode<synchronous>, transform_indices = @transform_2, window_bounds = array<i64: 1, 16>}, {pipeline_mode = #tpu.pipeline_mode<synchronous>, transform_indices = @transform_3, window_bounds = array<i64: 72, 1>}, {transform_indices = @transform_4, window_bounds = array<i64: 1, 72, 16>}]} {
    %cst = arith.constant 0.000000e+00 : f32
    %0 = vector.broadcast %cst : f32 to vector<72x16xf32>
    %c0 = arith.constant 0 : index
    %c0_0 = arith.constant 0 : index
    %c0_1 = arith.constant 0 : index
    %1 = vector.load %arg1[%c0, %c0_0, %c0_1] : memref<1x90x16xbf16, #tpu.memory_space<vmem>>, vector<1x72x16xbf16>
    %2 = vector.shape_cast %1 : vector<1x72x16xbf16> to vector<72x16xbf16>
    %c0_2 = arith.constant 0 : index
    %c0_3 = arith.constant 0 : index
    %c0_4 = arith.constant 0 : index
    %3 = vector.load %arg2[%c0_2, %c0_3, %c0_4] : memref<4x16x16xbf16, #tpu.memory_space<vmem>>, vector<1x16x16xbf16>
    %4 = vector.shape_cast %3 : vector<1x16x16xbf16> to vector<16x16xbf16>
    %cst_5 = arith.constant dense<0.000000e+00> : vector<72x16xf32>
    %5 = tpu.matmul %2, %4, %cst_5 {dimension_numbers = #tpu.dot_dimension_numbers<[1], [0], [0], [1], [0, 0, 1, 1], [], []>} : vector<72x16xbf16>, vector<16x16xbf16>, vector<72x16xf32> -> vector<72x16xf32>
    %6 = arith.addf %0, %5 : vector<72x16xf32>
    %c0_6 = arith.constant 0 : index
    %c1 = arith.constant 1 : index
    %c0_7 = arith.constant 0 : index
    %7 = vector.load %arg1[%c0_6, %c1, %c0_7] : memref<1x90x16xbf16, #tpu.memory_space<vmem>>, vector<1x72x16xbf16>
    %8 = vector.shape_cast %7 : vector<1x72x16xbf16> to vector<72x16xbf16>
    %c1_8 = arith.constant 1 : index
    %c0_9 = arith.constant 0 : index
    %c0_10 = arith.constant 0 : index
    %9 = vector.load %arg2[%c1_8, %c0_9, %c0_10] : memref<4x16x16xbf16, #tpu.memory_space<vmem>>, vector<1x16x16xbf16>
    %10 = vector.shape_cast %9 : vector<1x16x16xbf16> to vector<16x16xbf16>
    %cst_11 = arith.constant dense<0.000000e+00> : vector<72x16xf32>
    %11 = tpu.matmul %8, %10, %cst_11 {dimension_numbers = #tpu.dot_dimension_numbers<[1], [0], [0], [1], [0, 0, 1, 1], [], []>} : vector<72x16xbf16>, vector<16x16xbf16>, vector<72x16xf32> -> vector<72x16xf32>
    %12 = arith.addf %6, %11 : vector<72x16xf32>
    %c0_12 = arith.constant 0 : index
    %c9 = arith.constant 9 : index
    %c0_13 = arith.constant 0 : index
    %13 = vector.load %arg1[%c0_12, %c9, %c0_13] : memref<1x90x16xbf16, #tpu.memory_space<vmem>>, vector<1x72x16xbf16>
    %14 = vector.shape_cast %13 : vector<1x72x16xbf16> to vector<72x16xbf16>
    %c2 = arith.constant 2 : index
    %c0_14 = arith.constant 0 : index
    %c0_15 = arith.constant 0 : index
    %15 = vector.load %arg2[%c2, %c0_14, %c0_15] : memref<4x16x16xbf16, #tpu.memory_space<vmem>>, vector<1x16x16xbf16>
    %16 = vector.shape_cast %15 : vector<1x16x16xbf16> to vector<16x16xbf16>
    %cst_16 = arith.constant dense<0.000000e+00> : vector<72x16xf32>
    %17 = tpu.matmul %14, %16, %cst_16 {dimension_numbers = #tpu.dot_dimension_numbers<[1], [0], [0], [1], [0, 0, 1, 1], [], []>} : vector<72x16xbf16>, vector<16x16xbf16>, vector<72x16xf32> -> vector<72x16xf32>
    %18 = arith.addf %12, %17 : vector<72x16xf32>
    %c0_17 = arith.constant 0 : index
    %c10 = arith.constant 10 : index
    %c0_18 = arith.constant 0 : index
    %19 = vector.load %arg1[%c0_17, %c10, %c0_18] : memref<1x90x16xbf16, #tpu.memory_space<vmem>>, vector<1x72x16xbf16>
    %20 = vector.shape_cast %19 : vector<1x72x16xbf16> to vector<72x16xbf16>
    %c3 = arith.constant 3 : index
    %c0_19 = arith.constant 0 : index
    %c0_20 = arith.constant 0 : index
    %21 = vector.load %arg2[%c3, %c0_19, %c0_20] : memref<4x16x16xbf16, #tpu.memory_space<vmem>>, vector<1x16x16xbf16>
    %22 = vector.shape_cast %21 : vector<1x16x16xbf16> to vector<16x16xbf16>
    %cst_21 = arith.constant dense<0.000000e+00> : vector<72x16xf32>
    %23 = tpu.matmul %20, %22, %cst_21 {dimension_numbers = #tpu.dot_dimension_numbers<[1], [0], [0], [1], [0, 0, 1, 1], [], []>} : vector<72x16xbf16>, vector<16x16xbf16>, vector<72x16xf32> -> vector<72x16xf32>
    %24 = arith.addf %18, %23 : vector<72x16xf32>
    %c0_22 = arith.constant 0 : index
    %c0_23 = arith.constant 0 : index
    %25 = vector.load %arg3[%c0_22, %c0_23] : memref<1x16xf32, #tpu.memory_space<vmem>>, vector<1x16xf32>
    %26 = vector.broadcast %25 : vector<1x16xf32> to vector<72x16xf32>
    %27 = arith.addf %24, %26 : vector<72x16xf32>
    %cst_24 = arith.constant 0.000000e+00 : f32
    %28 = vector.broadcast %cst_24 : f32 to vector<72x16xf32>
    %29 = arith.maximumf %27, %28 : vector<72x16xf32>
    %c0_25 = arith.constant 0 : index
    %c0_26 = arith.constant 0 : index
    %30 = vector.load %arg4[%c0_25, %c0_26] : memref<72x1xf32, #tpu.memory_space<vmem>>, vector<72x1xf32>
    %31 = vector.broadcast %30 : vector<72x1xf32> to vector<72x16xf32>
    %32 = arith.mulf %29, %31 : vector<72x16xf32>
    %33 = arith.truncf %32 : vector<72x16xf32> to vector<72x16xbf16>
    %c0_27 = arith.constant 0 : index
    %c0_28 = arith.constant 0 : index
    %c0_29 = arith.constant 0 : index
    %34 = vector.load %arg5[%c0_27, %c0_28, %c0_29] : memref<1x72x16xbf16, #tpu.memory_space<vmem>>, vector<1x72x16xbf16>
    %35 = vector.shape_cast %34 : vector<1x72x16xbf16> to vector<72x16xbf16>
    %36 = vector.shape_cast %33 : vector<72x16xbf16> to vector<1x72x16xbf16>
    tpu.vector_store %arg5[%c0_27, %c0_28, %c0_29], %36 {strides = array<i32>} : memref<1x72x16xbf16, #tpu.memory_space<vmem>>, vector<1x72x16xbf16>,
    return
  }
  func.func @transform_0(%arg0: i32) -> (i32, i32, i32) {
    %c0_i32 = arith.constant 0 : i32
    %c0_i32_0 = arith.constant 0 : i32
    %c0_i32_1 = arith.constant 0 : i32
    return %arg0, %c0_i32, %c0_i32_0 : i32, i32, i32
  }
  func.func @transform_1(%arg0: i32) -> (i32, i32, i32) {
    %c0_i32 = arith.constant 0 : i32
    %c0_i32_0 = arith.constant 0 : i32
    %c0_i32_1 = arith.constant 0 : i32
    %c0_i32_2 = arith.constant 0 : i32
    return %c0_i32, %c0_i32_0, %c0_i32_1 : i32, i32, i32
  }
  func.func @transform_2(%arg0: i32) -> (i32, i32) {
    %c0_i32 = arith.constant 0 : i32
    %c0_i32_0 = arith.constant 0 : i32
    %c0_i32_1 = arith.constant 0 : i32
    return %c0_i32, %c0_i32_0 : i32, i32
  }
  func.func @transform_3(%arg0: i32) -> (i32, i32) {
    %c0_i32 = arith.constant 0 : i32
    %c0_i32_0 = arith.constant 0 : i32
    %c0_i32_1 = arith.constant 0 : i32
    return %c0_i32, %c0_i32_0 : i32, i32
  }
  func.func @transform_4(%arg0: i32) -> (i32, i32, i32) {
    %c0_i32 = arith.constant 0 : i32
    %c0_i32_0 = arith.constant 0 : i32
    %c0_i32_1 = arith.constant 0 : i32
    return %arg0, %c0_i32, %c0_i32_0 : i32, i32, i32
  }
}

module attributes {stable_mosaic.version = 11 : i64} {
  func.func @_stem_conv_kernel(%arg0: i32, %arg1: memref<1x30x64xbf16, #tpu.memory_space<vmem>>, %arg2: memref<4x64x32xbf16, #tpu.memory_space<vmem>>, %arg3: memref<1x32xf32, #tpu.memory_space<vmem>>, %arg4: memref<20x1xf32, #tpu.memory_space<vmem>>, %arg5: memref<1x20x32xbf16, #tpu.memory_space<vmem>>) attributes {dimension_semantics = [#tpu.dimension_semantics<parallel>], iteration_bounds = array<i64: 2>, scalar_prefetch = 0 : i64, scratch_operands = 0 : i64, tpu.core_type = #tpu.core_type<tc>, window_params = [{transform_indices = @transform_0, window_bounds = array<i64: 1, 30, 64>}, {pipeline_mode = #tpu.pipeline_mode<synchronous>, transform_indices = @transform_1, window_bounds = array<i64: 4, 64, 32>}, {pipeline_mode = #tpu.pipeline_mode<synchronous>, transform_indices = @transform_2, window_bounds = array<i64: 1, 32>}, {pipeline_mode = #tpu.pipeline_mode<synchronous>, transform_indices = @transform_3, window_bounds = array<i64: 20, 1>}, {transform_indices = @transform_4, window_bounds = array<i64: 1, 20, 32>}]} {
    %cst = arith.constant 0.000000e+00 : f32
    %0 = vector.broadcast %cst : f32 to vector<20x32xf32>
    %c0 = arith.constant 0 : index
    %c0_0 = arith.constant 0 : index
    %c0_1 = arith.constant 0 : index
    %1 = vector.load %arg1[%c0, %c0_0, %c0_1] : memref<1x30x64xbf16, #tpu.memory_space<vmem>>, vector<1x20x64xbf16>
    %2 = vector.shape_cast %1 : vector<1x20x64xbf16> to vector<20x64xbf16>
    %c0_2 = arith.constant 0 : index
    %c0_3 = arith.constant 0 : index
    %c0_4 = arith.constant 0 : index
    %3 = vector.load %arg2[%c0_2, %c0_3, %c0_4] : memref<4x64x32xbf16, #tpu.memory_space<vmem>>, vector<1x64x32xbf16>
    %4 = vector.shape_cast %3 : vector<1x64x32xbf16> to vector<64x32xbf16>
    %cst_5 = arith.constant dense<0.000000e+00> : vector<20x32xf32>
    %5 = tpu.matmul %2, %4, %cst_5 {dimension_numbers = #tpu.dot_dimension_numbers<[1], [0], [0], [1], [0, 0, 1, 1], [], []>} : vector<20x64xbf16>, vector<64x32xbf16>, vector<20x32xf32> -> vector<20x32xf32>
    %6 = arith.addf %0, %5 : vector<20x32xf32>
    %c0_6 = arith.constant 0 : index
    %c1 = arith.constant 1 : index
    %c0_7 = arith.constant 0 : index
    %7 = vector.load %arg1[%c0_6, %c1, %c0_7] : memref<1x30x64xbf16, #tpu.memory_space<vmem>>, vector<1x20x64xbf16>
    %8 = vector.shape_cast %7 : vector<1x20x64xbf16> to vector<20x64xbf16>
    %c1_8 = arith.constant 1 : index
    %c0_9 = arith.constant 0 : index
    %c0_10 = arith.constant 0 : index
    %9 = vector.load %arg2[%c1_8, %c0_9, %c0_10] : memref<4x64x32xbf16, #tpu.memory_space<vmem>>, vector<1x64x32xbf16>
    %10 = vector.shape_cast %9 : vector<1x64x32xbf16> to vector<64x32xbf16>
    %cst_11 = arith.constant dense<0.000000e+00> : vector<20x32xf32>
    %11 = tpu.matmul %8, %10, %cst_11 {dimension_numbers = #tpu.dot_dimension_numbers<[1], [0], [0], [1], [0, 0, 1, 1], [], []>} : vector<20x64xbf16>, vector<64x32xbf16>, vector<20x32xf32> -> vector<20x32xf32>
    %12 = arith.addf %6, %11 : vector<20x32xf32>
    %c0_12 = arith.constant 0 : index
    %c5 = arith.constant 5 : index
    %c0_13 = arith.constant 0 : index
    %13 = vector.load %arg1[%c0_12, %c5, %c0_13] : memref<1x30x64xbf16, #tpu.memory_space<vmem>>, vector<1x20x64xbf16>
    %14 = vector.shape_cast %13 : vector<1x20x64xbf16> to vector<20x64xbf16>
    %c2 = arith.constant 2 : index
    %c0_14 = arith.constant 0 : index
    %c0_15 = arith.constant 0 : index
    %15 = vector.load %arg2[%c2, %c0_14, %c0_15] : memref<4x64x32xbf16, #tpu.memory_space<vmem>>, vector<1x64x32xbf16>
    %16 = vector.shape_cast %15 : vector<1x64x32xbf16> to vector<64x32xbf16>
    %cst_16 = arith.constant dense<0.000000e+00> : vector<20x32xf32>
    %17 = tpu.matmul %14, %16, %cst_16 {dimension_numbers = #tpu.dot_dimension_numbers<[1], [0], [0], [1], [0, 0, 1, 1], [], []>} : vector<20x64xbf16>, vector<64x32xbf16>, vector<20x32xf32> -> vector<20x32xf32>
    %18 = arith.addf %12, %17 : vector<20x32xf32>
    %c0_17 = arith.constant 0 : index
    %c6 = arith.constant 6 : index
    %c0_18 = arith.constant 0 : index
    %19 = vector.load %arg1[%c0_17, %c6, %c0_18] : memref<1x30x64xbf16, #tpu.memory_space<vmem>>, vector<1x20x64xbf16>
    %20 = vector.shape_cast %19 : vector<1x20x64xbf16> to vector<20x64xbf16>
    %c3 = arith.constant 3 : index
    %c0_19 = arith.constant 0 : index
    %c0_20 = arith.constant 0 : index
    %21 = vector.load %arg2[%c3, %c0_19, %c0_20] : memref<4x64x32xbf16, #tpu.memory_space<vmem>>, vector<1x64x32xbf16>
    %22 = vector.shape_cast %21 : vector<1x64x32xbf16> to vector<64x32xbf16>
    %cst_21 = arith.constant dense<0.000000e+00> : vector<20x32xf32>
    %23 = tpu.matmul %20, %22, %cst_21 {dimension_numbers = #tpu.dot_dimension_numbers<[1], [0], [0], [1], [0, 0, 1, 1], [], []>} : vector<20x64xbf16>, vector<64x32xbf16>, vector<20x32xf32> -> vector<20x32xf32>
    %24 = arith.addf %18, %23 : vector<20x32xf32>
    %c0_22 = arith.constant 0 : index
    %c0_23 = arith.constant 0 : index
    %25 = vector.load %arg3[%c0_22, %c0_23] : memref<1x32xf32, #tpu.memory_space<vmem>>, vector<1x32xf32>
    %26 = vector.broadcast %25 : vector<1x32xf32> to vector<20x32xf32>
    %27 = arith.addf %24, %26 : vector<20x32xf32>
    %cst_24 = arith.constant 0.000000e+00 : f32
    %28 = vector.broadcast %cst_24 : f32 to vector<20x32xf32>
    %29 = arith.maximumf %27, %28 : vector<20x32xf32>
    %c0_25 = arith.constant 0 : index
    %c0_26 = arith.constant 0 : index
    %30 = vector.load %arg4[%c0_25, %c0_26] : memref<20x1xf32, #tpu.memory_space<vmem>>, vector<20x1xf32>
    %31 = vector.broadcast %30 : vector<20x1xf32> to vector<20x32xf32>
    %32 = arith.mulf %29, %31 : vector<20x32xf32>
    %33 = arith.truncf %32 : vector<20x32xf32> to vector<20x32xbf16>
    %c0_27 = arith.constant 0 : index
    %c0_28 = arith.constant 0 : index
    %c0_29 = arith.constant 0 : index
    %34 = vector.load %arg5[%c0_27, %c0_28, %c0_29] : memref<1x20x32xbf16, #tpu.memory_space<vmem>>, vector<1x20x32xbf16>
    %35 = vector.shape_cast %34 : vector<1x20x32xbf16> to vector<20x32xbf16>
    %36 = vector.shape_cast %33 : vector<20x32xbf16> to vector<1x20x32xbf16>
    tpu.vector_store %arg5[%c0_27, %c0_28, %c0_29], %36 {strides = array<i32>} : memref<1x20x32xbf16, #tpu.memory_space<vmem>>, vector<1x20x32xbf16>,
    return
  }
  func.func @transform_0(%arg0: i32) -> (i32, i32, i32) {
    %c0_i32 = arith.constant 0 : i32
    %c0_i32_0 = arith.constant 0 : i32
    %c0_i32_1 = arith.constant 0 : i32
    return %arg0, %c0_i32, %c0_i32_0 : i32, i32, i32
  }
  func.func @transform_1(%arg0: i32) -> (i32, i32, i32) {
    %c0_i32 = arith.constant 0 : i32
    %c0_i32_0 = arith.constant 0 : i32
    %c0_i32_1 = arith.constant 0 : i32
    %c0_i32_2 = arith.constant 0 : i32
    return %c0_i32, %c0_i32_0, %c0_i32_1 : i32, i32, i32
  }
  func.func @transform_2(%arg0: i32) -> (i32, i32) {
    %c0_i32 = arith.constant 0 : i32
    %c0_i32_0 = arith.constant 0 : i32
    %c0_i32_1 = arith.constant 0 : i32
    return %c0_i32, %c0_i32_0 : i32, i32
  }
  func.func @transform_3(%arg0: i32) -> (i32, i32) {
    %c0_i32 = arith.constant 0 : i32
    %c0_i32_0 = arith.constant 0 : i32
    %c0_i32_1 = arith.constant 0 : i32
    return %c0_i32, %c0_i32_0 : i32, i32
  }
  func.func @transform_4(%arg0: i32) -> (i32, i32, i32) {
    %c0_i32 = arith.constant 0 : i32
    %c0_i32_0 = arith.constant 0 : i32
    %c0_i32_1 = arith.constant 0 : i32
    return %arg0, %c0_i32, %c0_i32_0 : i32, i32, i32
  }
}

module attributes {stable_mosaic.version = 11 : i64} {
  func.func @_tail_kernel(%arg0: i32, %arg1: memref<1x42x32xbf16, #tpu.memory_space<vmem>>, %arg2: memref<9x32x32xbf16, #tpu.memory_space<vmem>>, %arg3: memref<1x32xf32, #tpu.memory_space<vmem>>, %arg4: memref<24x1xf32, #tpu.memory_space<vmem>>, %arg5: memref<18x32x8xbf16, #tpu.memory_space<vmem>>, %arg6: memref<2x1x8xf32, #tpu.memory_space<vmem>>, %arg7: memref<2x8x32xbf16, #tpu.memory_space<vmem>>, %arg8: memref<2x1x32xf32, #tpu.memory_space<vmem>>, %arg9: memref<1x24x32xf32, #tpu.memory_space<vmem>>, %arg10: memref<42x32xf32, #tpu.memory_space<vmem>>, %arg11: memref<42x32xbf16, #tpu.memory_space<vmem>>) attributes {dimension_semantics = [#tpu.dimension_semantics<parallel>], iteration_bounds = array<i64: 2>, scalar_prefetch = 0 : i64, scratch_operands = 2 : i64, tpu.core_type = #tpu.core_type<tc>, window_params = [{transform_indices = @transform_0, window_bounds = array<i64: 1, 42, 32>}, {pipeline_mode = #tpu.pipeline_mode<synchronous>, transform_indices = @transform_1, window_bounds = array<i64: 9, 32, 32>}, {pipeline_mode = #tpu.pipeline_mode<synchronous>, transform_indices = @transform_2, window_bounds = array<i64: 1, 32>}, {pipeline_mode = #tpu.pipeline_mode<synchronous>, transform_indices = @transform_3, window_bounds = array<i64: 24, 1>}, {pipeline_mode = #tpu.pipeline_mode<synchronous>, transform_indices = @transform_4, window_bounds = array<i64: 18, 32, 8>}, {pipeline_mode = #tpu.pipeline_mode<synchronous>, transform_indices = @transform_5, window_bounds = array<i64: 2, 1, 8>}, {pipeline_mode = #tpu.pipeline_mode<synchronous>, transform_indices = @transform_6, window_bounds = array<i64: 2, 8, 32>}, {pipeline_mode = #tpu.pipeline_mode<synchronous>, transform_indices = @transform_7, window_bounds = array<i64: 2, 1, 32>}, {transform_indices = @transform_8, window_bounds = array<i64: 1, 24, 32>}]} {
    %cst = arith.constant 0.000000e+00 : f32
    %0 = vector.broadcast %cst : f32 to vector<24x32xf32>
    %c0 = arith.constant 0 : index
    %c0_0 = arith.constant 0 : index
    %c0_1 = arith.constant 0 : index
    %1 = vector.load %arg1[%c0, %c0_0, %c0_1] : memref<1x42x32xbf16, #tpu.memory_space<vmem>>, vector<1x24x32xbf16>
    %2 = vector.shape_cast %1 : vector<1x24x32xbf16> to vector<24x32xbf16>
    %c0_2 = arith.constant 0 : index
    %c0_3 = arith.constant 0 : index
    %c0_4 = arith.constant 0 : index
    %3 = vector.load %arg2[%c0_2, %c0_3, %c0_4] : memref<9x32x32xbf16, #tpu.memory_space<vmem>>, vector<1x32x32xbf16>
    %4 = vector.shape_cast %3 : vector<1x32x32xbf16> to vector<32x32xbf16>
    %cst_5 = arith.constant dense<0.000000e+00> : vector<24x32xf32>
    %5 = tpu.matmul %2, %4, %cst_5 {dimension_numbers = #tpu.dot_dimension_numbers<[1], [0], [0], [1], [0, 0, 1, 1], [], []>} : vector<24x32xbf16>, vector<32x32xbf16>, vector<24x32xf32> -> vector<24x32xf32>
    %6 = arith.addf %0, %5 : vector<24x32xf32>
    %c0_6 = arith.constant 0 : index
    %c1 = arith.constant 1 : index
    %c0_7 = arith.constant 0 : index
    %7 = vector.load %arg1[%c0_6, %c1, %c0_7] : memref<1x42x32xbf16, #tpu.memory_space<vmem>>, vector<1x24x32xbf16>
    %8 = vector.shape_cast %7 : vector<1x24x32xbf16> to vector<24x32xbf16>
    %c1_8 = arith.constant 1 : index
    %c0_9 = arith.constant 0 : index
    %c0_10 = arith.constant 0 : index
    %9 = vector.load %arg2[%c1_8, %c0_9, %c0_10] : memref<9x32x32xbf16, #tpu.memory_space<vmem>>, vector<1x32x32xbf16>
    %10 = vector.shape_cast %9 : vector<1x32x32xbf16> to vector<32x32xbf16>
    %cst_11 = arith.constant dense<0.000000e+00> : vector<24x32xf32>
    %11 = tpu.matmul %8, %10, %cst_11 {dimension_numbers = #tpu.dot_dimension_numbers<[1], [0], [0], [1], [0, 0, 1, 1], [], []>} : vector<24x32xbf16>, vector<32x32xbf16>, vector<24x32xf32> -> vector<24x32xf32>
    %12 = arith.addf %6, %11 : vector<24x32xf32>
    %c0_12 = arith.constant 0 : index
    %c2 = arith.constant 2 : index
    %c0_13 = arith.constant 0 : index
    %13 = vector.load %arg1[%c0_12, %c2, %c0_13] : memref<1x42x32xbf16, #tpu.memory_space<vmem>>, vector<1x24x32xbf16>
    %14 = vector.shape_cast %13 : vector<1x24x32xbf16> to vector<24x32xbf16>
    %c2_14 = arith.constant 2 : index
    %c0_15 = arith.constant 0 : index
    %c0_16 = arith.constant 0 : index
    %15 = vector.load %arg2[%c2_14, %c0_15, %c0_16] : memref<9x32x32xbf16, #tpu.memory_space<vmem>>, vector<1x32x32xbf16>
    %16 = vector.shape_cast %15 : vector<1x32x32xbf16> to vector<32x32xbf16>
    %cst_17 = arith.constant dense<0.000000e+00> : vector<24x32xf32>
    %17 = tpu.matmul %14, %16, %cst_17 {dimension_numbers = #tpu.dot_dimension_numbers<[1], [0], [0], [1], [0, 0, 1, 1], [], []>} : vector<24x32xbf16>, vector<32x32xbf16>, vector<24x32xf32> -> vector<24x32xf32>
    %18 = arith.addf %12, %17 : vector<24x32xf32>
    %c0_18 = arith.constant 0 : index
    %c6 = arith.constant 6 : index
    %c0_19 = arith.constant 0 : index
    %19 = vector.load %arg1[%c0_18, %c6, %c0_19] : memref<1x42x32xbf16, #tpu.memory_space<vmem>>, vector<1x24x32xbf16>
    %20 = vector.shape_cast %19 : vector<1x24x32xbf16> to vector<24x32xbf16>
    %c3 = arith.constant 3 : index
    %c0_20 = arith.constant 0 : index
    %c0_21 = arith.constant 0 : index
    %21 = vector.load %arg2[%c3, %c0_20, %c0_21] : memref<9x32x32xbf16, #tpu.memory_space<vmem>>, vector<1x32x32xbf16>
    %22 = vector.shape_cast %21 : vector<1x32x32xbf16> to vector<32x32xbf16>
    %cst_22 = arith.constant dense<0.000000e+00> : vector<24x32xf32>
    %23 = tpu.matmul %20, %22, %cst_22 {dimension_numbers = #tpu.dot_dimension_numbers<[1], [0], [0], [1], [0, 0, 1, 1], [], []>} : vector<24x32xbf16>, vector<32x32xbf16>, vector<24x32xf32> -> vector<24x32xf32>
    %24 = arith.addf %18, %23 : vector<24x32xf32>
    %c0_23 = arith.constant 0 : index
    %c7 = arith.constant 7 : index
    %c0_24 = arith.constant 0 : index
    %25 = vector.load %arg1[%c0_23, %c7, %c0_24] : memref<1x42x32xbf16, #tpu.memory_space<vmem>>, vector<1x24x32xbf16>
    %26 = vector.shape_cast %25 : vector<1x24x32xbf16> to vector<24x32xbf16>
    %c4 = arith.constant 4 : index
    %c0_25 = arith.constant 0 : index
    %c0_26 = arith.constant 0 : index
    %27 = vector.load %arg2[%c4, %c0_25, %c0_26] : memref<9x32x32xbf16, #tpu.memory_space<vmem>>, vector<1x32x32xbf16>
    %28 = vector.shape_cast %27 : vector<1x32x32xbf16> to vector<32x32xbf16>
    %cst_27 = arith.constant dense<0.000000e+00> : vector<24x32xf32>
    %29 = tpu.matmul %26, %28, %cst_27 {dimension_numbers = #tpu.dot_dimension_numbers<[1], [0], [0], [1], [0, 0, 1, 1], [], []>} : vector<24x32xbf16>, vector<32x32xbf16>, vector<24x32xf32> -> vector<24x32xf32>
    %30 = arith.addf %24, %29 : vector<24x32xf32>
    %c0_28 = arith.constant 0 : index
    %c8 = arith.constant 8 : index
    %c0_29 = arith.constant 0 : index
    %31 = vector.load %arg1[%c0_28, %c8, %c0_29] : memref<1x42x32xbf16, #tpu.memory_space<vmem>>, vector<1x24x32xbf16>
    %32 = vector.shape_cast %31 : vector<1x24x32xbf16> to vector<24x32xbf16>
    %c5 = arith.constant 5 : index
    %c0_30 = arith.constant 0 : index
    %c0_31 = arith.constant 0 : index
    %33 = vector.load %arg2[%c5, %c0_30, %c0_31] : memref<9x32x32xbf16, #tpu.memory_space<vmem>>, vector<1x32x32xbf16>
    %34 = vector.shape_cast %33 : vector<1x32x32xbf16> to vector<32x32xbf16>
    %cst_32 = arith.constant dense<0.000000e+00> : vector<24x32xf32>
    %35 = tpu.matmul %32, %34, %cst_32 {dimension_numbers = #tpu.dot_dimension_numbers<[1], [0], [0], [1], [0, 0, 1, 1], [], []>} : vector<24x32xbf16>, vector<32x32xbf16>, vector<24x32xf32> -> vector<24x32xf32>
    %36 = arith.addf %30, %35 : vector<24x32xf32>
    %c0_33 = arith.constant 0 : index
    %c12 = arith.constant 12 : index
    %c0_34 = arith.constant 0 : index
    %37 = vector.load %arg1[%c0_33, %c12, %c0_34] : memref<1x42x32xbf16, #tpu.memory_space<vmem>>, vector<1x24x32xbf16>
    %38 = vector.shape_cast %37 : vector<1x24x32xbf16> to vector<24x32xbf16>
    %c6_35 = arith.constant 6 : index
    %c0_36 = arith.constant 0 : index
    %c0_37 = arith.constant 0 : index
    %39 = vector.load %arg2[%c6_35, %c0_36, %c0_37] : memref<9x32x32xbf16, #tpu.memory_space<vmem>>, vector<1x32x32xbf16>
    %40 = vector.shape_cast %39 : vector<1x32x32xbf16> to vector<32x32xbf16>
    %cst_38 = arith.constant dense<0.000000e+00> : vector<24x32xf32>
    %41 = tpu.matmul %38, %40, %cst_38 {dimension_numbers = #tpu.dot_dimension_numbers<[1], [0], [0], [1], [0, 0, 1, 1], [], []>} : vector<24x32xbf16>, vector<32x32xbf16>, vector<24x32xf32> -> vector<24x32xf32>
    %42 = arith.addf %36, %41 : vector<24x32xf32>
    %c0_39 = arith.constant 0 : index
    %c13 = arith.constant 13 : index
    %c0_40 = arith.constant 0 : index
    %43 = vector.load %arg1[%c0_39, %c13, %c0_40] : memref<1x42x32xbf16, #tpu.memory_space<vmem>>, vector<1x24x32xbf16>
    %44 = vector.shape_cast %43 : vector<1x24x32xbf16> to vector<24x32xbf16>
    %c7_41 = arith.constant 7 : index
    %c0_42 = arith.constant 0 : index
    %c0_43 = arith.constant 0 : index
    %45 = vector.load %arg2[%c7_41, %c0_42, %c0_43] : memref<9x32x32xbf16, #tpu.memory_space<vmem>>, vector<1x32x32xbf16>
    %46 = vector.shape_cast %45 : vector<1x32x32xbf16> to vector<32x32xbf16>
    %cst_44 = arith.constant dense<0.000000e+00> : vector<24x32xf32>
    %47 = tpu.matmul %44, %46, %cst_44 {dimension_numbers = #tpu.dot_dimension_numbers<[1], [0], [0], [1], [0, 0, 1, 1], [], []>} : vector<24x32xbf16>, vector<32x32xbf16>, vector<24x32xf32> -> vector<24x32xf32>
    %48 = arith.addf %42, %47 : vector<24x32xf32>
    %c0_45 = arith.constant 0 : index
    %c14 = arith.constant 14 : index
    %c0_46 = arith.constant 0 : index
    %49 = vector.load %arg1[%c0_45, %c14, %c0_46] : memref<1x42x32xbf16, #tpu.memory_space<vmem>>, vector<1x24x32xbf16>
    %50 = vector.shape_cast %49 : vector<1x24x32xbf16> to vector<24x32xbf16>
    %c8_47 = arith.constant 8 : index
    %c0_48 = arith.constant 0 : index
    %c0_49 = arith.constant 0 : index
    %51 = vector.load %arg2[%c8_47, %c0_48, %c0_49] : memref<9x32x32xbf16, #tpu.memory_space<vmem>>, vector<1x32x32xbf16>
    %52 = vector.shape_cast %51 : vector<1x32x32xbf16> to vector<32x32xbf16>
    %cst_50 = arith.constant dense<0.000000e+00> : vector<24x32xf32>
    %53 = tpu.matmul %50, %52, %cst_50 {dimension_numbers = #tpu.dot_dimension_numbers<[1], [0], [0], [1], [0, 0, 1, 1], [], []>} : vector<24x32xbf16>, vector<32x32xbf16>, vector<24x32xf32> -> vector<24x32xf32>
    %54 = arith.addf %48, %53 : vector<24x32xf32>
    %c0_51 = arith.constant 0 : index
    %c0_52 = arith.constant 0 : index
    %55 = vector.load %arg3[%c0_51, %c0_52] : memref<1x32xf32, #tpu.memory_space<vmem>>, vector<1x32xf32>
    %56 = vector.broadcast %55 : vector<1x32xf32> to vector<24x32xf32>
    %57 = arith.addf %54, %56 : vector<24x32xf32>
    %cst_53 = arith.constant 0.000000e+00 : f32
    %58 = vector.broadcast %cst_53 : f32 to vector<42x32xf32>
    %c0_54 = arith.constant 0 : index
    %c0_55 = arith.constant 0 : index
    %59 = vector.load %arg10[%c0_54, %c0_55] : memref<42x32xf32, #tpu.memory_space<vmem>>, vector<42x32xf32>
    tpu.vector_store %arg10[%c0_54, %c0_55], %58 {strides = array<i32>} : memref<42x32xf32, #tpu.memory_space<vmem>>, vector<42x32xf32>,
    %c0_56 = arith.constant 0 : index
    %c0_57 = arith.constant 0 : index
    %60 = vector.load %arg4[%c0_56, %c0_57] : memref<24x1xf32, #tpu.memory_space<vmem>>, vector<24x1xf32>
    %61 = vector.broadcast %60 : vector<24x1xf32> to vector<24x32xf32>
    %62 = arith.mulf %57, %61 : vector<24x32xf32>
    %c7_58 = arith.constant 7 : index
    %c0_59 = arith.constant 0 : index
    %63 = vector.load %arg10[%c7_58, %c0_59] : memref<42x32xf32, #tpu.memory_space<vmem>>, vector<24x32xf32>
    tpu.vector_store %arg10[%c7_58, %c0_59], %62 {strides = array<i32>} : memref<42x32xf32, #tpu.memory_space<vmem>>, vector<24x32xf32>,
    %c0_60 = arith.constant 0 : index
    %c0_61 = arith.constant 0 : index
    %64 = vector.load %arg10[%c0_60, %c0_61] : memref<42x32xf32, #tpu.memory_space<vmem>>, vector<42x32xf32>
    %cst_62 = arith.constant 0.000000e+00 : f32
    %65 = vector.broadcast %cst_62 : f32 to vector<42x32xf32>
    %66 = arith.maximumf %64, %65 : vector<42x32xf32>
    %67 = arith.truncf %66 : vector<42x32xf32> to vector<42x32xbf16>
    %c0_63 = arith.constant 0 : index
    %c0_64 = arith.constant 0 : index
    %68 = vector.load %arg11[%c0_63, %c0_64] : memref<42x32xbf16, #tpu.memory_space<vmem>>, vector<42x32xbf16>
    tpu.vector_store %arg11[%c0_63, %c0_64], %67 {strides = array<i32>} : memref<42x32xbf16, #tpu.memory_space<vmem>>, vector<42x32xbf16>,
    %cst_65 = arith.constant 0.000000e+00 : f32
    %69 = vector.broadcast %cst_65 : f32 to vector<24x8xf32>
    %c0_66 = arith.constant 0 : index
    %c0_67 = arith.constant 0 : index
    %70 = vector.load %arg11[%c0_66, %c0_67] : memref<42x32xbf16, #tpu.memory_space<vmem>>, vector<24x32xbf16>
    %c0_68 = arith.constant 0 : index
    %c0_69 = arith.constant 0 : index
    %c0_70 = arith.constant 0 : index
    %71 = vector.load %arg5[%c0_68, %c0_69, %c0_70] : memref<18x32x8xbf16, #tpu.memory_space<vmem>>, vector<1x32x8xbf16>
    %72 = vector.shape_cast %71 : vector<1x32x8xbf16> to vector<32x8xbf16>
    %cst_71 = arith.constant dense<0.000000e+00> : vector<24x8xf32>
    %73 = tpu.matmul %70, %72, %cst_71 {dimension_numbers = #tpu.dot_dimension_numbers<[1], [0], [0], [1], [0, 0, 1, 1], [], []>} : vector<24x32xbf16>, vector<32x8xbf16>, vector<24x8xf32> -> vector<24x8xf32>
    %74 = arith.addf %69, %73 : vector<24x8xf32>
    %c1_72 = arith.constant 1 : index
    %c0_73 = arith.constant 0 : index
    %75 = vector.load %arg11[%c1_72, %c0_73] : memref<42x32xbf16, #tpu.memory_space<vmem>>, vector<24x32xbf16>
    %c1_74 = arith.constant 1 : index
    %c0_75 = arith.constant 0 : index
    %c0_76 = arith.constant 0 : index
    %76 = vector.load %arg5[%c1_74, %c0_75, %c0_76] : memref<18x32x8xbf16, #tpu.memory_space<vmem>>, vector<1x32x8xbf16>
    %77 = vector.shape_cast %76 : vector<1x32x8xbf16> to vector<32x8xbf16>
    %cst_77 = arith.constant dense<0.000000e+00> : vector<24x8xf32>
    %78 = tpu.matmul %75, %77, %cst_77 {dimension_numbers = #tpu.dot_dimension_numbers<[1], [0], [0], [1], [0, 0, 1, 1], [], []>} : vector<24x32xbf16>, vector<32x8xbf16>, vector<24x8xf32> -> vector<24x8xf32>
    %79 = arith.addf %74, %78 : vector<24x8xf32>
    %c2_78 = arith.constant 2 : index
    %c0_79 = arith.constant 0 : index
    %80 = vector.load %arg11[%c2_78, %c0_79] : memref<42x32xbf16, #tpu.memory_space<vmem>>, vector<24x32xbf16>
    %c2_80 = arith.constant 2 : index
    %c0_81 = arith.constant 0 : index
    %c0_82 = arith.constant 0 : index
    %81 = vector.load %arg5[%c2_80, %c0_81, %c0_82] : memref<18x32x8xbf16, #tpu.memory_space<vmem>>, vector<1x32x8xbf16>
    %82 = vector.shape_cast %81 : vector<1x32x8xbf16> to vector<32x8xbf16>
    %cst_83 = arith.constant dense<0.000000e+00> : vector<24x8xf32>
    %83 = tpu.matmul %80, %82, %cst_83 {dimension_numbers = #tpu.dot_dimension_numbers<[1], [0], [0], [1], [0, 0, 1, 1], [], []>} : vector<24x32xbf16>, vector<32x8xbf16>, vector<24x8xf32> -> vector<24x8xf32>
    %84 = arith.addf %79, %83 : vector<24x8xf32>
    %c6_84 = arith.constant 6 : index
    %c0_85 = arith.constant 0 : index
    %85 = vector.load %arg11[%c6_84, %c0_85] : memref<42x32xbf16, #tpu.memory_space<vmem>>, vector<24x32xbf16>
    %c3_86 = arith.constant 3 : index
    %c0_87 = arith.constant 0 : index
    %c0_88 = arith.constant 0 : index
    %86 = vector.load %arg5[%c3_86, %c0_87, %c0_88] : memref<18x32x8xbf16, #tpu.memory_space<vmem>>, vector<1x32x8xbf16>
    %87 = vector.shape_cast %86 : vector<1x32x8xbf16> to vector<32x8xbf16>
    %cst_89 = arith.constant dense<0.000000e+00> : vector<24x8xf32>
    %88 = tpu.matmul %85, %87, %cst_89 {dimension_numbers = #tpu.dot_dimension_numbers<[1], [0], [0], [1], [0, 0, 1, 1], [], []>} : vector<24x32xbf16>, vector<32x8xbf16>, vector<24x8xf32> -> vector<24x8xf32>
    %89 = arith.addf %84, %88 : vector<24x8xf32>
    %c7_90 = arith.constant 7 : index
    %c0_91 = arith.constant 0 : index
    %90 = vector.load %arg11[%c7_90, %c0_91] : memref<42x32xbf16, #tpu.memory_space<vmem>>, vector<24x32xbf16>
    %c4_92 = arith.constant 4 : index
    %c0_93 = arith.constant 0 : index
    %c0_94 = arith.constant 0 : index
    %91 = vector.load %arg5[%c4_92, %c0_93, %c0_94] : memref<18x32x8xbf16, #tpu.memory_space<vmem>>, vector<1x32x8xbf16>
    %92 = vector.shape_cast %91 : vector<1x32x8xbf16> to vector<32x8xbf16>
    %cst_95 = arith.constant dense<0.000000e+00> : vector<24x8xf32>
    %93 = tpu.matmul %90, %92, %cst_95 {dimension_numbers = #tpu.dot_dimension_numbers<[1], [0], [0], [1], [0, 0, 1, 1], [], []>} : vector<24x32xbf16>, vector<32x8xbf16>, vector<24x8xf32> -> vector<24x8xf32>
    %94 = arith.addf %89, %93 : vector<24x8xf32>
    %c8_96 = arith.constant 8 : index
    %c0_97 = arith.constant 0 : index
    %95 = vector.load %arg11[%c8_96, %c0_97] : memref<42x32xbf16, #tpu.memory_space<vmem>>, vector<24x32xbf16>
    %c5_98 = arith.constant 5 : index
    %c0_99 = arith.constant 0 : index
    %c0_100 = arith.constant 0 : index
    %96 = vector.load %arg5[%c5_98, %c0_99, %c0_100] : memref<18x32x8xbf16, #tpu.memory_space<vmem>>, vector<1x32x8xbf16>
    %97 = vector.shape_cast %96 : vector<1x32x8xbf16> to vector<32x8xbf16>
    %cst_101 = arith.constant dense<0.000000e+00> : vector<24x8xf32>
    %98 = tpu.matmul %95, %97, %cst_101 {dimension_numbers = #tpu.dot_dimension_numbers<[1], [0], [0], [1], [0, 0, 1, 1], [], []>} : vector<24x32xbf16>, vector<32x8xbf16>, vector<24x8xf32> -> vector<24x8xf32>
    %99 = arith.addf %94, %98 : vector<24x8xf32>
    %c12_102 = arith.constant 12 : index
    %c0_103 = arith.constant 0 : index
    %100 = vector.load %arg11[%c12_102, %c0_103] : memref<42x32xbf16, #tpu.memory_space<vmem>>, vector<24x32xbf16>
    %c6_104 = arith.constant 6 : index
    %c0_105 = arith.constant 0 : index
    %c0_106 = arith.constant 0 : index
    %101 = vector.load %arg5[%c6_104, %c0_105, %c0_106] : memref<18x32x8xbf16, #tpu.memory_space<vmem>>, vector<1x32x8xbf16>
    %102 = vector.shape_cast %101 : vector<1x32x8xbf16> to vector<32x8xbf16>
    %cst_107 = arith.constant dense<0.000000e+00> : vector<24x8xf32>
    %103 = tpu.matmul %100, %102, %cst_107 {dimension_numbers = #tpu.dot_dimension_numbers<[1], [0], [0], [1], [0, 0, 1, 1], [], []>} : vector<24x32xbf16>, vector<32x8xbf16>, vector<24x8xf32> -> vector<24x8xf32>
    %104 = arith.addf %99, %103 : vector<24x8xf32>
    %c13_108 = arith.constant 13 : index
    %c0_109 = arith.constant 0 : index
    %105 = vector.load %arg11[%c13_108, %c0_109] : memref<42x32xbf16, #tpu.memory_space<vmem>>, vector<24x32xbf16>
    %c7_110 = arith.constant 7 : index
    %c0_111 = arith.constant 0 : index
    %c0_112 = arith.constant 0 : index
    %106 = vector.load %arg5[%c7_110, %c0_111, %c0_112] : memref<18x32x8xbf16, #tpu.memory_space<vmem>>, vector<1x32x8xbf16>
    %107 = vector.shape_cast %106 : vector<1x32x8xbf16> to vector<32x8xbf16>
    %cst_113 = arith.constant dense<0.000000e+00> : vector<24x8xf32>
    %108 = tpu.matmul %105, %107, %cst_113 {dimension_numbers = #tpu.dot_dimension_numbers<[1], [0], [0], [1], [0, 0, 1, 1], [], []>} : vector<24x32xbf16>, vector<32x8xbf16>, vector<24x8xf32> -> vector<24x8xf32>
    %109 = arith.addf %104, %108 : vector<24x8xf32>
    %c14_114 = arith.constant 14 : index
    %c0_115 = arith.constant 0 : index
    %110 = vector.load %arg11[%c14_114, %c0_115] : memref<42x32xbf16, #tpu.memory_space<vmem>>, vector<24x32xbf16>
    %c8_116 = arith.constant 8 : index
    %c0_117 = arith.constant 0 : index
    %c0_118 = arith.constant 0 : index
    %111 = vector.load %arg5[%c8_116, %c0_117, %c0_118] : memref<18x32x8xbf16, #tpu.memory_space<vmem>>, vector<1x32x8xbf16>
    %112 = vector.shape_cast %111 : vector<1x32x8xbf16> to vector<32x8xbf16>
    %cst_119 = arith.constant dense<0.000000e+00> : vector<24x8xf32>
    %113 = tpu.matmul %110, %112, %cst_119 {dimension_numbers = #tpu.dot_dimension_numbers<[1], [0], [0], [1], [0, 0, 1, 1], [], []>} : vector<24x32xbf16>, vector<32x8xbf16>, vector<24x8xf32> -> vector<24x8xf32>
    %114 = arith.addf %109, %113 : vector<24x8xf32>
    %c0_120 = arith.constant 0 : index
    %c0_121 = arith.constant 0 : index
    %c0_122 = arith.constant 0 : index
    %115 = vector.load %arg6[%c0_120, %c0_121, %c0_122] : memref<2x1x8xf32, #tpu.memory_space<vmem>>, vector<1x1x8xf32>
    %116 = vector.shape_cast %115 : vector<1x1x8xf32> to vector<1x8xf32>
    %117 = vector.broadcast %116 : vector<1x8xf32> to vector<24x8xf32>
    %118 = arith.addf %114, %117 : vector<24x8xf32>
    %cst_123 = arith.constant 0.000000e+00 : f32
    %119 = vector.broadcast %cst_123 : f32 to vector<24x8xf32>
    %120 = arith.maximumf %118, %119 : vector<24x8xf32>
    %c7_124 = arith.constant 7 : index
    %c0_125 = arith.constant 0 : index
    %121 = vector.load %arg10[%c7_124, %c0_125] : memref<42x32xf32, #tpu.memory_space<vmem>>, vector<24x32xf32>
    %122 = arith.truncf %120 : vector<24x8xf32> to vector<24x8xbf16>
    %c0_126 = arith.constant 0 : index
    %c0_127 = arith.constant 0 : index
    %c0_128 = arith.constant 0 : index
    %123 = vector.load %arg7[%c0_126, %c0_127, %c0_128] : memref<2x8x32xbf16, #tpu.memory_space<vmem>>, vector<1x8x32xbf16>
    %124 = vector.shape_cast %123 : vector<1x8x32xbf16> to vector<8x32xbf16>
    %cst_129 = arith.constant dense<0.000000e+00> : vector<24x32xf32>
    %125 = tpu.matmul %122, %124, %cst_129 {dimension_numbers = #tpu.dot_dimension_numbers<[1], [0], [0], [1], [0, 0, 1, 1], [], []>} : vector<24x8xbf16>, vector<8x32xbf16>, vector<24x32xf32> -> vector<24x32xf32>
    %c0_130 = arith.constant 0 : index
    %c0_131 = arith.constant 0 : index
    %c0_132 = arith.constant 0 : index
    %126 = vector.load %arg8[%c0_130, %c0_131, %c0_132] : memref<2x1x32xf32, #tpu.memory_space<vmem>>, vector<1x1x32xf32>
    %127 = vector.shape_cast %126 : vector<1x1x32xf32> to vector<1x32xf32>
    %128 = vector.broadcast %127 : vector<1x32xf32> to vector<24x32xf32>
    %129 = arith.addf %125, %128 : vector<24x32xf32>
    %130 = arith.addf %129, %121 : vector<24x32xf32>
    %c0_133 = arith.constant 0 : index
    %c0_134 = arith.constant 0 : index
    %131 = vector.load %arg4[%c0_133, %c0_134] : memref<24x1xf32, #tpu.memory_space<vmem>>, vector<24x1xf32>
    %132 = vector.broadcast %131 : vector<24x1xf32> to vector<24x32xf32>
    %133 = arith.mulf %130, %132 : vector<24x32xf32>
    %c7_135 = arith.constant 7 : index
    %c0_136 = arith.constant 0 : index
    %134 = vector.load %arg10[%c7_135, %c0_136] : memref<42x32xf32, #tpu.memory_space<vmem>>, vector<24x32xf32>
    tpu.vector_store %arg10[%c7_135, %c0_136], %133 {strides = array<i32>} : memref<42x32xf32, #tpu.memory_space<vmem>>, vector<24x32xf32>,
    %c0_137 = arith.constant 0 : index
    %c0_138 = arith.constant 0 : index
    %135 = vector.load %arg10[%c0_137, %c0_138] : memref<42x32xf32, #tpu.memory_space<vmem>>, vector<42x32xf32>
    %cst_139 = arith.constant 0.000000e+00 : f32
    %136 = vector.broadcast %cst_139 : f32 to vector<42x32xf32>
    %137 = arith.maximumf %135, %136 : vector<42x32xf32>
    %138 = arith.truncf %137 : vector<42x32xf32> to vector<42x32xbf16>
    %c0_140 = arith.constant 0 : index
    %c0_141 = arith.constant 0 : index
    %139 = vector.load %arg11[%c0_140, %c0_141] : memref<42x32xbf16, #tpu.memory_space<vmem>>, vector<42x32xbf16>
    tpu.vector_store %arg11[%c0_140, %c0_141], %138 {strides = array<i32>} : memref<42x32xbf16, #tpu.memory_space<vmem>>, vector<42x32xbf16>,
    %cst_142 = arith.constant 0.000000e+00 : f32
    %140 = vector.broadcast %cst_142 : f32 to vector<24x8xf32>
    %c0_143 = arith.constant 0 : index
    %c0_144 = arith.constant 0 : index
    %141 = vector.load %arg11[%c0_143, %c0_144] : memref<42x32xbf16, #tpu.memory_space<vmem>>, vector<24x32xbf16>
    %c9 = arith.constant 9 : index
    %c0_145 = arith.constant 0 : index
    %c0_146 = arith.constant 0 : index
    %142 = vector.load %arg5[%c9, %c0_145, %c0_146] : memref<18x32x8xbf16, #tpu.memory_space<vmem>>, vector<1x32x8xbf16>
    %143 = vector.shape_cast %142 : vector<1x32x8xbf16> to vector<32x8xbf16>
    %cst_147 = arith.constant dense<0.000000e+00> : vector<24x8xf32>
    %144 = tpu.matmul %141, %143, %cst_147 {dimension_numbers = #tpu.dot_dimension_numbers<[1], [0], [0], [1], [0, 0, 1, 1], [], []>} : vector<24x32xbf16>, vector<32x8xbf16>, vector<24x8xf32> -> vector<24x8xf32>
    %145 = arith.addf %140, %144 : vector<24x8xf32>
    %c1_148 = arith.constant 1 : index
    %c0_149 = arith.constant 0 : index
    %146 = vector.load %arg11[%c1_148, %c0_149] : memref<42x32xbf16, #tpu.memory_space<vmem>>, vector<24x32xbf16>
    %c10 = arith.constant 10 : index
    %c0_150 = arith.constant 0 : index
    %c0_151 = arith.constant 0 : index
    %147 = vector.load %arg5[%c10, %c0_150, %c0_151] : memref<18x32x8xbf16, #tpu.memory_space<vmem>>, vector<1x32x8xbf16>
    %148 = vector.shape_cast %147 : vector<1x32x8xbf16> to vector<32x8xbf16>
    %cst_152 = arith.constant dense<0.000000e+00> : vector<24x8xf32>
    %149 = tpu.matmul %146, %148, %cst_152 {dimension_numbers = #tpu.dot_dimension_numbers<[1], [0], [0], [1], [0, 0, 1, 1], [], []>} : vector<24x32xbf16>, vector<32x8xbf16>, vector<24x8xf32> -> vector<24x8xf32>
    %150 = arith.addf %145, %149 : vector<24x8xf32>
    %c2_153 = arith.constant 2 : index
    %c0_154 = arith.constant 0 : index
    %151 = vector.load %arg11[%c2_153, %c0_154] : memref<42x32xbf16, #tpu.memory_space<vmem>>, vector<24x32xbf16>
    %c11 = arith.constant 11 : index
    %c0_155 = arith.constant 0 : index
    %c0_156 = arith.constant 0 : index
    %152 = vector.load %arg5[%c11, %c0_155, %c0_156] : memref<18x32x8xbf16, #tpu.memory_space<vmem>>, vector<1x32x8xbf16>
    %153 = vector.shape_cast %152 : vector<1x32x8xbf16> to vector<32x8xbf16>
    %cst_157 = arith.constant dense<0.000000e+00> : vector<24x8xf32>
    %154 = tpu.matmul %151, %153, %cst_157 {dimension_numbers = #tpu.dot_dimension_numbers<[1], [0], [0], [1], [0, 0, 1, 1], [], []>} : vector<24x32xbf16>, vector<32x8xbf16>, vector<24x8xf32> -> vector<24x8xf32>
    %155 = arith.addf %150, %154 : vector<24x8xf32>
    %c6_158 = arith.constant 6 : index
    %c0_159 = arith.constant 0 : index
    %156 = vector.load %arg11[%c6_158, %c0_159] : memref<42x32xbf16, #tpu.memory_space<vmem>>, vector<24x32xbf16>
    %c12_160 = arith.constant 12 : index
    %c0_161 = arith.constant 0 : index
    %c0_162 = arith.constant 0 : index
    %157 = vector.load %arg5[%c12_160, %c0_161, %c0_162] : memref<18x32x8xbf16, #tpu.memory_space<vmem>>, vector<1x32x8xbf16>
    %158 = vector.shape_cast %157 : vector<1x32x8xbf16> to vector<32x8xbf16>
    %cst_163 = arith.constant dense<0.000000e+00> : vector<24x8xf32>
    %159 = tpu.matmul %156, %158, %cst_163 {dimension_numbers = #tpu.dot_dimension_numbers<[1], [0], [0], [1], [0, 0, 1, 1], [], []>} : vector<24x32xbf16>, vector<32x8xbf16>, vector<24x8xf32> -> vector<24x8xf32>
    %160 = arith.addf %155, %159 : vector<24x8xf32>
    %c7_164 = arith.constant 7 : index
    %c0_165 = arith.constant 0 : index
    %161 = vector.load %arg11[%c7_164, %c0_165] : memref<42x32xbf16, #tpu.memory_space<vmem>>, vector<24x32xbf16>
    %c13_166 = arith.constant 13 : index
    %c0_167 = arith.constant 0 : index
    %c0_168 = arith.constant 0 : index
    %162 = vector.load %arg5[%c13_166, %c0_167, %c0_168] : memref<18x32x8xbf16, #tpu.memory_space<vmem>>, vector<1x32x8xbf16>
    %163 = vector.shape_cast %162 : vector<1x32x8xbf16> to vector<32x8xbf16>
    %cst_169 = arith.constant dense<0.000000e+00> : vector<24x8xf32>
    %164 = tpu.matmul %161, %163, %cst_169 {dimension_numbers = #tpu.dot_dimension_numbers<[1], [0], [0], [1], [0, 0, 1, 1], [], []>} : vector<24x32xbf16>, vector<32x8xbf16>, vector<24x8xf32> -> vector<24x8xf32>
    %165 = arith.addf %160, %164 : vector<24x8xf32>
    %c8_170 = arith.constant 8 : index
    %c0_171 = arith.constant 0 : index
    %166 = vector.load %arg11[%c8_170, %c0_171] : memref<42x32xbf16, #tpu.memory_space<vmem>>, vector<24x32xbf16>
    %c14_172 = arith.constant 14 : index
    %c0_173 = arith.constant 0 : index
    %c0_174 = arith.constant 0 : index
    %167 = vector.load %arg5[%c14_172, %c0_173, %c0_174] : memref<18x32x8xbf16, #tpu.memory_space<vmem>>, vector<1x32x8xbf16>
    %168 = vector.shape_cast %167 : vector<1x32x8xbf16> to vector<32x8xbf16>
    %cst_175 = arith.constant dense<0.000000e+00> : vector<24x8xf32>
    %169 = tpu.matmul %166, %168, %cst_175 {dimension_numbers = #tpu.dot_dimension_numbers<[1], [0], [0], [1], [0, 0, 1, 1], [], []>} : vector<24x32xbf16>, vector<32x8xbf16>, vector<24x8xf32> -> vector<24x8xf32>
    %170 = arith.addf %165, %169 : vector<24x8xf32>
    %c12_176 = arith.constant 12 : index
    %c0_177 = arith.constant 0 : index
    %171 = vector.load %arg11[%c12_176, %c0_177] : memref<42x32xbf16, #tpu.memory_space<vmem>>, vector<24x32xbf16>
    %c15 = arith.constant 15 : index
    %c0_178 = arith.constant 0 : index
    %c0_179 = arith.constant 0 : index
    %172 = vector.load %arg5[%c15, %c0_178, %c0_179] : memref<18x32x8xbf16, #tpu.memory_space<vmem>>, vector<1x32x8xbf16>
    %173 = vector.shape_cast %172 : vector<1x32x8xbf16> to vector<32x8xbf16>
    %cst_180 = arith.constant dense<0.000000e+00> : vector<24x8xf32>
    %174 = tpu.matmul %171, %173, %cst_180 {dimension_numbers = #tpu.dot_dimension_numbers<[1], [0], [0], [1], [0, 0, 1, 1], [], []>} : vector<24x32xbf16>, vector<32x8xbf16>, vector<24x8xf32> -> vector<24x8xf32>
    %175 = arith.addf %170, %174 : vector<24x8xf32>
    %c13_181 = arith.constant 13 : index
    %c0_182 = arith.constant 0 : index
    %176 = vector.load %arg11[%c13_181, %c0_182] : memref<42x32xbf16, #tpu.memory_space<vmem>>, vector<24x32xbf16>
    %c16 = arith.constant 16 : index
    %c0_183 = arith.constant 0 : index
    %c0_184 = arith.constant 0 : index
    %177 = vector.load %arg5[%c16, %c0_183, %c0_184] : memref<18x32x8xbf16, #tpu.memory_space<vmem>>, vector<1x32x8xbf16>
    %178 = vector.shape_cast %177 : vector<1x32x8xbf16> to vector<32x8xbf16>
    %cst_185 = arith.constant dense<0.000000e+00> : vector<24x8xf32>
    %179 = tpu.matmul %176, %178, %cst_185 {dimension_numbers = #tpu.dot_dimension_numbers<[1], [0], [0], [1], [0, 0, 1, 1], [], []>} : vector<24x32xbf16>, vector<32x8xbf16>, vector<24x8xf32> -> vector<24x8xf32>
    %180 = arith.addf %175, %179 : vector<24x8xf32>
    %c14_186 = arith.constant 14 : index
    %c0_187 = arith.constant 0 : index
    %181 = vector.load %arg11[%c14_186, %c0_187] : memref<42x32xbf16, #tpu.memory_space<vmem>>, vector<24x32xbf16>
    %c17 = arith.constant 17 : index
    %c0_188 = arith.constant 0 : index
    %c0_189 = arith.constant 0 : index
    %182 = vector.load %arg5[%c17, %c0_188, %c0_189] : memref<18x32x8xbf16, #tpu.memory_space<vmem>>, vector<1x32x8xbf16>
    %183 = vector.shape_cast %182 : vector<1x32x8xbf16> to vector<32x8xbf16>
    %cst_190 = arith.constant dense<0.000000e+00> : vector<24x8xf32>
    %184 = tpu.matmul %181, %183, %cst_190 {dimension_numbers = #tpu.dot_dimension_numbers<[1], [0], [0], [1], [0, 0, 1, 1], [], []>} : vector<24x32xbf16>, vector<32x8xbf16>, vector<24x8xf32> -> vector<24x8xf32>
    %185 = arith.addf %180, %184 : vector<24x8xf32>
    %c1_191 = arith.constant 1 : index
    %c0_192 = arith.constant 0 : index
    %c0_193 = arith.constant 0 : index
    %186 = vector.load %arg6[%c1_191, %c0_192, %c0_193] : memref<2x1x8xf32, #tpu.memory_space<vmem>>, vector<1x1x8xf32>
    %187 = vector.shape_cast %186 : vector<1x1x8xf32> to vector<1x8xf32>
    %188 = vector.broadcast %187 : vector<1x8xf32> to vector<24x8xf32>
    %189 = arith.addf %185, %188 : vector<24x8xf32>
    %cst_194 = arith.constant 0.000000e+00 : f32
    %190 = vector.broadcast %cst_194 : f32 to vector<24x8xf32>
    %191 = arith.maximumf %189, %190 : vector<24x8xf32>
    %c7_195 = arith.constant 7 : index
    %c0_196 = arith.constant 0 : index
    %192 = vector.load %arg10[%c7_195, %c0_196] : memref<42x32xf32, #tpu.memory_space<vmem>>, vector<24x32xf32>
    %193 = arith.truncf %191 : vector<24x8xf32> to vector<24x8xbf16>
    %c1_197 = arith.constant 1 : index
    %c0_198 = arith.constant 0 : index
    %c0_199 = arith.constant 0 : index
    %194 = vector.load %arg7[%c1_197, %c0_198, %c0_199] : memref<2x8x32xbf16, #tpu.memory_space<vmem>>, vector<1x8x32xbf16>
    %195 = vector.shape_cast %194 : vector<1x8x32xbf16> to vector<8x32xbf16>
    %cst_200 = arith.constant dense<0.000000e+00> : vector<24x32xf32>
    %196 = tpu.matmul %193, %195, %cst_200 {dimension_numbers = #tpu.dot_dimension_numbers<[1], [0], [0], [1], [0, 0, 1, 1], [], []>} : vector<24x8xbf16>, vector<8x32xbf16>, vector<24x32xf32> -> vector<24x32xf32>
    %c1_201 = arith.constant 1 : index
    %c0_202 = arith.constant 0 : index
    %c0_203 = arith.constant 0 : index
    %197 = vector.load %arg8[%c1_201, %c0_202, %c0_203] : memref<2x1x32xf32, #tpu.memory_space<vmem>>, vector<1x1x32xf32>
    %198 = vector.shape_cast %197 : vector<1x1x32xf32> to vector<1x32xf32>
    %199 = vector.broadcast %198 : vector<1x32xf32> to vector<24x32xf32>
    %200 = arith.addf %196, %199 : vector<24x32xf32>
    %201 = arith.addf %200, %192 : vector<24x32xf32>
    %cst_204 = arith.constant 0.000000e+00 : f32
    %202 = vector.broadcast %cst_204 : f32 to vector<24x32xf32>
    %203 = arith.maximumf %201, %202 : vector<24x32xf32>
    %c0_205 = arith.constant 0 : index
    %c0_206 = arith.constant 0 : index
    %c0_207 = arith.constant 0 : index
    %204 = vector.load %arg9[%c0_205, %c0_206, %c0_207] : memref<1x24x32xf32, #tpu.memory_space<vmem>>, vector<1x24x32xf32>
    %205 = vector.shape_cast %204 : vector<1x24x32xf32> to vector<24x32xf32>
    %206 = vector.shape_cast %203 : vector<24x32xf32> to vector<1x24x32xf32>
    tpu.vector_store %arg9[%c0_205, %c0_206, %c0_207], %206 {strides = array<i32>} : memref<1x24x32xf32, #tpu.memory_space<vmem>>, vector<1x24x32xf32>,
    return
  }
  func.func @transform_0(%arg0: i32) -> (i32, i32, i32) {
    %c0_i32 = arith.constant 0 : i32
    %c0_i32_0 = arith.constant 0 : i32
    %c0_i32_1 = arith.constant 0 : i32
    return %arg0, %c0_i32, %c0_i32_0 : i32, i32, i32
  }
  func.func @transform_1(%arg0: i32) -> (i32, i32, i32) {
    %c0_i32 = arith.constant 0 : i32
    %c0_i32_0 = arith.constant 0 : i32
    %c0_i32_1 = arith.constant 0 : i32
    %c0_i32_2 = arith.constant 0 : i32
    return %c0_i32, %c0_i32_0, %c0_i32_1 : i32, i32, i32
  }
  func.func @transform_2(%arg0: i32) -> (i32, i32) {
    %c0_i32 = arith.constant 0 : i32
    %c0_i32_0 = arith.constant 0 : i32
    %c0_i32_1 = arith.constant 0 : i32
    return %c0_i32, %c0_i32_0 : i32, i32
  }
  func.func @transform_3(%arg0: i32) -> (i32, i32) {
    %c0_i32 = arith.constant 0 : i32
    %c0_i32_0 = arith.constant 0 : i32
    %c0_i32_1 = arith.constant 0 : i32
    return %c0_i32, %c0_i32_0 : i32, i32
  }
  func.func @transform_4(%arg0: i32) -> (i32, i32, i32) {
    %c0_i32 = arith.constant 0 : i32
    %c0_i32_0 = arith.constant 0 : i32
    %c0_i32_1 = arith.constant 0 : i32
    %c0_i32_2 = arith.constant 0 : i32
    return %c0_i32, %c0_i32_0, %c0_i32_1 : i32, i32, i32
  }
  func.func @transform_5(%arg0: i32) -> (i32, i32, i32) {
    %c0_i32 = arith.constant 0 : i32
    %c0_i32_0 = arith.constant 0 : i32
    %c0_i32_1 = arith.constant 0 : i32
    %c0_i32_2 = arith.constant 0 : i32
    return %c0_i32, %c0_i32_0, %c0_i32_1 : i32, i32, i32
  }
  func.func @transform_6(%arg0: i32) -> (i32, i32, i32) {
    %c0_i32 = arith.constant 0 : i32
    %c0_i32_0 = arith.constant 0 : i32
    %c0_i32_1 = arith.constant 0 : i32
    %c0_i32_2 = arith.constant 0 : i32
    return %c0_i32, %c0_i32_0, %c0_i32_1 : i32, i32, i32
  }
  func.func @transform_7(%arg0: i32) -> (i32, i32, i32) {
    %c0_i32 = arith.constant 0 : i32
    %c0_i32_0 = arith.constant 0 : i32
    %c0_i32_1 = arith.constant 0 : i32
    %c0_i32_2 = arith.constant 0 : i32
    return %c0_i32, %c0_i32_0, %c0_i32_1 : i32, i32, i32
  }
  func.func @transform_8(%arg0: i32) -> (i32, i32, i32) {
    %c0_i32 = arith.constant 0 : i32
    %c0_i32_0 = arith.constant 0 : i32
    %c0_i32_1 = arith.constant 0 : i32
    return %arg0, %c0_i32, %c0_i32_0 : i32, i32, i32
  }
}

</mosaic_0001>

<llo_original>
// kernel: encoder_forward.3
$region0: #{encoder_forward.3}
  #allocation0 [shape = 'u32[]', space=smem, size = 0x4, offset = 0x4, fixed_abs, tag = 'smem constant byte address 0x4 - core index']
  #allocation1 [shape = 'u32[144,128]{1,0:T(1,128)}', space=vmem, size = 0x12000, scoped, tag = 'internal scratch']
  %s0 = inlined_call_operand.vmem [shape: bf16[2,90,16], index: 0, kind: input, shape index: {}]
  %s1 = inlined_call_operand.vmem [shape: bf16[4,16,16], index: 1, kind: input, shape index: {}]
  %s2 = inlined_call_operand.vmem [shape: f32[1,16], index: 2, kind: input, shape index: {}]
  %s3 = inlined_call_operand.vmem [shape: f32[72,1], index: 3, kind: input, shape index: {}]
  %s4 = inlined_call_operand.vmem [shape: bf16[2,72,16], index: 4, kind: output, shape index: {}]
  %s5 = sld [smem:[#allocation0]]
  $region49: #{encoder_forward.3} parent=0
    _
  %s7 = ssub.s32 1, %s5
  %s8 = scalar_select 0, %s7, %s5
  loop: start=0, step=1, limit=4
  $region2: #{encoder_forward.3} parent=0 // loop_pre_header
    _
  $region3: #{encoder_forward.3} parent=0 // loop_header
    %s10 = sphi 0, %s14
    %p11 = scmp.ge.s32.totalorder %s10, 4
    %s20 = sphi 0, %s22
    %s23 = sphi 0, %s20
    %s24 = sphi 0, %s23
    %s40 = sphi 0, %s24
    %s44 = sphi 0, %s44
    %s46 = sphi 0, %s44
    %s47 = sphi 0, %s46
    %s61 = sphi 0, %s47
    %s65 = sphi 0, %s65
    %s67 = sphi 0, %s65
    %s68 = sphi 0, %s67
    %s82 = sphi 0, %s68
    %s86 = sphi 0, %s86
    %s88 = sphi 0, %s86
    %s89 = sphi 0, %s88
    %s103 = sphi 0, %s89
    %s109 = sphi 0, %s111
    %s112 = sphi 0, %s109
    %s113 = sphi 0, %s112
    %s129 = sphi 0, %s113
  $region4: #{encoder_forward.3} parent=0 // loop_header_branch
    %13 = sbr.rel (%p11) target = $region8
  $region5: #{encoder_forward.3} parent=0 // loop_body
    %s15 = ssub.s32 %s10, 1
    %s16 = ssub.s32 %s10, 2
    %s17 = sadd.s32 %s10, 1
    %s18 = ssub.s32 %s10, %s17
    %p19 = scmp.eq.s32.totalorder %s18, 0
    %s21 = sadd.s32 %s20, 1
    %s22 = scalar_select %p19, %s20, %s21
    %p25 = pneg %p19
    %p26 = scmp.eq.s32.totalorder %s10, 1
    %p27 = por %p25, %p26
    %p28 = scmp.ne.s32.totalorder %s20, %s23
    %p29 = scmp.eq.s32.totalorder %s10, 0
    %p30 = por %p28, %p29
    %p31 = scmp.ne.s32.totalorder %s20, %s23
    %p32 = scmp.eq.s32.totalorder %s15, 1
    %p33 = por %p31, %p32
    %p34 = scmp.ne.s32.totalorder %s23, %s24
    %p35 = scmp.eq.s32.totalorder %s15, 0
    %p36 = por %p34, %p35
    %p37 = scmp.ne.s32.totalorder %s23, %s24
    %p38 = scmp.eq.s32.totalorder %s16, 1
    %p39 = por %p37, %p38
    %p41 = scmp.ne.s32.totalorder %s24, %s40
    %p42 = scmp.eq.s32.totalorder %s16, 0
    %p43 = por %p41, %p42
    %s45 = sadd.s32 %s44, 1
    %p48 = scmp.eq.s32.totalorder %s10, 1
    %p49 = scmp.ne.s32.totalorder %s44, %s46
    %p50 = scmp.eq.s32.totalorder %s10, 0
    %p51 = por %p49, %p50
    %p52 = scmp.ne.s32.totalorder %s44, %s46
    %p53 = scmp.eq.s32.totalorder %s15, 1
    %p54 = por %p52, %p53
    %p55 = scmp.ne.s32.totalorder %s46, %s47
    %p56 = scmp.eq.s32.totalorder %s15, 0
    %p57 = por %p55, %p56
    %p58 = scmp.ne.s32.totalorder %s46, %s47
    %p59 = scmp.eq.s32.totalorder %s16, 1
    %p60 = por %p58, %p59
    %p62 = scmp.ne.s32.totalorder %s47, %s61
    %p63 = scmp.eq.s32.totalorder %s16, 0
    %p64 = por %p62, %p63
    %s66 = sadd.s32 %s65, 1
    %p69 = scmp.eq.s32.totalorder %s10, 1
    %p70 = scmp.ne.s32.totalorder %s65, %s67
    %p71 = scmp.eq.s32.totalorder %s10, 0
    %p72 = por %p70, %p71
    %p73 = scmp.ne.s32.totalorder %s65, %s67
    %p74 = scmp.eq.s32.totalorder %s15, 1
    %p75 = por %p73, %p74
    %p76 = scmp.ne.s32.totalorder %s67, %s68
    %p77 = scmp.eq.s32.totalorder %s15, 0
    %p78 = por %p76, %p77
    %p79 = scmp.ne.s32.totalorder %s67, %s68
    %p80 = scmp.eq.s32.totalorder %s16, 1
    %p81 = por %p79, %p80
    %p83 = scmp.ne.s32.totalorder %s68, %s82
    %p84 = scmp.eq.s32.totalorder %s16, 0
    %p85 = por %p83, %p84
    %s87 = sadd.s32 %s86, 1
    %p90 = scmp.eq.s32.totalorder %s10, 1
    %p91 = scmp.ne.s32.totalorder %s86, %s88
    %p92 = scmp.eq.s32.totalorder %s10, 0
    %p93 = por %p91, %p92
    %p94 = scmp.ne.s32.totalorder %s86, %s88
    %p95 = scmp.eq.s32.totalorder %s15, 1
    %p96 = por %p94, %p95
    %p97 = scmp.ne.s32.totalorder %s88, %s89
    %p98 = scmp.eq.s32.totalorder %s15, 0
    %p99 = por %p97, %p98
    %p100 = scmp.ne.s32.totalorder %s88, %s89
    %p101 = scmp.eq.s32.totalorder %s16, 1
    %p102 = por %p100, %p101
    %p104 = scmp.ne.s32.totalorder %s89, %s103
    %p105 = scmp.eq.s32.totalorder %s16, 0
    %p106 = por %p104, %p105
    %s107 = ssub.s32 %s10, %s17
    %p108 = scmp.eq.s32.totalorder %s107, 0
    %s110 = sadd.s32 %s109, 1
    %s111 = scalar_select %p108, %s109, %s110
    %p114 = pneg %p108
    %p115 = scmp.eq.s32.totalorder %s10, 1
    %p116 = por %p114, %p115
    %p117 = scmp.ne.s32.totalorder %s109, %s112
    %p118 = scmp.eq.s32.totalorder %s10, 0
    %p119 = por %p117, %p118
    %p120 = scmp.ne.s32.totalorder %s109, %s112
    %p121 = scmp.eq.s32.totalorder %s15, 1
    %p122 = por %p120, %p121
    %p123 = scmp.ne.s32.totalorder %s112, %s113
    %p124 = scmp.eq.s32.totalorder %s15, 0
    %p125 = por %p123, %p124
    %p126 = scmp.ne.s32.totalorder %s112, %s113
    %p127 = scmp.eq.s32.totalorder %s16, 1
    %p128 = por %p126, %p127
    %p130 = scmp.ne.s32.totalorder %s113, %s129
    %p131 = scmp.eq.s32.totalorder %s16, 0
    %p132 = por %p130, %p131
    %p133 = scmp.le.s32.totalorder 1, %s10
    %p134 = scmp.lt.s32.totalorder %s10, 3
    %p135 = pnand %p133, %p134
    %p136 = pneg %p135
    // Predicated region
    $region9: #{encoder_forward.3} parent=5 // pred_check
      _
    $region10: #{encoder_forward.3} parent=5 // pred_check_branch
      %138 = sbr.rel (%p135) target = $region12
    $region11: #{encoder_forward.3} parent=5 // pred_region
      %s139 = ssub.s32 %s10, 1
      // Predicated region
      $region13: #{encoder_forward.3} parent=11 // pred_check
        %p140 = pneg %p57
      $region14: #{encoder_forward.3} parent=11 // pred_check_branch
        %142 = sbr.rel (%p140) target = $region16
      $region15: #{encoder_forward.3} parent=11 // pred_region
        _
      $region16: #{encoder_forward.3} parent=11 // pred_fallthru
        _
      // Predicated region
      $region17: #{encoder_forward.3} parent=11 // pred_check
        %p143 = pneg %p78
      $region18: #{encoder_forward.3} parent=11 // pred_check_branch
        %145 = sbr.rel (%p143) target = $region20
      $region19: #{encoder_forward.3} parent=11 // pred_region
        _
      $region20: #{encoder_forward.3} parent=11 // pred_fallthru
        _
      // Predicated region
      $region21: #{encoder_forward.3} parent=11 // pred_check
        %p146 = pneg %p99
      $region22: #{encoder_forward.3} parent=11 // pred_check_branch
        %148 = sbr.rel (%p146) target = $region24
      $region23: #{encoder_forward.3} parent=11 // pred_region
        _
      $region24: #{encoder_forward.3} parent=11 // pred_fallthru
        _
    $region12: #{encoder_forward.3} parent=5 // pred_fallthru
      _
    %p149 = scmp.lt.s32.totalorder %s10, 2
    // Predicated region
    $region25: #{encoder_forward.3} parent=5 // pred_check
      %p150 = pneg %p149
    $region26: #{encoder_forward.3} parent=5 // pred_check_branch
      %152 = sbr.rel (%p150) target = $region28
    $region27: #{encoder_forward.3} parent=5 // pred_region
      // Predicated region
      $region29: #{encoder_forward.3} parent=27 // pred_check
        %p153 = pneg %p30
      $region30: #{encoder_forward.3} parent=27 // pred_check_branch
        %155 = sbr.rel (%p153) target = $region32
      $region31: #{encoder_forward.3} parent=27 // pred_region
        %p156 = scmp.lt.s32.totalorder %s10, 1
        %s157 = scalar_select %p156, %s10, 1
        %s158 = smul.addr %s157, 12
        %s159 = smul.addr %s158, 4
        %s160 = scalar_lea.vmem %s0, %s159
      $region32: #{encoder_forward.3} parent=27 // pred_fallthru
        _
    $region28: #{encoder_forward.3} parent=5 // pred_fallthru
      _
    %p161 = scmp.le.s32.totalorder 1, %s10
    %p162 = scmp.lt.s32.totalorder %s10, 3
    %p163 = pnand %p161, %p162
    %p164 = pneg %p163
    // Predicated region
    $region33: #{encoder_forward.3} parent=5 // pred_check
      _
    $region34: #{encoder_forward.3} parent=5 // pred_check_branch
      %166 = sbr.rel (%p163) target = $region36
    $region35: #{encoder_forward.3} parent=5 // pred_region
      %s167 = ssub.s32 %s10, 1
      %p168 = scmp.lt.s32.totalorder %s15, 1
      %s169 = scalar_select %p168, %s15, 1
      %s170 = smul.addr %s169, 12
      %s171 = smul.addr %s170, 4
      %s172 = scalar_lea.vmem %s0, %s171
      %p173 = pneg %p36
      %p174 = pneg %p33
      %p175 = pneg %p57
      %p176 = pneg %p54
      %p177 = pneg %p78
      %p178 = pneg %p75
      %p179 = pneg %p99
      %p180 = pneg %p96
      %p181 = pneg %p125
      %p182 = pneg %p122
      %p183 = scmp.lt.s32.totalorder %s15, 1
      %s184 = scalar_select %p183, %s15, 1
      %s185 = smul.addr %s184, 9
      %s186 = smul.addr %s185, 4
      %s187 = scalar_lea.vmem %s4, %s186
      %p188 = scmp.lt.s32.totalorder %s15, 1
      %s189 = scalar_select %p188, %s15, 1
      %s190 = smul.addr %s189, 12
      %s191 = smul.addr %s190, 4
      %s192 = scalar_lea.vmem %s0, %s191
      %p193 = scmp.lt.s32.totalorder %s15, 1
      %s194 = scalar_select %p193, %s15, 1
      %s195 = smul.addr %s194, 9
      %s196 = smul.addr %s195, 4
      %s197 = scalar_lea.vmem %s4, %s196
      %v199 = vld [vmem:[%s192] sm:$0xf]
      %v200 = vld [vmem:[%s192 + $0x4] sm:$0xf]
      %v201 = vld [vmem:[%s192 + $0x8] sm:$0xf]
      %v202 = vld [vmem:[%s192 + $0xc] sm:$0xf]
      %v203 = vld [vmem:[%s192 + $0x10] sm:$0xf]
      %v204 = vld [vmem:[%s192 + $0x14] sm:$0xf]
      %v205 = vld [vmem:[%s192 + $0x18] sm:$0xf]
      %v206 = vld [vmem:[%s192 + $0x1c] sm:$0xf]
      %v207 = vld [vmem:[%s192 + $0x20] sm:$0xf]
      %v208 = vld [vmem:[%s1] sm:$0xf]
      %v209 = vld [vmem:[%s1 + $0x4] sm:$0xf]
      %v210 = vld [vmem:[%s192 + $0x24] sm:$0x1]
      %s211 = scalar_lea.vmem %s1, 8
      %v212 = vld [vmem:[%s211] sm:$0xf]
      %v213 = vld [vmem:[%s211 + $0x4] sm:$0xf]
      %v224 = vunpack.c.l.b16 %v199
      %v225 = vunpack.c.l.b16 %v200
      %v226 = vunpack.c.l.b16 %v201
      %v227 = vunpack.c.l.b16 %v202
      %v228 = vunpack.c.l.b16 %v203
      %v229 = vunpack.c.l.b16 %v204
      %v230 = vunpack.c.l.b16 %v205
      %v231 = vunpack.c.l.b16 %v206
      %v232 = vunpack.c.l.b16 %v207
      %v233 = vunpack.c.l.b16 %v210
      %v234 = vpack.c.b16 %v225, %v224
      %v235 = vpack.c.b16 %v227, %v226
      %v236 = vpack.c.b16 %v229, %v228
      %v237 = vpack.c.b16 %v231, %v230
      %v238 = vpack.c.b16 %v233, %v232
      %vm239 = vsmask.f32 7424
      %v241 = vshrl.u32 %v234, 16
      %v243 = vshll.u32 %v234, 16
      %v245 = vrot.slane %v243, 1
      %v246 = vor.u32 %v241, %v245
      %v248 = vshll.u32 %v235, 16
      %v250 = vrot.slane %v248, 1
      %v251 = vsel %vm239, %v246, %v250
      %v252 = vshrl.u32 %v235, 16
      %v254 = vor.u32 %v252, %v250
      %v256 = vshll.u32 %v236, 16
      %v258 = vrot.slane %v256, 1
      %v259 = vsel %vm239, %v254, %v258
      %v260 = vshrl.u32 %v236, 16
      %v262 = vor.u32 %v260, %v258
      %v264 = vshll.u32 %v237, 16
      %v266 = vrot.slane %v264, 1
      %v267 = vsel %vm239, %v262, %v266
      %v268 = vshrl.u32 %v237, 16
      %v270 = vor.u32 %v268, %v266
      %v272 = vshll.u32 %v238, 16
      %v274 = vrot.slane %v272, 1
      %v275 = vsel %vm239, %v270, %v274
      %v276 = vshrl.u32 %v238, 16
      %v278 = vor.u32 %v276, %v274
      %v281 = vunpack.c.l.b16 %v212
      %v282 = vunpack.c.l.b16 %v213
      %v283 = vpack.c.b16 %v282, %v281
      %vm285 = vcmask 130048
      %v287 = vsel %vm285, %v251, 0
      %v290 = vsel %vm285, %v259, 0
      %v293 = vsel %vm285, %v267, 0
      %v296 = vsel %vm285, %v275, 0
      %v299 = vsel %vm285, %v278, 0
      %301 = vmatprep.subr.bf16.mxu0 0
      %302 = vmatpush1.bf16.msra.mxu0 %v283
      %303 = vmatprep.subr.bf16.mxu0 0
      %304 = vmatpush1.bf16.msra.mxu0 0
      %305 = vmatprep.subr.bf16.mxu0 0
      %306 = vmatpush1.bf16.msra.mxu0 0
      %307 = vmatprep.subr.bf16.mxu0 0
      %308 = vmatpush1.bf16.msra.mxu0 0
      %309 = vmatprep.subr.bf16.mxu0 0
      %310 = vmatpush1.bf16.msra.mxu0 0
      %311 = vmatprep.subr.bf16.mxu0 0
      %312 = vmatpush1.bf16.msra.mxu0 0
      %313 = vmatprep.subr.bf16.mxu0 0
      %314 = vmatpush1.bf16.msra.mxu0 0
      %315 = vmatprep.subr.bf16.mxu0 0
      %316 = vmatpush1.bf16.msra.mxu0 0
      %317 = vmatprep.subr.bf16.mxu0 0
      %318 = vmatpush1.bf16.msra.mxu0 0
      %319 = vmatprep.subr.bf16.mxu0 0
      %320 = vmatpush1.bf16.msra.mxu0 0
      %321 = vmatprep.subr.bf16.mxu0 0
      %322 = vmatpush1.bf16.msra.mxu0 0
      %323 = vmatprep.subr.bf16.mxu0 0
      %324 = vmatpush1.bf16.msra.mxu0 0
      %325 = vmatprep.subr.bf16.mxu0 0
      %326 = vmatpush1.bf16.msra.mxu0 0
      %327 = vmatprep.subr.bf16.mxu0 0
      %328 = vmatpush1.bf16.msra.mxu0 0
      %329 = vmatprep.subr.bf16.mxu0 0
      %330 = vmatpush1.bf16.msra.mxu0 0
      %331 = vmatprep.subr.bf16.mxu0 0
      %332 = vmatpush1.bf16.msra.mxu0 0
      %333 = vmatprep.mubr.bf16.mxu0 0
      %334 = vmatmul.mubr.bf16.gmra.mrb[0].mxu0 %v287
      %v335 = vpop.f32.mrb[0].mxu0
      %v336 = vadd.f32 0.0, %v335
      %v337 = vpop.f32.mrb[0].mxu0
      %v338 = vpop.f32.mrb[0].mxu0
      %v339 = vadd.f32 0.0, %v338
      %v340 = vpop.f32.mrb[0].mxu0
      %341 = vmatprep.mubr.bf16.mxu0 0
      %342 = vmatmul.mubr.bf16.gmra.mrb[0].mxu0 %v290
      %v343 = vpop.f32.mrb[0].mxu0
      %v344 = vadd.f32 0.0, %v343
      %v345 = vpop.f32.mrb[0].mxu0
      %v346 = vpop.f32.mrb[0].mxu0
      %v347 = vadd.f32 0.0, %v346
      %v348 = vpop.f32.mrb[0].mxu0
      %349 = vmatprep.mubr.bf16.mxu0 0
      %350 = vmatmul.mubr.bf16.gmra.mrb[0].mxu0 %v293
      %v351 = vpop.f32.mrb[0].mxu0
      %v352 = vadd.f32 0.0, %v351
      %v353 = vpop.f32.mrb[0].mxu0
      %v354 = vpop.f32.mrb[0].mxu0
      %v355 = vadd.f32 0.0, %v354
      %v356 = vpop.f32.mrb[0].mxu0
      %357 = vmatprep.mubr.bf16.mxu0 0
      %358 = vmatmul.mubr.bf16.gmra.mrb[0].mxu0 %v296
      %v359 = vpop.f32.mrb[0].mxu0
      %v360 = vadd.f32 0.0, %v359
      %v361 = vpop.f32.mrb[0].mxu0
      %v362 = vpop.f32.mrb[0].mxu0
      %v363 = vadd.f32 0.0, %v362
      %v364 = vpop.f32.mrb[0].mxu0
      %365 = vmatprep.mubr.bf16.mxu0 0
      %366 = vmatmul.mubr.bf16.gmra.mrb[0].mxu0 %v299
      %v367 = vpop.f32.mrb[0].mxu0
      %v368 = vadd.f32 0.0, %v367
      %v369 = vpop.f32.mrb[0].mxu0
      %v370 = vpop.f32.mrb[0].mxu0
      %v371 = vpop.f32.mrb[0].mxu0
      %372 = vdwg.mxu0
      %v373 = vpack.c.b16 %v232, %v232
      %v376 = vunpack.c.l.b16 %v208
      %v377 = vunpack.c.l.b16 %v209
      %v378 = vpack.c.b16 %v377, %v376
      %v380 = vsel %vm285, %v234, 0
      %v382 = vsel %vm285, %v235, 0
      %v384 = vsel %vm285, %v236, 0
      %v386 = vsel %vm285, %v237, 0
      %v389 = vsel %vm285, %v373, 0
      %391 = vmatprep.subr.bf16.mxu0 0
      %392 = vmatpush1.bf16.msra.mxu0 %v378
      %393 = vmatprep.subr.bf16.mxu0 0
      %394 = vmatpush1.bf16.msra.mxu0 0
      %395 = vmatprep.subr.bf16.mxu0 0
      %396 = vmatpush1.bf16.msra.mxu0 0
      %397 = vmatprep.subr.bf16.mxu0 0
      %398 = vmatpush1.bf16.msra.mxu0 0
      %399 = vmatprep.subr.bf16.mxu0 0
      %400 = vmatpush1.bf16.msra.mxu0 0
      %401 = vmatprep.subr.bf16.mxu0 0
      %402 = vmatpush1.bf16.msra.mxu0 0
      %403 = vmatprep.subr.bf16.mxu0 0
      %404 = vmatpush1.bf16.msra.mxu0 0
      %405 = vmatprep.subr.bf16.mxu0 0
      %406 = vmatpush1.bf16.msra.mxu0 0
      %407 = vmatprep.subr.bf16.mxu0 0
      %408 = vmatpush1.bf16.msra.mxu0 0
      %409 = vmatprep.subr.bf16.mxu0 0
      %410 = vmatpush1.bf16.msra.mxu0 0
      %411 = vmatprep.subr.bf16.mxu0 0
      %412 = vmatpush1.bf16.msra.mxu0 0
      %413 = vmatprep.subr.bf16.mxu0 0
      %414 = vmatpush1.bf16.msra.mxu0 0
      %415 = vmatprep.subr.bf16.mxu0 0
      %416 = vmatpush1.bf16.msra.mxu0 0
      %417 = vmatprep.subr.bf16.mxu0 0
      %418 = vmatpush1.bf16.msra.mxu0 0
      %419 = vmatprep.subr.bf16.mxu0 0
      %420 = vmatpush1.bf16.msra.mxu0 0
      %421 = vmatprep.subr.bf16.mxu0 0
      %422 = vmatpush1.bf16.msra.mxu0 0
      %423 = vmatprep.mubr.bf16.mxu0 0
      %424 = vmatmul.mubr.bf16.gmra.mrb[0].mxu0 %v380
      %v425 = vpop.f32.mrb[0].mxu0
      %v426 = vadd.f32 %v336, %v425
      %v427 = vpop.f32.mrb[0].mxu0
      %v428 = vpop.f32.mrb[0].mxu0
      %v429 = vadd.f32 %v339, %v428
      %v430 = vpop.f32.mrb[0].mxu0
      %431 = vmatprep.mubr.bf16.mxu0 0
      %432 = vmatmul.mubr.bf16.gmra.mrb[0].mxu0 %v382
      %v433 = vpop.f32.mrb[0].mxu0
      %v434 = vadd.f32 %v344, %v433
      %v435 = vpop.f32.mrb[0].mxu0
      %v436 = vpop.f32.mrb[0].mxu0
      %v437 = vadd.f32 %v347, %v436
      %v438 = vpop.f32.mrb[0].mxu0
      %439 = vmatprep.mubr.bf16.mxu0 0
      %440 = vmatmul.mubr.bf16.gmra.mrb[0].mxu0 %v384
      %v441 = vpop.f32.mrb[0].mxu0
      %v442 = vadd.f32 %v352, %v441
      %v443 = vpop.f32.mrb[0].mxu0
      %v444 = vpop.f32.mrb[0].mxu0
      %v445 = vadd.f32 %v355, %v444
      %v446 = vpop.f32.mrb[0].mxu0
      %447 = vmatprep.mubr.bf16.mxu0 0
      %448 = vmatmul.mubr.bf16.gmra.mrb[0].mxu0 %v386
      %v449 = vpop.f32.mrb[0].mxu0
      %v450 = vadd.f32 %v360, %v449
      %v451 = vpop.f32.mrb[0].mxu0
      %v452 = vpop.f32.mrb[0].mxu0
      %v453 = vadd.f32 %v363, %v452
      %v454 = vpop.f32.mrb[0].mxu0
      %455 = vmatprep.mubr.bf16.mxu0 0
      %456 = vmatmul.mubr.bf16.gmra.mrb[0].mxu0 %v389
      %v457 = vpop.f32.mrb[0].mxu0
      %v458 = vadd.f32 %v368, %v457
      %v459 = vpop.f32.mrb[0].mxu0
      %v460 = vpop.f32.mrb[0].mxu0
      %v461 = vpop.f32.mrb[0].mxu0
      %462 = vdwg.mxu0
      %v463 = vld [vmem:[%s192 + $0x4] sm:$0xf]
      %v464 = vld [vmem:[%s192 + $0x8] sm:$0xf]
      %v465 = vld [vmem:[%s192 + $0xc] sm:$0xf]
      %v466 = vld [vmem:[%s192 + $0x10] sm:$0xf]
      %v467 = vld [vmem:[%s192 + $0x14] sm:$0xf]
      %v468 = vld [vmem:[%s192 + $0x18] sm:$0xf]
      %v469 = vld [vmem:[%s192 + $0x1c] sm:$0xf]
      %v470 = vld [vmem:[%s192 + $0x20] sm:$0xf]
      %v471 = vld [vmem:[%s192 + $0x24] sm:$0xf]
      %v472 = vld [vmem:[%s192 + $0x28] sm:$0x1]
      %s473 = scalar_lea.vmem %s1, 16
      %v474 = vld [vmem:[%s473] sm:$0xf]
      %v475 = vld [vmem:[%s473 + $0x4] sm:$0xf]
      %v486 = vunpack.c.l.b16 %v463
      %v487 = vunpack.c.l.b16 %v464
      %v488 = vunpack.c.l.b16 %v465
      %v489 = vunpack.c.l.b16 %v466
      %v490 = vunpack.c.l.b16 %v467
      %v491 = vunpack.c.l.b16 %v468
      %v492 = vunpack.c.l.b16 %v469
      %v493 = vunpack.c.l.b16 %v470
      %v494 = vunpack.c.l.b16 %v471
      %v495 = vunpack.c.l.b16 %v472
      %v496 = vpack.c.b16 %v487, %v486
      %v497 = vpack.c.b16 %v489, %v488
      %v498 = vpack.c.b16 %v491, %v490
      %v499 = vpack.c.b16 %v493, %v492
      %v500 = vpack.c.b16 %v495, %v494
      %v502 = vshrl.u32 %v496, 16
      %v504 = vshll.u32 %v496, 16
      %v506 = vrot.slane %v504, 1
      %v507 = vor.u32 %v502, %v506
      %v509 = vshll.u32 %v497, 16
      %v511 = vrot.slane %v509, 1
      %v512 = vsel %vm239, %v507, %v511
      %v513 = vshrl.u32 %v497, 16
      %v515 = vor.u32 %v513, %v511
      %v517 = vshll.u32 %v498, 16
      %v519 = vrot.slane %v517, 1
      %v520 = vsel %vm239, %v515, %v519
      %v521 = vshrl.u32 %v498, 16
      %v523 = vor.u32 %v521, %v519
      %v525 = vshll.u32 %v499, 16
      %v527 = vrot.slane %v525, 1
      %v528 = vsel %vm239, %v523, %v527
      %v529 = vshrl.u32 %v499, 16
      %v531 = vor.u32 %v529, %v527
      %v533 = vshll.u32 %v500, 16
      %v535 = vrot.slane %v533, 1
      %v536 = vsel %vm239, %v531, %v535
      %v537 = vshrl.u32 %v500, 16
      %v539 = vor.u32 %v537, %v535
      %v542 = vunpack.c.l.b16 %v474
      %v543 = vunpack.c.l.b16 %v475
      %v544 = vpack.c.b16 %v543, %v542
      %v547 = vsel %vm285, %v512, 0
      %v550 = vsel %vm285, %v520, 0
      %v553 = vsel %vm285, %v528, 0
      %v556 = vsel %vm285, %v536, 0
      %v559 = vsel %vm285, %v539, 0
      %561 = vmatprep.subr.bf16.mxu0 0
      %562 = vmatpush1.bf16.msra.mxu0 %v544
      %563 = vmatprep.subr.bf16.mxu0 0
      %564 = vmatpush1.bf16.msra.mxu0 0
      %565 = vmatprep.subr.bf16.mxu0 0
      %566 = vmatpush1.bf16.msra.mxu0 0
      %567 = vmatprep.subr.bf16.mxu0 0
      %568 = vmatpush1.bf16.msra.mxu0 0
      %569 = vmatprep.subr.bf16.mxu0 0
      %570 = vmatpush1.bf16.msra.mxu0 0
      %571 = vmatprep.subr.bf16.mxu0 0
      %572 = vmatpush1.bf16.msra.mxu0 0
      %573 = vmatprep.subr.bf16.mxu0 0
      %574 = vmatpush1.bf16.msra.mxu0 0
      %575 = vmatprep.subr.bf16.mxu0 0
      %576 = vmatpush1.bf16.msra.mxu0 0
      %577 = vmatprep.subr.bf16.mxu0 0
      %578 = vmatpush1.bf16.msra.mxu0 0
      %579 = vmatprep.subr.bf16.mxu0 0
      %580 = vmatpush1.bf16.msra.mxu0 0
      %581 = vmatprep.subr.bf16.mxu0 0
      %582 = vmatpush1.bf16.msra.mxu0 0
      %583 = vmatprep.subr.bf16.mxu0 0
      %584 = vmatpush1.bf16.msra.mxu0 0
      %585 = vmatprep.subr.bf16.mxu0 0
      %586 = vmatpush1.bf16.msra.mxu0 0
      %587 = vmatprep.subr.bf16.mxu0 0
      %588 = vmatpush1.bf16.msra.mxu0 0
      %589 = vmatprep.subr.bf16.mxu0 0
      %590 = vmatpush1.bf16.msra.mxu0 0
      %591 = vmatprep.subr.bf16.mxu0 0
      %592 = vmatpush1.bf16.msra.mxu0 0
      %593 = vmatprep.mubr.bf16.mxu0 0
      %594 = vmatmul.mubr.bf16.gmra.mrb[0].mxu0 %v547
      %v595 = vpop.f32.mrb[0].mxu0
      %v596 = vadd.f32 0.0, %v595
      %v597 = vpop.f32.mrb[0].mxu0
      %v598 = vpop.f32.mrb[0].mxu0
      %v599 = vadd.f32 0.0, %v598
      %v600 = vpop.f32.mrb[0].mxu0
      %601 = vmatprep.mubr.bf16.mxu0 0
      %602 = vmatmul.mubr.bf16.gmra.mrb[0].mxu0 %v550
      %v603 = vpop.f32.mrb[0].mxu0
      %v604 = vadd.f32 0.0, %v603
      %v605 = vpop.f32.mrb[0].mxu0
      %v606 = vpop.f32.mrb[0].mxu0
      %v607 = vadd.f32 0.0, %v606
      %v608 = vpop.f32.mrb[0].mxu0
      %609 = vmatprep.mubr.bf16.mxu0 0
      %610 = vmatmul.mubr.bf16.gmra.mrb[0].mxu0 %v553
      %v611 = vpop.f32.mrb[0].mxu0
      %v612 = vadd.f32 0.0, %v611
      %v613 = vpop.f32.mrb[0].mxu0
      %v614 = vpop.f32.mrb[0].mxu0
      %v615 = vadd.f32 0.0, %v614
      %v616 = vpop.f32.mrb[0].mxu0
      %617 = vmatprep.mubr.bf16.mxu0 0
      %618 = vmatmul.mubr.bf16.gmra.mrb[0].mxu0 %v556
      %v619 = vpop.f32.mrb[0].mxu0
      %v620 = vadd.f32 0.0, %v619
      %v621 = vpop.f32.mrb[0].mxu0
      %v622 = vpop.f32.mrb[0].mxu0
      %v623 = vadd.f32 0.0, %v622
      %v624 = vpop.f32.mrb[0].mxu0
      %625 = vmatprep.mubr.bf16.mxu0 0
      %626 = vmatmul.mubr.bf16.gmra.mrb[0].mxu0 %v559
      %v627 = vpop.f32.mrb[0].mxu0
      %v628 = vadd.f32 0.0, %v627
      %v629 = vpop.f32.mrb[0].mxu0
      %v630 = vpop.f32.mrb[0].mxu0
      %v631 = vpop.f32.mrb[0].mxu0
      %632 = vdwg.mxu0
      %v633 = vadd.f32 %v426, %v596
      %v634 = vadd.f32 %v429, %v599
      %v635 = vadd.f32 %v434, %v604
      %v636 = vadd.f32 %v437, %v607
      %v637 = vadd.f32 %v442, %v612
      %v638 = vadd.f32 %v445, %v615
      %v639 = vadd.f32 %v450, %v620
      %v640 = vadd.f32 %v453, %v623
      %v641 = vadd.f32 %v458, %v628
      %v642 = vld [vmem:[%s192 + $0x4] sm:$0xe]
      %s643 = scalar_lea.vmem %s1, 24
      %v644 = vld [vmem:[%s643] sm:$0xf]
      %v645 = vld [vmem:[%s643 + $0x4] sm:$0xf]
      %v647 = vunpack.c.l.b16 %v642
      %v648 = vpack.c.b16 %v487, %v647
      %vm649 = vcmask 1046528
      %v650 = vrot.slane %v648, 1
      %v651 = vrot.slane %v497, 1
      %v652 = vsel %vm649, %v650, %v651
      %v653 = vrot.slane %v498, 1
      %v654 = vsel %vm649, %v651, %v653
      %v655 = vrot.slane %v499, 1
      %v656 = vsel %vm649, %v653, %v655
      %v657 = vrot.slane %v500, 1
      %v658 = vsel %vm649, %v655, %v657
      %v661 = vunpack.c.l.b16 %v644
      %v662 = vunpack.c.l.b16 %v645
      %v663 = vpack.c.b16 %v662, %v661
      %v666 = vsel %vm285, %v652, 0
      %v669 = vsel %vm285, %v654, 0
      %v672 = vsel %vm285, %v656, 0
      %v675 = vsel %vm285, %v658, 0
      %v678 = vsel %vm285, %v657, 0
      %680 = vmatprep.subr.bf16.mxu0 0
      %681 = vmatpush1.bf16.msra.mxu0 %v663
      %682 = vmatprep.subr.bf16.mxu0 0
      %683 = vmatpush1.bf16.msra.mxu0 0
      %684 = vmatprep.subr.bf16.mxu0 0
      %685 = vmatpush1.bf16.msra.mxu0 0
      %686 = vmatprep.subr.bf16.mxu0 0
      %687 = vmatpush1.bf16.msra.mxu0 0
      %688 = vmatprep.subr.bf16.mxu0 0
      %689 = vmatpush1.bf16.msra.mxu0 0
      %690 = vmatprep.subr.bf16.mxu0 0
      %691 = vmatpush1.bf16.msra.mxu0 0
      %692 = vmatprep.subr.bf16.mxu0 0
      %693 = vmatpush1.bf16.msra.mxu0 0
      %694 = vmatprep.subr.bf16.mxu0 0
      %695 = vmatpush1.bf16.msra.mxu0 0
      %696 = vmatprep.subr.bf16.mxu0 0
      %697 = vmatpush1.bf16.msra.mxu0 0
      %698 = vmatprep.subr.bf16.mxu0 0
      %699 = vmatpush1.bf16.msra.mxu0 0
      %700 = vmatprep.subr.bf16.mxu0 0
      %701 = vmatpush1.bf16.msra.mxu0 0
      %702 = vmatprep.subr.bf16.mxu0 0
      %703 = vmatpush1.bf16.msra.mxu0 0
      %704 = vmatprep.subr.bf16.mxu0 0
      %705 = vmatpush1.bf16.msra.mxu0 0
      %706 = vmatprep.subr.bf16.mxu0 0
      %707 = vmatpush1.bf16.msra.mxu0 0
      %708 = vmatprep.subr.bf16.mxu0 0
      %709 = vmatpush1.bf16.msra.mxu0 0
      %710 = vmatprep.subr.bf16.mxu0 0
      %711 = vmatpush1.bf16.msra.mxu0 0
      %712 = vmatprep.mubr.bf16.mxu0 0
      %713 = vmatmul.mubr.bf16.gmra.mrb[0].mxu0 %v666
      %v714 = vpop.f32.mrb[0].mxu0
      %v715 = vadd.f32 0.0, %v714
      %v716 = vpop.f32.mrb[0].mxu0
      %v717 = vpop.f32.mrb[0].mxu0
      %v718 = vadd.f32 0.0, %v717
      %v719 = vpop.f32.mrb[0].mxu0
      %720 = vmatprep.mubr.bf16.mxu0 0
      %721 = vmatmul.mubr.bf16.gmra.mrb[0].mxu0 %v669
      %v722 = vpop.f32.mrb[0].mxu0
      %v723 = vadd.f32 0.0, %v722
      %v724 = vpop.f32.mrb[0].mxu0
      %v725 = vpop.f32.mrb[0].mxu0
      %v726 = vadd.f32 0.0, %v725
      %v727 = vpop.f32.mrb[0].mxu0
      %728 = vmatprep.mubr.bf16.mxu0 0
      %729 = vmatmul.mubr.bf16.gmra.mrb[0].mxu0 %v672
      %v730 = vpop.f32.mrb[0].mxu0
      %v731 = vadd.f32 0.0, %v730
      %v732 = vpop.f32.mrb[0].mxu0
      %v733 = vpop.f32.mrb[0].mxu0
      %v734 = vadd.f32 0.0, %v733
      %v735 = vpop.f32.mrb[0].mxu0
      %736 = vmatprep.mubr.bf16.mxu0 0
      %737 = vmatmul.mubr.bf16.gmra.mrb[0].mxu0 %v675
      %v738 = vpop.f32.mrb[0].mxu0
      %v739 = vadd.f32 0.0, %v738
      %v740 = vpop.f32.mrb[0].mxu0
      %v741 = vpop.f32.mrb[0].mxu0
      %v742 = vadd.f32 0.0, %v741
      %v743 = vpop.f32.mrb[0].mxu0
      %744 = vmatprep.mubr.bf16.mxu0 0
      %745 = vmatmul.mubr.bf16.gmra.mrb[0].mxu0 %v678
      %v746 = vpop.f32.mrb[0].mxu0
      %v747 = vadd.f32 0.0, %v746
      %v748 = vpop.f32.mrb[0].mxu0
      %v749 = vpop.f32.mrb[0].mxu0
      %v750 = vpop.f32.mrb[0].mxu0
      %751 = vdwg.mxu0
      %v752 = vadd.f32 %v633, %v715
      %v753 = vadd.f32 %v634, %v718
      %v754 = vadd.f32 %v635, %v723
      %v755 = vadd.f32 %v636, %v726
      %v756 = vadd.f32 %v637, %v731
      %v757 = vadd.f32 %v638, %v734
      %v758 = vadd.f32 %v639, %v739
      %v759 = vadd.f32 %v640, %v742
      %v760 = vadd.f32 %v641, %v747
      %v761 = vld [vmem:[%s2] sm:$0x1]
      %v763 = vlaneseq
      %v764 = vshrl.u32 %v763, 7
      %v765 = vsub.s32 0, %v764
      %v766 = vrot.slane %v761, %v765
      %v768 = vadd.f32 %v752, %v766
      %v769 = vadd.f32 %v753, %v766
      %v770 = vadd.f32 %v754, %v766
      %v771 = vadd.f32 %v755, %v766
      %v772 = vadd.f32 %v756, %v766
      %v773 = vadd.f32 %v757, %v766
      %v774 = vadd.f32 %v758, %v766
      %v775 = vadd.f32 %v759, %v766
      %v776 = vadd.f32 %v760, %v766
      %v777 = vmax.f32 %v768, 0.0
      %v778 = vmax.f32 %v769, 0.0
      %v779 = vmax.f32 %v770, 0.0
      %v780 = vmax.f32 %v771, 0.0
      %v781 = vmax.f32 %v772, 0.0
      %v782 = vmax.f32 %v773, 0.0
      %v783 = vmax.f32 %v774, 0.0
      %v784 = vmax.f32 %v775, 0.0
      %v785 = vmax.f32 %v776, 0.0
      %v786 = vld [vmem:[%s3] sm:$0xff]
      %v787 = vld [vmem:[%s3 + $0x8] sm:$0xff]
      %v788 = vld [vmem:[%s3 + $0x10] sm:$0xff]
      %v789 = vld [vmem:[%s3 + $0x18] sm:$0xff]
      %v790 = vld [vmem:[%s3 + $0x20] sm:$0xff]
      %v791 = vld [vmem:[%s3 + $0x28] sm:$0xff]
      %v792 = vld [vmem:[%s3 + $0x30] sm:$0xff]
      %v793 = vld [vmem:[%s3 + $0x38] sm:$0xff]
      %v794 = vld [vmem:[%s3 + $0x40] sm:$0xff]
      %796 = vset.pattern.permute.xlu0 0
      %797 = vperm.xlu0 %796, %v786
      %v798 = vpop.permute.xlu0 %797
      %801 = vset.pattern.permute.xlu0 0
      %802 = vperm.xlu0 %801, %v787
      %v803 = vpop.permute.xlu0 %802
      %806 = vset.pattern.permute.xlu0 0
      %807 = vperm.xlu0 %806, %v788
      %v808 = vpop.permute.xlu0 %807
      %811 = vset.pattern.permute.xlu0 0
      %812 = vperm.xlu0 %811, %v789
      %v813 = vpop.permute.xlu0 %812
      %816 = vset.pattern.permute.xlu0 0
      %817 = vperm.xlu0 %816, %v790
      %v818 = vpop.permute.xlu0 %817
      %821 = vset.pattern.permute.xlu0 0
      %822 = vperm.xlu0 %821, %v791
      %v823 = vpop.permute.xlu0 %822
      %826 = vset.pattern.permute.xlu0 0
      %827 = vperm.xlu0 %826, %v792
      %v828 = vpop.permute.xlu0 %827
      %831 = vset.pattern.permute.xlu0 0
      %832 = vperm.xlu0 %831, %v793
      %v833 = vpop.permute.xlu0 %832
      %836 = vset.pattern.permute.xlu0 0
      %837 = vperm.xlu0 %836, %v794
      %v838 = vpop.permute.xlu0 %837
      %v840 = vmul.f32 %v777, %v798
      %v841 = vmul.f32 %v778, %v803
      %v842 = vmul.f32 %v779, %v808
      %v843 = vmul.f32 %v780, %v813
      %v844 = vmul.f32 %v781, %v818
      %v845 = vmul.f32 %v782, %v823
      %v846 = vmul.f32 %v783, %v828
      %v847 = vmul.f32 %v784, %v833
      %v848 = vmul.f32 %v785, %v838
      %v849 = vpack.c.bf16 %v841, %v840
      %v850 = vpack.c.bf16 %v843, %v842
      %v851 = vpack.c.bf16 %v845, %v844
      %v852 = vpack.c.bf16 %v847, %v846
      %v853 = vpack.c.bf16 %v848, %v848
      %v859 = vunpack.c.l.b16 %v849
      %v860 = vunpack.c.h.b16 %v849
      %v861 = vunpack.c.l.b16 %v850
      %v862 = vunpack.c.h.b16 %v850
      %v863 = vunpack.c.l.b16 %v851
      %v864 = vunpack.c.h.b16 %v851
      %v865 = vunpack.c.l.b16 %v852
      %v866 = vunpack.c.h.b16 %v852
      %v867 = vunpack.c.l.b16 %v853
      %v868 = vpack.c.b16 %v859, %v859
      %v869 = vpack.c.b16 %v860, %v860
      %v870 = vpack.c.b16 %v861, %v861
      %v871 = vpack.c.b16 %v862, %v862
      %v872 = vpack.c.b16 %v863, %v863
      %v873 = vpack.c.b16 %v864, %v864
      %v874 = vpack.c.b16 %v865, %v865
      %v875 = vpack.c.b16 %v866, %v866
      %v876 = vpack.c.b16 %v867, %v867
      %vm886 = vcmask 125952
      %887 = vst.msk [vmem:[%s197] sm:$0xf] %vm886, %v868
      %888 = vst.msk [vmem:[%s197 + $0x4] sm:$0xf] %vm886, %v869
      %889 = vst.msk [vmem:[%s197 + $0x8] sm:$0xf] %vm886, %v870
      %890 = vst.msk [vmem:[%s197 + $0xc] sm:$0xf] %vm886, %v871
      %891 = vst.msk [vmem:[%s197 + $0x10] sm:$0xf] %vm886, %v872
      %892 = vst.msk [vmem:[%s197 + $0x14] sm:$0xf] %vm886, %v873
      %893 = vst.msk [vmem:[%s197 + $0x18] sm:$0xf] %vm886, %v874
      %894 = vst.msk [vmem:[%s197 + $0x1c] sm:$0xf] %vm886, %v875
      %895 = vst.msk [vmem:[%s197 + $0x20] sm:$0xf] %vm886, %v876
      %p896 = scmp.lt.s32.totalorder %s15, 1
      %s897 = scalar_select %p896, %s15, 1
      %s898 = smul.addr %s897, 9
      %s899 = smul.addr %s898, 4
      %s900 = scalar_lea.vmem %s4, %s899
      // Predicated region
      $region37: #{encoder_forward.3} parent=35 // pred_check
        %p901 = pneg %p122
      $region38: #{encoder_forward.3} parent=35 // pred_check_branch
        %903 = sbr.rel (%p901) target = $region40
      $region39: #{encoder_forward.3} parent=35 // pred_region
        _
      $region40: #{encoder_forward.3} parent=35 // pred_fallthru
        _
    $region36: #{encoder_forward.3} parent=5 // pred_fallthru
      _
    %p904 = scmp.le.s32.totalorder 2, %s10
    // Predicated region
    $region41: #{encoder_forward.3} parent=5 // pred_check
      %p905 = pneg %p904
    $region42: #{encoder_forward.3} parent=5 // pred_check_branch
      %907 = sbr.rel (%p905) target = $region44
    $region43: #{encoder_forward.3} parent=5 // pred_region
      %s908 = ssub.s32 %s10, 2
      // Predicated region
      $region45: #{encoder_forward.3} parent=43 // pred_check
        %p909 = pneg %p128
      $region46: #{encoder_forward.3} parent=43 // pred_check_branch
        %911 = sbr.rel (%p909) target = $region48
      $region47: #{encoder_forward.3} parent=43 // pred_region
        %p912 = scmp.lt.s32.totalorder %s16, 1
        %s913 = scalar_select %p912, %s16, 1
        %s914 = smul.addr %s913, 9
        %s915 = smul.addr %s914, 4
        %s916 = scalar_lea.vmem %s4, %s915
      $region48: #{encoder_forward.3} parent=43 // pred_fallthru
        _
    $region44: #{encoder_forward.3} parent=5 // pred_fallthru
      _
  $region6: #{encoder_forward.3} parent=0 // loop_footer
    %s14 = sadd.s32 1, %s10
  $region7: #{encoder_forward.3} parent=0 // loop_footer_branch
    %9 = sbr.rel target = $region3
  $region8: #{encoder_forward.3} parent=0 // loop_exit
    _

// kernel: encoder_forward.4
$region0: #{encoder_forward.4}
  #allocation0 [shape = 'u32[]', space=smem, size = 0x4, offset = 0x4, fixed_abs, tag = 'smem constant byte address 0x4 - core index']
  #allocation1 [shape = 'u32[144,128]{1,0:T(1,128)}', space=vmem, size = 0x12000, scoped, tag = 'internal scratch']
  %s0 = inlined_call_operand.vmem [shape: bf16[2,30,64], index: 0, kind: input, shape index: {}]
  %s1 = inlined_call_operand.vmem [shape: bf16[4,64,32], index: 1, kind: input, shape index: {}]
  %s2 = inlined_call_operand.vmem [shape: f32[1,32], index: 2, kind: input, shape index: {}]
  %s3 = inlined_call_operand.vmem [shape: f32[20,1], index: 3, kind: input, shape index: {}]
  %s4 = inlined_call_operand.vmem [shape: bf16[2,20,32], index: 4, kind: output, shape index: {}]
  %s5 = sld [smem:[#allocation0]]
  $region49: #{encoder_forward.4} parent=0
    _
  %s7 = ssub.s32 1, %s5
  %s8 = scalar_select 0, %s7, %s5
  loop: start=0, step=1, limit=4
  $region2: #{encoder_forward.4} parent=0 // loop_pre_header
    _
  $region3: #{encoder_forward.4} parent=0 // loop_header
    %s10 = sphi 0, %s14
    %p11 = scmp.ge.s32.totalorder %s10, 4
    %s20 = sphi 0, %s22
    %s23 = sphi 0, %s20
    %s24 = sphi 0, %s23
    %s40 = sphi 0, %s24
    %s44 = sphi 0, %s44
    %s46 = sphi 0, %s44
    %s47 = sphi 0, %s46
    %s61 = sphi 0, %s47
    %s65 = sphi 0, %s65
    %s67 = sphi 0, %s65
    %s68 = sphi 0, %s67
    %s82 = sphi 0, %s68
    %s86 = sphi 0, %s86
    %s88 = sphi 0, %s86
    %s89 = sphi 0, %s88
    %s103 = sphi 0, %s89
    %s109 = sphi 0, %s111
    %s112 = sphi 0, %s109
    %s113 = sphi 0, %s112
    %s129 = sphi 0, %s113
  $region4: #{encoder_forward.4} parent=0 // loop_header_branch
    %13 = sbr.rel (%p11) target = $region8
  $region5: #{encoder_forward.4} parent=0 // loop_body
    %s15 = ssub.s32 %s10, 1
    %s16 = ssub.s32 %s10, 2
    %s17 = sadd.s32 %s10, 1
    %s18 = ssub.s32 %s10, %s17
    %p19 = scmp.eq.s32.totalorder %s18, 0
    %s21 = sadd.s32 %s20, 1
    %s22 = scalar_select %p19, %s20, %s21
    %p25 = pneg %p19
    %p26 = scmp.eq.s32.totalorder %s10, 1
    %p27 = por %p25, %p26
    %p28 = scmp.ne.s32.totalorder %s20, %s23
    %p29 = scmp.eq.s32.totalorder %s10, 0
    %p30 = por %p28, %p29
    %p31 = scmp.ne.s32.totalorder %s20, %s23
    %p32 = scmp.eq.s32.totalorder %s15, 1
    %p33 = por %p31, %p32
    %p34 = scmp.ne.s32.totalorder %s23, %s24
    %p35 = scmp.eq.s32.totalorder %s15, 0
    %p36 = por %p34, %p35
    %p37 = scmp.ne.s32.totalorder %s23, %s24
    %p38 = scmp.eq.s32.totalorder %s16, 1
    %p39 = por %p37, %p38
    %p41 = scmp.ne.s32.totalorder %s24, %s40
    %p42 = scmp.eq.s32.totalorder %s16, 0
    %p43 = por %p41, %p42
    %s45 = sadd.s32 %s44, 1
    %p48 = scmp.eq.s32.totalorder %s10, 1
    %p49 = scmp.ne.s32.totalorder %s44, %s46
    %p50 = scmp.eq.s32.totalorder %s10, 0
    %p51 = por %p49, %p50
    %p52 = scmp.ne.s32.totalorder %s44, %s46
    %p53 = scmp.eq.s32.totalorder %s15, 1
    %p54 = por %p52, %p53
    %p55 = scmp.ne.s32.totalorder %s46, %s47
    %p56 = scmp.eq.s32.totalorder %s15, 0
    %p57 = por %p55, %p56
    %p58 = scmp.ne.s32.totalorder %s46, %s47
    %p59 = scmp.eq.s32.totalorder %s16, 1
    %p60 = por %p58, %p59
    %p62 = scmp.ne.s32.totalorder %s47, %s61
    %p63 = scmp.eq.s32.totalorder %s16, 0
    %p64 = por %p62, %p63
    %s66 = sadd.s32 %s65, 1
    %p69 = scmp.eq.s32.totalorder %s10, 1
    %p70 = scmp.ne.s32.totalorder %s65, %s67
    %p71 = scmp.eq.s32.totalorder %s10, 0
    %p72 = por %p70, %p71
    %p73 = scmp.ne.s32.totalorder %s65, %s67
    %p74 = scmp.eq.s32.totalorder %s15, 1
    %p75 = por %p73, %p74
    %p76 = scmp.ne.s32.totalorder %s67, %s68
    %p77 = scmp.eq.s32.totalorder %s15, 0
    %p78 = por %p76, %p77
    %p79 = scmp.ne.s32.totalorder %s67, %s68
    %p80 = scmp.eq.s32.totalorder %s16, 1
    %p81 = por %p79, %p80
    %p83 = scmp.ne.s32.totalorder %s68, %s82
    %p84 = scmp.eq.s32.totalorder %s16, 0
    %p85 = por %p83, %p84
    %s87 = sadd.s32 %s86, 1
    %p90 = scmp.eq.s32.totalorder %s10, 1
    %p91 = scmp.ne.s32.totalorder %s86, %s88
    %p92 = scmp.eq.s32.totalorder %s10, 0
    %p93 = por %p91, %p92
    %p94 = scmp.ne.s32.totalorder %s86, %s88
    %p95 = scmp.eq.s32.totalorder %s15, 1
    %p96 = por %p94, %p95
    %p97 = scmp.ne.s32.totalorder %s88, %s89
    %p98 = scmp.eq.s32.totalorder %s15, 0
    %p99 = por %p97, %p98
    %p100 = scmp.ne.s32.totalorder %s88, %s89
    %p101 = scmp.eq.s32.totalorder %s16, 1
    %p102 = por %p100, %p101
    %p104 = scmp.ne.s32.totalorder %s89, %s103
    %p105 = scmp.eq.s32.totalorder %s16, 0
    %p106 = por %p104, %p105
    %s107 = ssub.s32 %s10, %s17
    %p108 = scmp.eq.s32.totalorder %s107, 0
    %s110 = sadd.s32 %s109, 1
    %s111 = scalar_select %p108, %s109, %s110
    %p114 = pneg %p108
    %p115 = scmp.eq.s32.totalorder %s10, 1
    %p116 = por %p114, %p115
    %p117 = scmp.ne.s32.totalorder %s109, %s112
    %p118 = scmp.eq.s32.totalorder %s10, 0
    %p119 = por %p117, %p118
    %p120 = scmp.ne.s32.totalorder %s109, %s112
    %p121 = scmp.eq.s32.totalorder %s15, 1
    %p122 = por %p120, %p121
    %p123 = scmp.ne.s32.totalorder %s112, %s113
    %p124 = scmp.eq.s32.totalorder %s15, 0
    %p125 = por %p123, %p124
    %p126 = scmp.ne.s32.totalorder %s112, %s113
    %p127 = scmp.eq.s32.totalorder %s16, 1
    %p128 = por %p126, %p127
    %p130 = scmp.ne.s32.totalorder %s113, %s129
    %p131 = scmp.eq.s32.totalorder %s16, 0
    %p132 = por %p130, %p131
    %p133 = scmp.le.s32.totalorder 1, %s10
    %p134 = scmp.lt.s32.totalorder %s10, 3
    %p135 = pnand %p133, %p134
    %p136 = pneg %p135
    // Predicated region
    $region9: #{encoder_forward.4} parent=5 // pred_check
      _
    $region10: #{encoder_forward.4} parent=5 // pred_check_branch
      %138 = sbr.rel (%p135) target = $region12
    $region11: #{encoder_forward.4} parent=5 // pred_region
      %s139 = ssub.s32 %s10, 1
      // Predicated region
      $region13: #{encoder_forward.4} parent=11 // pred_check
        %p140 = pneg %p57
      $region14: #{encoder_forward.4} parent=11 // pred_check_branch
        %142 = sbr.rel (%p140) target = $region16
      $region15: #{encoder_forward.4} parent=11 // pred_region
        _
      $region16: #{encoder_forward.4} parent=11 // pred_fallthru
        _
      // Predicated region
      $region17: #{encoder_forward.4} parent=11 // pred_check
        %p143 = pneg %p78
      $region18: #{encoder_forward.4} parent=11 // pred_check_branch
        %145 = sbr.rel (%p143) target = $region20
      $region19: #{encoder_forward.4} parent=11 // pred_region
        _
      $region20: #{encoder_forward.4} parent=11 // pred_fallthru
        _
      // Predicated region
      $region21: #{encoder_forward.4} parent=11 // pred_check
        %p146 = pneg %p99
      $region22: #{encoder_forward.4} parent=11 // pred_check_branch
        %148 = sbr.rel (%p146) target = $region24
      $region23: #{encoder_forward.4} parent=11 // pred_region
        _
      $region24: #{encoder_forward.4} parent=11 // pred_fallthru
        _
    $region12: #{encoder_forward.4} parent=5 // pred_fallthru
      _
    %p149 = scmp.lt.s32.totalorder %s10, 2
    // Predicated region
    $region25: #{encoder_forward.4} parent=5 // pred_check
      %p150 = pneg %p149
    $region26: #{encoder_forward.4} parent=5 // pred_check_branch
      %152 = sbr.rel (%p150) target = $region28
    $region27: #{encoder_forward.4} parent=5 // pred_region
      // Predicated region
      $region29: #{encoder_forward.4} parent=27 // pred_check
        %p153 = pneg %p30
      $region30: #{encoder_forward.4} parent=27 // pred_check_branch
        %155 = sbr.rel (%p153) target = $region32
      $region31: #{encoder_forward.4} parent=27 // pred_region
        %p156 = scmp.lt.s32.totalorder %s10, 1
        %s157 = scalar_select %p156, %s10, 1
        %s158 = smul.addr %s157, 4
        %s159 = smul.addr %s158, 4
        %s160 = scalar_lea.vmem %s0, %s159
      $region32: #{encoder_forward.4} parent=27 // pred_fallthru
        _
    $region28: #{encoder_forward.4} parent=5 // pred_fallthru
      _
    %p161 = scmp.le.s32.totalorder 1, %s10
    %p162 = scmp.lt.s32.totalorder %s10, 3
    %p163 = pnand %p161, %p162
    %p164 = pneg %p163
    // Predicated region
    $region33: #{encoder_forward.4} parent=5 // pred_check
      _
    $region34: #{encoder_forward.4} parent=5 // pred_check_branch
      %166 = sbr.rel (%p163) target = $region36
    $region35: #{encoder_forward.4} parent=5 // pred_region
      %s167 = ssub.s32 %s10, 1
      %p168 = scmp.lt.s32.totalorder %s15, 1
      %s169 = scalar_select %p168, %s15, 1
      %s170 = smul.addr %s169, 4
      %s171 = smul.addr %s170, 4
      %s172 = scalar_lea.vmem %s0, %s171
      %p173 = pneg %p36
      %p174 = pneg %p33
      %p175 = pneg %p57
      %p176 = pneg %p54
      %p177 = pneg %p78
      %p178 = pneg %p75
      %p179 = pneg %p99
      %p180 = pneg %p96
      %p181 = pneg %p125
      %p182 = pneg %p122
      %p183 = scmp.lt.s32.totalorder %s15, 1
      %s184 = scalar_select %p183, %s15, 1
      %s185 = smul.addr %s184, 3
      %s186 = smul.addr %s185, 4
      %s187 = scalar_lea.vmem %s4, %s186
      %p188 = scmp.lt.s32.totalorder %s15, 1
      %s189 = scalar_select %p188, %s15, 1
      %s190 = smul.addr %s189, 4
      %s191 = smul.addr %s190, 4
      %s192 = scalar_lea.vmem %s0, %s191
      %p193 = scmp.lt.s32.totalorder %s15, 1
      %s194 = scalar_select %p193, %s15, 1
      %s195 = smul.addr %s194, 3
      %s196 = smul.addr %s195, 4
      %s197 = scalar_lea.vmem %s4, %s196
      %v199 = vld [vmem:[%s192] sm:$0xf]
      %v200 = vld [vmem:[%s192 + $0x4] sm:$0xf]
      %v201 = vld [vmem:[%s192 + $0x8] sm:$0x3]
      %v202 = vld [vmem:[%s1] sm:$0xf]
      %v203 = vld [vmem:[%s1 + $0x4] sm:$0xf]
      %v204 = vld [vmem:[%s1 + $0x8] sm:$0xf]
      %v205 = vld [vmem:[%s1 + $0xc] sm:$0xf]
      %v206 = vld [vmem:[%s1 + $0x10] sm:$0xf]
      %v207 = vld [vmem:[%s1 + $0x14] sm:$0xf]
      %v208 = vld [vmem:[%s1 + $0x18] sm:$0xf]
      %v209 = vld [vmem:[%s1 + $0x1c] sm:$0xf]
      %v210 = vld [vmem:[%s192 + $0x8] sm:$0x7]
      %s211 = scalar_lea.vmem %s1, 32
      %v212 = vld [vmem:[%s211] sm:$0xf]
      %v213 = vld [vmem:[%s211 + $0x4] sm:$0xf]
      %v214 = vld [vmem:[%s211 + $0x8] sm:$0xf]
      %v215 = vld [vmem:[%s211 + $0xc] sm:$0xf]
      %v216 = vld [vmem:[%s211 + $0x10] sm:$0xf]
      %v217 = vld [vmem:[%s211 + $0x14] sm:$0xf]
      %v218 = vld [vmem:[%s211 + $0x18] sm:$0xf]
      %v219 = vld [vmem:[%s211 + $0x1c] sm:$0xf]
      %v223 = vunpack.c.l.b16 %v199
      %v224 = vunpack.c.l.b16 %v200
      %v225 = vunpack.c.l.b16 %v210
      %v226 = vpack.c.b16 %v224, %v223
      %v227 = vpack.c.b16 %v225, %v225
      %vm228 = vsmask.f32 7424
      %v230 = vshrl.u32 %v226, 16
      %v232 = vshll.u32 %v226, 16
      %v234 = vrot.slane %v232, 1
      %v235 = vor.u32 %v230, %v234
      %v237 = vshll.u32 %v227, 16
      %v239 = vrot.slane %v237, 1
      %v240 = vsel %vm228, %v235, %v239
      %v241 = vshrl.u32 %v227, 16
      %v243 = vor.u32 %v241, %v239
      %v252 = vunpack.c.l.b16 %v212
      %v253 = vunpack.c.l.b16 %v213
      %v254 = vunpack.c.l.b16 %v214
      %v255 = vunpack.c.l.b16 %v215
      %v256 = vunpack.c.l.b16 %v216
      %v257 = vunpack.c.l.b16 %v217
      %v258 = vunpack.c.l.b16 %v218
      %v259 = vunpack.c.l.b16 %v219
      %v260 = vpack.c.b16 %v253, %v252
      %v261 = vpack.c.b16 %v255, %v254
      %v262 = vpack.c.b16 %v257, %v256
      %v263 = vpack.c.b16 %v259, %v258
      %vm268 = vcmask 523264
      %v270 = vsel %vm268, %v240, 0
      %v273 = vsel %vm268, %v243, 0
      %275 = vmatprep.subr.bf16.mxu0 0
      %276 = vmatpush1.bf16.msra.mxu0 %v260
      %277 = vmatprep.subr.bf16.mxu0 0
      %278 = vmatpush1.bf16.msra.mxu0 %v261
      %279 = vmatprep.subr.bf16.mxu0 0
      %280 = vmatpush1.bf16.msra.mxu0 %v262
      %281 = vmatprep.subr.bf16.mxu0 0
      %282 = vmatpush1.bf16.msra.mxu0 %v263
      %283 = vmatprep.subr.bf16.mxu0 0
      %284 = vmatpush1.bf16.msra.mxu0 0
      %285 = vmatprep.subr.bf16.mxu0 0
      %286 = vmatpush1.bf16.msra.mxu0 0
      %287 = vmatprep.subr.bf16.mxu0 0
      %288 = vmatpush1.bf16.msra.mxu0 0
      %289 = vmatprep.subr.bf16.mxu0 0
      %290 = vmatpush1.bf16.msra.mxu0 0
      %291 = vmatprep.subr.bf16.mxu0 0
      %292 = vmatpush1.bf16.msra.mxu0 0
      %293 = vmatprep.subr.bf16.mxu0 0
      %294 = vmatpush1.bf16.msra.mxu0 0
      %295 = vmatprep.subr.bf16.mxu0 0
      %296 = vmatpush1.bf16.msra.mxu0 0
      %297 = vmatprep.subr.bf16.mxu0 0
      %298 = vmatpush1.bf16.msra.mxu0 0
      %299 = vmatprep.subr.bf16.mxu0 0
      %300 = vmatpush1.bf16.msra.mxu0 0
      %301 = vmatprep.subr.bf16.mxu0 0
      %302 = vmatpush1.bf16.msra.mxu0 0
      %303 = vmatprep.subr.bf16.mxu0 0
      %304 = vmatpush1.bf16.msra.mxu0 0
      %305 = vmatprep.subr.bf16.mxu0 0
      %306 = vmatpush1.bf16.msra.mxu0 0
      %307 = vmatprep.mubr.bf16.mxu0 0
      %308 = vmatmul.mubr.bf16.gmra.mrb[0].mxu0 %v270
      %v309 = vpop.f32.mrb[0].mxu0
      %v310 = vadd.f32 0.0, %v309
      %v311 = vpop.f32.mrb[0].mxu0
      %v312 = vpop.f32.mrb[0].mxu0
      %v313 = vadd.f32 0.0, %v312
      %v314 = vpop.f32.mrb[0].mxu0
      %315 = vmatprep.mubr.bf16.mxu0 0
      %316 = vmatmul.mubr.bf16.gmra.mrb[0].mxu0 %v273
      %v317 = vpop.f32.mrb[0].mxu0
      %v318 = vadd.f32 0.0, %v317
      %v319 = vpop.f32.mrb[0].mxu0
      %v320 = vpop.f32.mrb[0].mxu0
      %v321 = vpop.f32.mrb[0].mxu0
      %322 = vdwg.mxu0
      %v324 = vunpack.c.l.b16 %v201
      %v325 = vpack.c.b16 %v324, %v324
      %v334 = vunpack.c.l.b16 %v202
      %v335 = vunpack.c.l.b16 %v203
      %v336 = vunpack.c.l.b16 %v204
      %v337 = vunpack.c.l.b16 %v205
      %v338 = vunpack.c.l.b16 %v206
      %v339 = vunpack.c.l.b16 %v207
      %v340 = vunpack.c.l.b16 %v208
      %v341 = vunpack.c.l.b16 %v209
      %v342 = vpack.c.b16 %v335, %v334
      %v343 = vpack.c.b16 %v337, %v336
      %v344 = vpack.c.b16 %v339, %v338
      %v345 = vpack.c.b16 %v341, %v340
      %v350 = vsel %vm268, %v226, 0
      %v353 = vsel %vm268, %v325, 0
      %355 = vmatprep.subr.bf16.mxu0 0
      %356 = vmatpush1.bf16.msra.mxu0 %v342
      %357 = vmatprep.subr.bf16.mxu0 0
      %358 = vmatpush1.bf16.msra.mxu0 %v343
      %359 = vmatprep.subr.bf16.mxu0 0
      %360 = vmatpush1.bf16.msra.mxu0 %v344
      %361 = vmatprep.subr.bf16.mxu0 0
      %362 = vmatpush1.bf16.msra.mxu0 %v345
      %363 = vmatprep.subr.bf16.mxu0 0
      %364 = vmatpush1.bf16.msra.mxu0 0
      %365 = vmatprep.subr.bf16.mxu0 0
      %366 = vmatpush1.bf16.msra.mxu0 0
      %367 = vmatprep.subr.bf16.mxu0 0
      %368 = vmatpush1.bf16.msra.mxu0 0
      %369 = vmatprep.subr.bf16.mxu0 0
      %370 = vmatpush1.bf16.msra.mxu0 0
      %371 = vmatprep.subr.bf16.mxu0 0
      %372 = vmatpush1.bf16.msra.mxu0 0
      %373 = vmatprep.subr.bf16.mxu0 0
      %374 = vmatpush1.bf16.msra.mxu0 0
      %375 = vmatprep.subr.bf16.mxu0 0
      %376 = vmatpush1.bf16.msra.mxu0 0
      %377 = vmatprep.subr.bf16.mxu0 0
      %378 = vmatpush1.bf16.msra.mxu0 0
      %379 = vmatprep.subr.bf16.mxu0 0
      %380 = vmatpush1.bf16.msra.mxu0 0
      %381 = vmatprep.subr.bf16.mxu0 0
      %382 = vmatpush1.bf16.msra.mxu0 0
      %383 = vmatprep.subr.bf16.mxu0 0
      %384 = vmatpush1.bf16.msra.mxu0 0
      %385 = vmatprep.subr.bf16.mxu0 0
      %386 = vmatpush1.bf16.msra.mxu0 0
      %387 = vmatprep.mubr.bf16.mxu0 0
      %388 = vmatmul.mubr.bf16.gmra.mrb[0].mxu0 %v350
      %v389 = vpop.f32.mrb[0].mxu0
      %v390 = vadd.f32 %v310, %v389
      %v391 = vpop.f32.mrb[0].mxu0
      %v392 = vpop.f32.mrb[0].mxu0
      %v393 = vadd.f32 %v313, %v392
      %v394 = vpop.f32.mrb[0].mxu0
      %395 = vmatprep.mubr.bf16.mxu0 0
      %396 = vmatmul.mubr.bf16.gmra.mrb[0].mxu0 %v353
      %v397 = vpop.f32.mrb[0].mxu0
      %v398 = vadd.f32 %v318, %v397
      %v399 = vpop.f32.mrb[0].mxu0
      %v400 = vpop.f32.mrb[0].mxu0
      %v401 = vpop.f32.mrb[0].mxu0
      %402 = vdwg.mxu0
      %v403 = vld [vmem:[%s192] sm:$0xc]
      %v404 = vld [vmem:[%s192 + $0x4] sm:$0xf]
      %v405 = vld [vmem:[%s192 + $0x8] sm:$0xf]
      %v406 = vld [vmem:[%s192 + $0xc] sm:$0x1]
      %s407 = scalar_lea.vmem %s1, 64
      %v408 = vld [vmem:[%s407] sm:$0xf]
      %v409 = vld [vmem:[%s407 + $0x4] sm:$0xf]
      %v410 = vld [vmem:[%s407 + $0x8] sm:$0xf]
      %v411 = vld [vmem:[%s407 + $0xc] sm:$0xf]
      %v412 = vld [vmem:[%s407 + $0x10] sm:$0xf]
      %v413 = vld [vmem:[%s407 + $0x14] sm:$0xf]
      %v414 = vld [vmem:[%s407 + $0x18] sm:$0xf]
      %v415 = vld [vmem:[%s407 + $0x1c] sm:$0xf]
      %v420 = vunpack.c.l.b16 %v403
      %v421 = vunpack.c.l.b16 %v404
      %v422 = vunpack.c.l.b16 %v405
      %v423 = vunpack.c.l.b16 %v406
      %v424 = vpack.c.b16 %v421, %v420
      %v425 = vpack.c.b16 %v423, %v422
      %vm426 = vsmask.f32 5376
      %v428 = vshrl.u32 %v424, 16
      %v430 = vrot.slane %v428, 2
      %v431 = vshll.u32 %v424, 16
      %v433 = vrot.slane %v431, 3
      %v434 = vor.u32 %v430, %v433
      %v436 = vshrl.u32 %v425, 16
      %v438 = vrot.slane %v436, 2
      %v439 = vshll.u32 %v425, 16
      %v441 = vrot.slane %v439, 3
      %v442 = vor.u32 %v438, %v441
      %v443 = vsel %vm426, %v434, %v442
      %v452 = vunpack.c.l.b16 %v408
      %v453 = vunpack.c.l.b16 %v409
      %v454 = vunpack.c.l.b16 %v410
      %v455 = vunpack.c.l.b16 %v411
      %v456 = vunpack.c.l.b16 %v412
      %v457 = vunpack.c.l.b16 %v413
      %v458 = vunpack.c.l.b16 %v414
      %v459 = vunpack.c.l.b16 %v415
      %v460 = vpack.c.b16 %v453, %v452
      %v461 = vpack.c.b16 %v455, %v454
      %v462 = vpack.c.b16 %v457, %v456
      %v463 = vpack.c.b16 %v459, %v458
      %v469 = vsel %vm268, %v443, 0
      %v472 = vsel %vm268, %v442, 0
      %474 = vmatprep.subr.bf16.mxu0 0
      %475 = vmatpush1.bf16.msra.mxu0 %v460
      %476 = vmatprep.subr.bf16.mxu0 0
      %477 = vmatpush1.bf16.msra.mxu0 %v461
      %478 = vmatprep.subr.bf16.mxu0 0
      %479 = vmatpush1.bf16.msra.mxu0 %v462
      %480 = vmatprep.subr.bf16.mxu0 0
      %481 = vmatpush1.bf16.msra.mxu0 %v463
      %482 = vmatprep.subr.bf16.mxu0 0
      %483 = vmatpush1.bf16.msra.mxu0 0
      %484 = vmatprep.subr.bf16.mxu0 0
      %485 = vmatpush1.bf16.msra.mxu0 0
      %486 = vmatprep.subr.bf16.mxu0 0
      %487 = vmatpush1.bf16.msra.mxu0 0
      %488 = vmatprep.subr.bf16.mxu0 0
      %489 = vmatpush1.bf16.msra.mxu0 0
      %490 = vmatprep.subr.bf16.mxu0 0
      %491 = vmatpush1.bf16.msra.mxu0 0
      %492 = vmatprep.subr.bf16.mxu0 0
      %493 = vmatpush1.bf16.msra.mxu0 0
      %494 = vmatprep.subr.bf16.mxu0 0
      %495 = vmatpush1.bf16.msra.mxu0 0
      %496 = vmatprep.subr.bf16.mxu0 0
      %497 = vmatpush1.bf16.msra.mxu0 0
      %498 = vmatprep.subr.bf16.mxu0 0
      %499 = vmatpush1.bf16.msra.mxu0 0
      %500 = vmatprep.subr.bf16.mxu0 0
      %501 = vmatpush1.bf16.msra.mxu0 0
      %502 = vmatprep.subr.bf16.mxu0 0
      %503 = vmatpush1.bf16.msra.mxu0 0
      %504 = vmatprep.subr.bf16.mxu0 0
      %505 = vmatpush1.bf16.msra.mxu0 0
      %506 = vmatprep.mubr.bf16.mxu0 0
      %507 = vmatmul.mubr.bf16.gmra.mrb[0].mxu0 %v469
      %v508 = vpop.f32.mrb[0].mxu0
      %v509 = vadd.f32 0.0, %v508
      %v510 = vpop.f32.mrb[0].mxu0
      %v511 = vpop.f32.mrb[0].mxu0
      %v512 = vadd.f32 0.0, %v511
      %v513 = vpop.f32.mrb[0].mxu0
      %514 = vmatprep.mubr.bf16.mxu0 0
      %515 = vmatmul.mubr.bf16.gmra.mrb[0].mxu0 %v472
      %v516 = vpop.f32.mrb[0].mxu0
      %v517 = vadd.f32 0.0, %v516
      %v518 = vpop.f32.mrb[0].mxu0
      %v519 = vpop.f32.mrb[0].mxu0
      %v520 = vpop.f32.mrb[0].mxu0
      %521 = vdwg.mxu0
      %v522 = vadd.f32 %v390, %v509
      %v523 = vadd.f32 %v393, %v512
      %v524 = vadd.f32 %v398, %v517
      %v525 = vld [vmem:[%s192] sm:$0x8]
      %s526 = scalar_lea.vmem %s1, 96
      %v527 = vld [vmem:[%s526] sm:$0xf]
      %v528 = vld [vmem:[%s526 + $0x4] sm:$0xf]
      %v529 = vld [vmem:[%s526 + $0x8] sm:$0xf]
      %v530 = vld [vmem:[%s526 + $0xc] sm:$0xf]
      %v531 = vld [vmem:[%s526 + $0x10] sm:$0xf]
      %v532 = vld [vmem:[%s526 + $0x14] sm:$0xf]
      %v533 = vld [vmem:[%s526 + $0x18] sm:$0xf]
      %v534 = vld [vmem:[%s526 + $0x1c] sm:$0xf]
      %v536 = vunpack.c.l.b16 %v525
      %v537 = vpack.c.b16 %v421, %v536
      %vm538 = vcmask 1044480
      %v539 = vrot.slane %v537, 3
      %v540 = vrot.slane %v425, 3
      %v541 = vsel %vm538, %v539, %v540
      %v550 = vunpack.c.l.b16 %v527
      %v551 = vunpack.c.l.b16 %v528
      %v552 = vunpack.c.l.b16 %v529
      %v553 = vunpack.c.l.b16 %v530
      %v554 = vunpack.c.l.b16 %v531
      %v555 = vunpack.c.l.b16 %v532
      %v556 = vunpack.c.l.b16 %v533
      %v557 = vunpack.c.l.b16 %v534
      %v558 = vpack.c.b16 %v551, %v550
      %v559 = vpack.c.b16 %v553, %v552
      %v560 = vpack.c.b16 %v555, %v554
      %v561 = vpack.c.b16 %v557, %v556
      %v567 = vsel %vm268, %v541, 0
      %v570 = vsel %vm268, %v540, 0
      %572 = vmatprep.subr.bf16.mxu0 0
      %573 = vmatpush1.bf16.msra.mxu0 %v558
      %574 = vmatprep.subr.bf16.mxu0 0
      %575 = vmatpush1.bf16.msra.mxu0 %v559
      %576 = vmatprep.subr.bf16.mxu0 0
      %577 = vmatpush1.bf16.msra.mxu0 %v560
      %578 = vmatprep.subr.bf16.mxu0 0
      %579 = vmatpush1.bf16.msra.mxu0 %v561
      %580 = vmatprep.subr.bf16.mxu0 0
      %581 = vmatpush1.bf16.msra.mxu0 0
      %582 = vmatprep.subr.bf16.mxu0 0
      %583 = vmatpush1.bf16.msra.mxu0 0
      %584 = vmatprep.subr.bf16.mxu0 0
      %585 = vmatpush1.bf16.msra.mxu0 0
      %586 = vmatprep.subr.bf16.mxu0 0
      %587 = vmatpush1.bf16.msra.mxu0 0
      %588 = vmatprep.subr.bf16.mxu0 0
      %589 = vmatpush1.bf16.msra.mxu0 0
      %590 = vmatprep.subr.bf16.mxu0 0
      %591 = vmatpush1.bf16.msra.mxu0 0
      %592 = vmatprep.subr.bf16.mxu0 0
      %593 = vmatpush1.bf16.msra.mxu0 0
      %594 = vmatprep.subr.bf16.mxu0 0
      %595 = vmatpush1.bf16.msra.mxu0 0
      %596 = vmatprep.subr.bf16.mxu0 0
      %597 = vmatpush1.bf16.msra.mxu0 0
      %598 = vmatprep.subr.bf16.mxu0 0
      %599 = vmatpush1.bf16.msra.mxu0 0
      %600 = vmatprep.subr.bf16.mxu0 0
      %601 = vmatpush1.bf16.msra.mxu0 0
      %602 = vmatprep.subr.bf16.mxu0 0
      %603 = vmatpush1.bf16.msra.mxu0 0
      %604 = vmatprep.mubr.bf16.mxu0 0
      %605 = vmatmul.mubr.bf16.gmra.mrb[0].mxu0 %v567
      %v606 = vpop.f32.mrb[0].mxu0
      %v607 = vadd.f32 0.0, %v606
      %v608 = vpop.f32.mrb[0].mxu0
      %v609 = vpop.f32.mrb[0].mxu0
      %v610 = vadd.f32 0.0, %v609
      %v611 = vpop.f32.mrb[0].mxu0
      %612 = vmatprep.mubr.bf16.mxu0 0
      %613 = vmatmul.mubr.bf16.gmra.mrb[0].mxu0 %v570
      %v614 = vpop.f32.mrb[0].mxu0
      %v615 = vadd.f32 0.0, %v614
      %v616 = vpop.f32.mrb[0].mxu0
      %v617 = vpop.f32.mrb[0].mxu0
      %v618 = vpop.f32.mrb[0].mxu0
      %619 = vdwg.mxu0
      %v620 = vadd.f32 %v522, %v607
      %v621 = vadd.f32 %v523, %v610
      %v622 = vadd.f32 %v524, %v615
      %v623 = vld [vmem:[%s2] sm:$0x1]
      %v625 = vlaneseq
      %v626 = vshrl.u32 %v625, 7
      %v627 = vsub.s32 0, %v626
      %v628 = vrot.slane %v623, %v627
      %v630 = vadd.f32 %v620, %v628
      %v631 = vadd.f32 %v621, %v628
      %v632 = vadd.f32 %v622, %v628
      %v633 = vmax.f32 %v630, 0.0
      %v634 = vmax.f32 %v631, 0.0
      %v635 = vmax.f32 %v632, 0.0
      %v636 = vld [vmem:[%s3] sm:$0xff]
      %v637 = vld [vmem:[%s3 + $0x8] sm:$0xff]
      %v638 = vld [vmem:[%s3 + $0x10] sm:$0xf]
      %640 = vset.pattern.permute.xlu0 0
      %641 = vperm.xlu0 %640, %v636
      %v642 = vpop.permute.xlu0 %641
      %645 = vset.pattern.permute.xlu0 0
      %646 = vperm.xlu0 %645, %v637
      %v647 = vpop.permute.xlu0 %646
      %650 = vset.pattern.permute.xlu0 0
      %651 = vperm.xlu0 %650, %v638
      %v652 = vpop.permute.xlu0 %651
      %v654 = vmul.f32 %v633, %v642
      %v655 = vmul.f32 %v634, %v647
      %v656 = vmul.f32 %v635, %v652
      %v657 = vpack.c.bf16 %v655, %v654
      %v658 = vpack.c.bf16 %v656, %v656
      %v661 = vunpack.c.l.b16 %v657
      %v662 = vunpack.c.h.b16 %v657
      %v663 = vunpack.c.l.b16 %v658
      %v664 = vpack.c.b16 %v661, %v661
      %v665 = vpack.c.b16 %v662, %v662
      %v666 = vpack.c.b16 %v663, %v663
      %vm670 = vcmask 257024
      %671 = vst.msk [vmem:[%s197] sm:$0xf] %vm670, %v664
      %672 = vst.msk [vmem:[%s197 + $0x4] sm:$0xf] %vm670, %v665
      %vm673 = vcmask 254976
      %674 = vst.msk [vmem:[%s197 + $0x8] sm:$0x3] %vm673, %v666
      %p675 = scmp.lt.s32.totalorder %s15, 1
      %s676 = scalar_select %p675, %s15, 1
      %s677 = smul.addr %s676, 3
      %s678 = smul.addr %s677, 4
      %s679 = scalar_lea.vmem %s4, %s678
      // Predicated region
      $region37: #{encoder_forward.4} parent=35 // pred_check
        %p680 = pneg %p122
      $region38: #{encoder_forward.4} parent=35 // pred_check_branch
        %682 = sbr.rel (%p680) target = $region40
      $region39: #{encoder_forward.4} parent=35 // pred_region
        _
      $region40: #{encoder_forward.4} parent=35 // pred_fallthru
        _
    $region36: #{encoder_forward.4} parent=5 // pred_fallthru
      _
    %p683 = scmp.le.s32.totalorder 2, %s10
    // Predicated region
    $region41: #{encoder_forward.4} parent=5 // pred_check
      %p684 = pneg %p683
    $region42: #{encoder_forward.4} parent=5 // pred_check_branch
      %686 = sbr.rel (%p684) target = $region44
    $region43: #{encoder_forward.4} parent=5 // pred_region
      %s687 = ssub.s32 %s10, 2
      // Predicated region
      $region45: #{encoder_forward.4} parent=43 // pred_check
        %p688 = pneg %p128
      $region46: #{encoder_forward.4} parent=43 // pred_check_branch
        %690 = sbr.rel (%p688) target = $region48
      $region47: #{encoder_forward.4} parent=43 // pred_region
        %p691 = scmp.lt.s32.totalorder %s16, 1
        %s692 = scalar_select %p691, %s16, 1
        %s693 = smul.addr %s692, 3
        %s694 = smul.addr %s693, 4
        %s695 = scalar_lea.vmem %s4, %s694
      $region48: #{encoder_forward.4} parent=43 // pred_fallthru
        _
    $region44: #{encoder_forward.4} parent=5 // pred_fallthru
      _
  $region6: #{encoder_forward.4} parent=0 // loop_footer
    %s14 = sadd.s32 1, %s10
  $region7: #{encoder_forward.4} parent=0 // loop_footer_branch
    %9 = sbr.rel target = $region3
  $region8: #{encoder_forward.4} parent=0 // loop_exit
    _

// kernel: encoder_forward.5
$region0: #{encoder_forward.5}
  #allocation0 [shape = 'u32[]', space=smem, size = 0x4, offset = 0x4, fixed_abs, tag = 'smem constant byte address 0x4 - core index']
  #allocation1 [shape = 'u32[144,128]{1,0:T(1,128)}', space=vmem, size = 0x12000, scoped, tag = 'internal scratch']
  #allocation2 [shape = 'f32[42,32]{1,0:T(8,128)}', space=vmem, size = 0x6000, scoped, tag = 'scratch operand']
  #allocation3 [shape = 'bf16[42,32]{1,0:T(8,128)(2,1)}', space=vmem, size = 0x3000, scoped, tag = 'scratch operand']
  %s0 = inlined_call_operand.vmem [shape: bf16[2,42,32], index: 0, kind: input, shape index: {}]
  %s1 = inlined_call_operand.vmem [shape: bf16[9,32,32], index: 1, kind: input, shape index: {}]
  %s2 = inlined_call_operand.vmem [shape: f32[1,32], index: 2, kind: input, shape index: {}]
  %s3 = inlined_call_operand.vmem [shape: f32[24,1], index: 3, kind: input, shape index: {}]
  %s4 = inlined_call_operand.vmem [shape: bf16[18,32,8], index: 4, kind: input, shape index: {}]
  %s5 = inlined_call_operand.vmem [shape: f32[2,1,8], index: 5, kind: input, shape index: {}]
  %s6 = inlined_call_operand.vmem [shape: bf16[2,8,32], index: 6, kind: input, shape index: {}]
  %s7 = inlined_call_operand.vmem [shape: f32[2,1,32], index: 7, kind: input, shape index: {}]
  %s8 = inlined_call_operand.vmem [shape: f32[2,24,32], index: 8, kind: output, shape index: {}]
  %s9 = sld [smem:[#allocation0]]
  $region65: #{encoder_forward.5} parent=0
    _
  %s11 = ssub.s32 1, %s9
  %s12 = scalar_select 0, %s11, %s9
  loop: start=0, step=1, limit=4
  $region2: #{encoder_forward.5} parent=0 // loop_pre_header
    _
  $region3: #{encoder_forward.5} parent=0 // loop_header
    %s14 = sphi 0, %s18
    %p15 = scmp.ge.s32.totalorder %s14, 4
    %s24 = sphi 0, %s26
    %s27 = sphi 0, %s24
    %s28 = sphi 0, %s27
    %s44 = sphi 0, %s28
    %s48 = sphi 0, %s48
    %s50 = sphi 0, %s48
    %s51 = sphi 0, %s50
    %s65 = sphi 0, %s51
    %s69 = sphi 0, %s69
    %s71 = sphi 0, %s69
    %s72 = sphi 0, %s71
    %s86 = sphi 0, %s72
    %s90 = sphi 0, %s90
    %s92 = sphi 0, %s90
    %s93 = sphi 0, %s92
    %s107 = sphi 0, %s93
    %s111 = sphi 0, %s111
    %s113 = sphi 0, %s111
    %s114 = sphi 0, %s113
    %s128 = sphi 0, %s114
    %s132 = sphi 0, %s132
    %s134 = sphi 0, %s132
    %s135 = sphi 0, %s134
    %s149 = sphi 0, %s135
    %s153 = sphi 0, %s153
    %s155 = sphi 0, %s153
    %s156 = sphi 0, %s155
    %s170 = sphi 0, %s156
    %s174 = sphi 0, %s174
    %s176 = sphi 0, %s174
    %s177 = sphi 0, %s176
    %s191 = sphi 0, %s177
    %s197 = sphi 0, %s199
    %s200 = sphi 0, %s197
    %s201 = sphi 0, %s200
    %s217 = sphi 0, %s201
  $region4: #{encoder_forward.5} parent=0 // loop_header_branch
    %17 = sbr.rel (%p15) target = $region8
  $region5: #{encoder_forward.5} parent=0 // loop_body
    %s19 = ssub.s32 %s14, 1
    %s20 = ssub.s32 %s14, 2
    %s21 = sadd.s32 %s14, 1
    %s22 = ssub.s32 %s14, %s21
    %p23 = scmp.eq.s32.totalorder %s22, 0
    %s25 = sadd.s32 %s24, 1
    %s26 = scalar_select %p23, %s24, %s25
    %p29 = pneg %p23
    %p30 = scmp.eq.s32.totalorder %s14, 1
    %p31 = por %p29, %p30
    %p32 = scmp.ne.s32.totalorder %s24, %s27
    %p33 = scmp.eq.s32.totalorder %s14, 0
    %p34 = por %p32, %p33
    %p35 = scmp.ne.s32.totalorder %s24, %s27
    %p36 = scmp.eq.s32.totalorder %s19, 1
    %p37 = por %p35, %p36
    %p38 = scmp.ne.s32.totalorder %s27, %s28
    %p39 = scmp.eq.s32.totalorder %s19, 0
    %p40 = por %p38, %p39
    %p41 = scmp.ne.s32.totalorder %s27, %s28
    %p42 = scmp.eq.s32.totalorder %s20, 1
    %p43 = por %p41, %p42
    %p45 = scmp.ne.s32.totalorder %s28, %s44
    %p46 = scmp.eq.s32.totalorder %s20, 0
    %p47 = por %p45, %p46
    %s49 = sadd.s32 %s48, 1
    %p52 = scmp.eq.s32.totalorder %s14, 1
    %p53 = scmp.ne.s32.totalorder %s48, %s50
    %p54 = scmp.eq.s32.totalorder %s14, 0
    %p55 = por %p53, %p54
    %p56 = scmp.ne.s32.totalorder %s48, %s50
    %p57 = scmp.eq.s32.totalorder %s19, 1
    %p58 = por %p56, %p57
    %p59 = scmp.ne.s32.totalorder %s50, %s51
    %p60 = scmp.eq.s32.totalorder %s19, 0
    %p61 = por %p59, %p60
    %p62 = scmp.ne.s32.totalorder %s50, %s51
    %p63 = scmp.eq.s32.totalorder %s20, 1
    %p64 = por %p62, %p63
    %p66 = scmp.ne.s32.totalorder %s51, %s65
    %p67 = scmp.eq.s32.totalorder %s20, 0
    %p68 = por %p66, %p67
    %s70 = sadd.s32 %s69, 1
    %p73 = scmp.eq.s32.totalorder %s14, 1
    %p74 = scmp.ne.s32.totalorder %s69, %s71
    %p75 = scmp.eq.s32.totalorder %s14, 0
    %p76 = por %p74, %p75
    %p77 = scmp.ne.s32.totalorder %s69, %s71
    %p78 = scmp.eq.s32.totalorder %s19, 1
    %p79 = por %p77, %p78
    %p80 = scmp.ne.s32.totalorder %s71, %s72
    %p81 = scmp.eq.s32.totalorder %s19, 0
    %p82 = por %p80, %p81
    %p83 = scmp.ne.s32.totalorder %s71, %s72
    %p84 = scmp.eq.s32.totalorder %s20, 1
    %p85 = por %p83, %p84
    %p87 = scmp.ne.s32.totalorder %s72, %s86
    %p88 = scmp.eq.s32.totalorder %s20, 0
    %p89 = por %p87, %p88
    %s91 = sadd.s32 %s90, 1
    %p94 = scmp.eq.s32.totalorder %s14, 1
    %p95 = scmp.ne.s32.totalorder %s90, %s92
    %p96 = scmp.eq.s32.totalorder %s14, 0
    %p97 = por %p95, %p96
    %p98 = scmp.ne.s32.totalorder %s90, %s92
    %p99 = scmp.eq.s32.totalorder %s19, 1
    %p100 = por %p98, %p99
    %p101 = scmp.ne.s32.totalorder %s92, %s93
    %p102 = scmp.eq.s32.totalorder %s19, 0
    %p103 = por %p101, %p102
    %p104 = scmp.ne.s32.totalorder %s92, %s93
    %p105 = scmp.eq.s32.totalorder %s20, 1
    %p106 = por %p104, %p105
    %p108 = scmp.ne.s32.totalorder %s93, %s107
    %p109 = scmp.eq.s32.totalorder %s20, 0
    %p110 = por %p108, %p109
    %s112 = sadd.s32 %s111, 1
    %p115 = scmp.eq.s32.totalorder %s14, 1
    %p116 = scmp.ne.s32.totalorder %s111, %s113
    %p117 = scmp.eq.s32.totalorder %s14, 0
    %p118 = por %p116, %p117
    %p119 = scmp.ne.s32.totalorder %s111, %s113
    %p120 = scmp.eq.s32.totalorder %s19, 1
    %p121 = por %p119, %p120
    %p122 = scmp.ne.s32.totalorder %s113, %s114
    %p123 = scmp.eq.s32.totalorder %s19, 0
    %p124 = por %p122, %p123
    %p125 = scmp.ne.s32.totalorder %s113, %s114
    %p126 = scmp.eq.s32.totalorder %s20, 1
    %p127 = por %p125, %p126
    %p129 = scmp.ne.s32.totalorder %s114, %s128
    %p130 = scmp.eq.s32.totalorder %s20, 0
    %p131 = por %p129, %p130
    %s133 = sadd.s32 %s132, 1
    %p136 = scmp.eq.s32.totalorder %s14, 1
    %p137 = scmp.ne.s32.totalorder %s132, %s134
    %p138 = scmp.eq.s32.totalorder %s14, 0
    %p139 = por %p137, %p138
    %p140 = scmp.ne.s32.totalorder %s132, %s134
    %p141 = scmp.eq.s32.totalorder %s19, 1
    %p142 = por %p140, %p141
    %p143 = scmp.ne.s32.totalorder %s134, %s135
    %p144 = scmp.eq.s32.totalorder %s19, 0
    %p145 = por %p143, %p144
    %p146 = scmp.ne.s32.totalorder %s134, %s135
    %p147 = scmp.eq.s32.totalorder %s20, 1
    %p148 = por %p146, %p147
    %p150 = scmp.ne.s32.totalorder %s135, %s149
    %p151 = scmp.eq.s32.totalorder %s20, 0
    %p152 = por %p150, %p151
    %s154 = sadd.s32 %s153, 1
    %p157 = scmp.eq.s32.totalorder %s14, 1
    %p158 = scmp.ne.s32.totalorder %s153, %s155
    %p159 = scmp.eq.s32.totalorder %s14, 0
    %p160 = por %p158, %p159
    %p161 = scmp.ne.s32.totalorder %s153, %s155
    %p162 = scmp.eq.s32.totalorder %s19, 1
    %p163 = por %p161, %p162
    %p164 = scmp.ne.s32.totalorder %s155, %s156
    %p165 = scmp.eq.s32.totalorder %s19, 0
    %p166 = por %p164, %p165
    %p167 = scmp.ne.s32.totalorder %s155, %s156
    %p168 = scmp.eq.s32.totalorder %s20, 1
    %p169 = por %p167, %p168
    %p171 = scmp.ne.s32.totalorder %s156, %s170
    %p172 = scmp.eq.s32.totalorder %s20, 0
    %p173 = por %p171, %p172
    %s175 = sadd.s32 %s174, 1
    %p178 = scmp.eq.s32.totalorder %s14, 1
    %p179 = scmp.ne.s32.totalorder %s174, %s176
    %p180 = scmp.eq.s32.totalorder %s14, 0
    %p181 = por %p179, %p180
    %p182 = scmp.ne.s32.totalorder %s174, %s176
    %p183 = scmp.eq.s32.totalorder %s19, 1
    %p184 = por %p182, %p183
    %p185 = scmp.ne.s32.totalorder %s176, %s177
    %p186 = scmp.eq.s32.totalorder %s19, 0
    %p187 = por %p185, %p186
    %p188 = scmp.ne.s32.totalorder %s176, %s177
    %p189 = scmp.eq.s32.totalorder %s20, 1
    %p190 = por %p188, %p189
    %p192 = scmp.ne.s32.totalorder %s177, %s191
    %p193 = scmp.eq.s32.totalorder %s20, 0
    %p194 = por %p192, %p193
    %s195 = ssub.s32 %s14, %s21
    %p196 = scmp.eq.s32.totalorder %s195, 0
    %s198 = sadd.s32 %s197, 1
    %s199 = scalar_select %p196, %s197, %s198
    %p202 = pneg %p196
    %p203 = scmp.eq.s32.totalorder %s14, 1
    %p204 = por %p202, %p203
    %p205 = scmp.ne.s32.totalorder %s197, %s200
    %p206 = scmp.eq.s32.totalorder %s14, 0
    %p207 = por %p205, %p206
    %p208 = scmp.ne.s32.totalorder %s197, %s200
    %p209 = scmp.eq.s32.totalorder %s19, 1
    %p210 = por %p208, %p209
    %p211 = scmp.ne.s32.totalorder %s200, %s201
    %p212 = scmp.eq.s32.totalorder %s19, 0
    %p213 = por %p211, %p212
    %p214 = scmp.ne.s32.totalorder %s200, %s201
    %p215 = scmp.eq.s32.totalorder %s20, 1
    %p216 = por %p214, %p215
    %p218 = scmp.ne.s32.totalorder %s201, %s217
    %p219 = scmp.eq.s32.totalorder %s20, 0
    %p220 = por %p218, %p219
    %p221 = scmp.le.s32.totalorder 1, %s14
    %p222 = scmp.lt.s32.totalorder %s14, 3
    %p223 = pnand %p221, %p222
    %p224 = pneg %p223
    // Predicated region
    $region9: #{encoder_forward.5} parent=5 // pred_check
      _
    $region10: #{encoder_forward.5} parent=5 // pred_check_branch
      %226 = sbr.rel (%p223) target = $region12
    $region11: #{encoder_forward.5} parent=5 // pred_region
      %s227 = ssub.s32 %s14, 1
      // Predicated region
      $region13: #{encoder_forward.5} parent=11 // pred_check
        %p228 = pneg %p61
      $region14: #{encoder_forward.5} parent=11 // pred_check_branch
        %230 = sbr.rel (%p228) target = $region16
      $region15: #{encoder_forward.5} parent=11 // pred_region
        _
      $region16: #{encoder_forward.5} parent=11 // pred_fallthru
        _
      // Predicated region
      $region17: #{encoder_forward.5} parent=11 // pred_check
        %p231 = pneg %p82
      $region18: #{encoder_forward.5} parent=11 // pred_check_branch
        %233 = sbr.rel (%p231) target = $region20
      $region19: #{encoder_forward.5} parent=11 // pred_region
        _
      $region20: #{encoder_forward.5} parent=11 // pred_fallthru
        _
      // Predicated region
      $region21: #{encoder_forward.5} parent=11 // pred_check
        %p234 = pneg %p103
      $region22: #{encoder_forward.5} parent=11 // pred_check_branch
        %236 = sbr.rel (%p234) target = $region24
      $region23: #{encoder_forward.5} parent=11 // pred_region
        _
      $region24: #{encoder_forward.5} parent=11 // pred_fallthru
        _
      // Predicated region
      $region25: #{encoder_forward.5} parent=11 // pred_check
        %p237 = pneg %p124
      $region26: #{encoder_forward.5} parent=11 // pred_check_branch
        %239 = sbr.rel (%p237) target = $region28
      $region27: #{encoder_forward.5} parent=11 // pred_region
        _
      $region28: #{encoder_forward.5} parent=11 // pred_fallthru
        _
      // Predicated region
      $region29: #{encoder_forward.5} parent=11 // pred_check
        %p240 = pneg %p145
      $region30: #{encoder_forward.5} parent=11 // pred_check_branch
        %242 = sbr.rel (%p240) target = $region32
      $region31: #{encoder_forward.5} parent=11 // pred_region
        _
      $region32: #{encoder_forward.5} parent=11 // pred_fallthru
        _
      // Predicated region
      $region33: #{encoder_forward.5} parent=11 // pred_check
        %p243 = pneg %p166
      $region34: #{encoder_forward.5} parent=11 // pred_check_branch
        %245 = sbr.rel (%p243) target = $region36
      $region35: #{encoder_forward.5} parent=11 // pred_region
        _
      $region36: #{encoder_forward.5} parent=11 // pred_fallthru
        _
      // Predicated region
      $region37: #{encoder_forward.5} parent=11 // pred_check
        %p246 = pneg %p187
      $region38: #{encoder_forward.5} parent=11 // pred_check_branch
        %248 = sbr.rel (%p246) target = $region40
      $region39: #{encoder_forward.5} parent=11 // pred_region
        _
      $region40: #{encoder_forward.5} parent=11 // pred_fallthru
        _
    $region12: #{encoder_forward.5} parent=5 // pred_fallthru
      _
    %p249 = scmp.lt.s32.totalorder %s14, 2
    // Predicated region
    $region41: #{encoder_forward.5} parent=5 // pred_check
      %p250 = pneg %p249
    $region42: #{encoder_forward.5} parent=5 // pred_check_branch
      %252 = sbr.rel (%p250) target = $region44
    $region43: #{encoder_forward.5} parent=5 // pred_region
      // Predicated region
      $region45: #{encoder_forward.5} parent=43 // pred_check
        %p253 = pneg %p34
      $region46: #{encoder_forward.5} parent=43 // pred_check_branch
        %255 = sbr.rel (%p253) target = $region48
      $region47: #{encoder_forward.5} parent=43 // pred_region
        %p256 = scmp.lt.s32.totalorder %s14, 1
        %s257 = scalar_select %p256, %s14, 1
        %s258 = smul.addr %s257, 6
        %s259 = smul.addr %s258, 4
        %s260 = scalar_lea.vmem %s0, %s259
      $region48: #{encoder_forward.5} parent=43 // pred_fallthru
        _
    $region44: #{encoder_forward.5} parent=5 // pred_fallthru
      _
    %p261 = scmp.le.s32.totalorder 1, %s14
    %p262 = scmp.lt.s32.totalorder %s14, 3
    %p263 = pnand %p261, %p262
    %p264 = pneg %p263
    // Predicated region
    $region49: #{encoder_forward.5} parent=5 // pred_check
      _
    $region50: #{encoder_forward.5} parent=5 // pred_check_branch
      %266 = sbr.rel (%p263) target = $region52
    $region51: #{encoder_forward.5} parent=5 // pred_region
      %s267 = ssub.s32 %s14, 1
      %p268 = scmp.lt.s32.totalorder %s19, 1
      %s269 = scalar_select %p268, %s19, 1
      %s270 = smul.addr %s269, 6
      %s271 = smul.addr %s270, 4
      %s272 = scalar_lea.vmem %s0, %s271
      %p273 = pneg %p40
      %p274 = pneg %p37
      %p275 = pneg %p61
      %p276 = pneg %p58
      %p277 = pneg %p82
      %p278 = pneg %p79
      %p279 = pneg %p103
      %p280 = pneg %p100
      %p281 = pneg %p124
      %p282 = pneg %p121
      %p283 = pneg %p145
      %p284 = pneg %p142
      %p285 = pneg %p166
      %p286 = pneg %p163
      %p287 = pneg %p187
      %p288 = pneg %p184
      %p289 = pneg %p213
      %p290 = pneg %p210
      %p291 = scmp.lt.s32.totalorder %s19, 1
      %s292 = scalar_select %p291, %s19, 1
      %s293 = smul.addr %s292, 3
      %s294 = smul.addr %s293, 8
      %s295 = scalar_lea.vmem %s8, %s294
      %p296 = scmp.lt.s32.totalorder %s19, 1
      %s297 = scalar_select %p296, %s19, 1
      %s298 = smul.addr %s297, 6
      %s299 = smul.addr %s298, 4
      %s300 = scalar_lea.vmem %s0, %s299
      %p301 = scmp.lt.s32.totalorder %s19, 1
      %s302 = scalar_select %p301, %s19, 1
      %s303 = smul.addr %s302, 3
      %s304 = smul.addr %s303, 8
      %s305 = scalar_lea.vmem %s8, %s304
      %v307 = vld [vmem:[%s300] sm:$0xf]
      %v308 = vld [vmem:[%s300 + $0x4] sm:$0xf]
      %v309 = vld [vmem:[%s300 + $0x8] sm:$0xf]
      %v310 = vld [vmem:[%s1] sm:$0xf]
      %v311 = vld [vmem:[%s1 + $0x4] sm:$0xf]
      %v312 = vld [vmem:[%s1 + $0x8] sm:$0xf]
      %v313 = vld [vmem:[%s1 + $0xc] sm:$0xf]
      %v314 = vld [vmem:[%s300 + $0xc] sm:$0x1]
      %s315 = scalar_lea.vmem %s1, 16
      %v316 = vld [vmem:[%s315] sm:$0xf]
      %v317 = vld [vmem:[%s315 + $0x4] sm:$0xf]
      %v318 = vld [vmem:[%s315 + $0x8] sm:$0xf]
      %v319 = vld [vmem:[%s315 + $0xc] sm:$0xf]
      %v324 = vunpack.c.l.b16 %v307
      %v325 = vunpack.c.l.b16 %v308
      %v326 = vunpack.c.l.b16 %v309
      %v327 = vunpack.c.l.b16 %v314
      %v328 = vpack.c.b16 %v325, %v324
      %v329 = vpack.c.b16 %v327, %v326
      %vm330 = vsmask.f32 7424
      %v332 = vshrl.u32 %v328, 16
      %v334 = vshll.u32 %v328, 16
      %v336 = vrot.slane %v334, 1
      %v337 = vor.u32 %v332, %v336
      %v339 = vshll.u32 %v329, 16
      %v341 = vrot.slane %v339, 1
      %v342 = vsel %vm330, %v337, %v341
      %v343 = vshrl.u32 %v329, 16
      %v345 = vor.u32 %v343, %v341
      %v350 = vunpack.c.l.b16 %v316
      %v351 = vunpack.c.l.b16 %v317
      %v352 = vunpack.c.l.b16 %v318
      %v353 = vunpack.c.l.b16 %v319
      %v354 = vpack.c.b16 %v351, %v350
      %v355 = vpack.c.b16 %v353, %v352
      %vm358 = vcmask 261120
      %v360 = vsel %vm358, %v342, 0
      %v363 = vsel %vm358, %v345, 0
      %365 = vmatprep.subr.bf16.mxu0 0
      %366 = vmatpush1.bf16.msra.mxu0 %v354
      %367 = vmatprep.subr.bf16.mxu0 0
      %368 = vmatpush1.bf16.msra.mxu0 %v355
      %369 = vmatprep.subr.bf16.mxu0 0
      %370 = vmatpush1.bf16.msra.mxu0 0
      %371 = vmatprep.subr.bf16.mxu0 0
      %372 = vmatpush1.bf16.msra.mxu0 0
      %373 = vmatprep.subr.bf16.mxu0 0
      %374 = vmatpush1.bf16.msra.mxu0 0
      %375 = vmatprep.subr.bf16.mxu0 0
      %376 = vmatpush1.bf16.msra.mxu0 0
      %377 = vmatprep.subr.bf16.mxu0 0
      %378 = vmatpush1.bf16.msra.mxu0 0
      %379 = vmatprep.subr.bf16.mxu0 0
      %380 = vmatpush1.bf16.msra.mxu0 0
      %381 = vmatprep.subr.bf16.mxu0 0
      %382 = vmatpush1.bf16.msra.mxu0 0
      %383 = vmatprep.subr.bf16.mxu0 0
      %384 = vmatpush1.bf16.msra.mxu0 0
      %385 = vmatprep.subr.bf16.mxu0 0
      %386 = vmatpush1.bf16.msra.mxu0 0
      %387 = vmatprep.subr.bf16.mxu0 0
      %388 = vmatpush1.bf16.msra.mxu0 0
      %389 = vmatprep.subr.bf16.mxu0 0
      %390 = vmatpush1.bf16.msra.mxu0 0
      %391 = vmatprep.subr.bf16.mxu0 0
      %392 = vmatpush1.bf16.msra.mxu0 0
      %393 = vmatprep.subr.bf16.mxu0 0
      %394 = vmatpush1.bf16.msra.mxu0 0
      %395 = vmatprep.subr.bf16.mxu0 0
      %396 = vmatpush1.bf16.msra.mxu0 0
      %397 = vmatprep.mubr.bf16.mxu0 0
      %398 = vmatmul.mubr.bf16.gmra.mrb[0].mxu0 %v360
      %v399 = vpop.f32.mrb[0].mxu0
      %v400 = vadd.f32 0.0, %v399
      %v401 = vpop.f32.mrb[0].mxu0
      %v402 = vpop.f32.mrb[0].mxu0
      %v403 = vadd.f32 0.0, %v402
      %v404 = vpop.f32.mrb[0].mxu0
      %405 = vmatprep.mubr.bf16.mxu0 0
      %406 = vmatmul.mubr.bf16.gmra.mrb[0].mxu0 %v363
      %v407 = vpop.f32.mrb[0].mxu0
      %v408 = vadd.f32 0.0, %v407
      %v409 = vpop.f32.mrb[0].mxu0
      %v410 = vpop.f32.mrb[0].mxu0
      %v411 = vpop.f32.mrb[0].mxu0
      %412 = vdwg.mxu0
      %v413 = vpack.c.b16 %v326, %v326
      %v418 = vunpack.c.l.b16 %v310
      %v419 = vunpack.c.l.b16 %v311
      %v420 = vunpack.c.l.b16 %v312
      %v421 = vunpack.c.l.b16 %v313
      %v422 = vpack.c.b16 %v419, %v418
      %v423 = vpack.c.b16 %v421, %v420
      %v426 = vsel %vm358, %v328, 0
      %v429 = vsel %vm358, %v413, 0
      %431 = vmatprep.subr.bf16.mxu0 0
      %432 = vmatpush1.bf16.msra.mxu0 %v422
      %433 = vmatprep.subr.bf16.mxu0 0
      %434 = vmatpush1.bf16.msra.mxu0 %v423
      %435 = vmatprep.subr.bf16.mxu0 0
      %436 = vmatpush1.bf16.msra.mxu0 0
      %437 = vmatprep.subr.bf16.mxu0 0
      %438 = vmatpush1.bf16.msra.mxu0 0
      %439 = vmatprep.subr.bf16.mxu0 0
      %440 = vmatpush1.bf16.msra.mxu0 0
      %441 = vmatprep.subr.bf16.mxu0 0
      %442 = vmatpush1.bf16.msra.mxu0 0
      %443 = vmatprep.subr.bf16.mxu0 0
      %444 = vmatpush1.bf16.msra.mxu0 0
      %445 = vmatprep.subr.bf16.mxu0 0
      %446 = vmatpush1.bf16.msra.mxu0 0
      %447 = vmatprep.subr.bf16.mxu0 0
      %448 = vmatpush1.bf16.msra.mxu0 0
      %449 = vmatprep.subr.bf16.mxu0 0
      %450 = vmatpush1.bf16.msra.mxu0 0
      %451 = vmatprep.subr.bf16.mxu0 0
      %452 = vmatpush1.bf16.msra.mxu0 0
      %453 = vmatprep.subr.bf16.mxu0 0
      %454 = vmatpush1.bf16.msra.mxu0 0
      %455 = vmatprep.subr.bf16.mxu0 0
      %456 = vmatpush1.bf16.msra.mxu0 0
      %457 = vmatprep.subr.bf16.mxu0 0
      %458 = vmatpush1.bf16.msra.mxu0 0
      %459 = vmatprep.subr.bf16.mxu0 0
      %460 = vmatpush1.bf16.msra.mxu0 0
      %461 = vmatprep.subr.bf16.mxu0 0
      %462 = vmatpush1.bf16.msra.mxu0 0
      %463 = vmatprep.mubr.bf16.mxu0 0
      %464 = vmatmul.mubr.bf16.gmra.mrb[0].mxu0 %v426
      %v465 = vpop.f32.mrb[0].mxu0
      %v466 = vadd.f32 %v400, %v465
      %v467 = vpop.f32.mrb[0].mxu0
      %v468 = vpop.f32.mrb[0].mxu0
      %v469 = vadd.f32 %v403, %v468
      %v470 = vpop.f32.mrb[0].mxu0
      %471 = vmatprep.mubr.bf16.mxu0 0
      %472 = vmatmul.mubr.bf16.gmra.mrb[0].mxu0 %v429
      %v473 = vpop.f32.mrb[0].mxu0
      %v474 = vadd.f32 %v408, %v473
      %v475 = vpop.f32.mrb[0].mxu0
      %v476 = vpop.f32.mrb[0].mxu0
      %v477 = vpop.f32.mrb[0].mxu0
      %478 = vdwg.mxu0
      %v479 = vld [vmem:[%s300] sm:$0xe]
      %s480 = scalar_lea.vmem %s1, 32
      %v481 = vld [vmem:[%s480] sm:$0xf]
      %v482 = vld [vmem:[%s480 + $0x4] sm:$0xf]
      %v483 = vld [vmem:[%s480 + $0x8] sm:$0xf]
      %v484 = vld [vmem:[%s480 + $0xc] sm:$0xf]
      %v486 = vunpack.c.l.b16 %v479
      %v487 = vpack.c.b16 %v325, %v486
      %vm488 = vcmask 1046528
      %v489 = vrot.slane %v487, 1
      %v490 = vrot.slane %v329, 1
      %v491 = vsel %vm488, %v489, %v490
      %v496 = vunpack.c.l.b16 %v481
      %v497 = vunpack.c.l.b16 %v482
      %v498 = vunpack.c.l.b16 %v483
      %v499 = vunpack.c.l.b16 %v484
      %v500 = vpack.c.b16 %v497, %v496
      %v501 = vpack.c.b16 %v499, %v498
      %v505 = vsel %vm358, %v491, 0
      %v508 = vsel %vm358, %v490, 0
      %510 = vmatprep.subr.bf16.mxu0 0
      %511 = vmatpush1.bf16.msra.mxu0 %v500
      %512 = vmatprep.subr.bf16.mxu0 0
      %513 = vmatpush1.bf16.msra.mxu0 %v501
      %514 = vmatprep.subr.bf16.mxu0 0
      %515 = vmatpush1.bf16.msra.mxu0 0
      %516 = vmatprep.subr.bf16.mxu0 0
      %517 = vmatpush1.bf16.msra.mxu0 0
      %518 = vmatprep.subr.bf16.mxu0 0
      %519 = vmatpush1.bf16.msra.mxu0 0
      %520 = vmatprep.subr.bf16.mxu0 0
      %521 = vmatpush1.bf16.msra.mxu0 0
      %522 = vmatprep.subr.bf16.mxu0 0
      %523 = vmatpush1.bf16.msra.mxu0 0
      %524 = vmatprep.subr.bf16.mxu0 0
      %525 = vmatpush1.bf16.msra.mxu0 0
      %526 = vmatprep.subr.bf16.mxu0 0
      %527 = vmatpush1.bf16.msra.mxu0 0
      %528 = vmatprep.subr.bf16.mxu0 0
      %529 = vmatpush1.bf16.msra.mxu0 0
      %530 = vmatprep.subr.bf16.mxu0 0
      %531 = vmatpush1.bf16.msra.mxu0 0
      %532 = vmatprep.subr.bf16.mxu0 0
      %533 = vmatpush1.bf16.msra.mxu0 0
      %534 = vmatprep.subr.bf16.mxu0 0
      %535 = vmatpush1.bf16.msra.mxu0 0
      %536 = vmatprep.subr.bf16.mxu0 0
      %537 = vmatpush1.bf16.msra.mxu0 0
      %538 = vmatprep.subr.bf16.mxu0 0
      %539 = vmatpush1.bf16.msra.mxu0 0
      %540 = vmatprep.subr.bf16.mxu0 0
      %541 = vmatpush1.bf16.msra.mxu0 0
      %542 = vmatprep.mubr.bf16.mxu0 0
      %543 = vmatmul.mubr.bf16.gmra.mrb[0].mxu0 %v505
      %v544 = vpop.f32.mrb[0].mxu0
      %v545 = vadd.f32 0.0, %v544
      %v546 = vpop.f32.mrb[0].mxu0
      %v547 = vpop.f32.mrb[0].mxu0
      %v548 = vadd.f32 0.0, %v547
      %v549 = vpop.f32.mrb[0].mxu0
      %550 = vmatprep.mubr.bf16.mxu0 0
      %551 = vmatmul.mubr.bf16.gmra.mrb[0].mxu0 %v508
      %v552 = vpop.f32.mrb[0].mxu0
      %v553 = vadd.f32 0.0, %v552
      %v554 = vpop.f32.mrb[0].mxu0
      %v555 = vpop.f32.mrb[0].mxu0
      %v556 = vpop.f32.mrb[0].mxu0
      %557 = vdwg.mxu0
      %v558 = vadd.f32 %v466, %v545
      %v559 = vadd.f32 %v469, %v548
      %v560 = vadd.f32 %v474, %v553
      %v561 = vld [vmem:[%s300] sm:$0x8]
      %v562 = vld [vmem:[%s300 + $0xc] sm:$0x7]
      %s563 = scalar_lea.vmem %s1, 48
      %v564 = vld [vmem:[%s563] sm:$0xf]
      %v565 = vld [vmem:[%s563 + $0x4] sm:$0xf]
      %v566 = vld [vmem:[%s563 + $0x8] sm:$0xf]
      %v567 = vld [vmem:[%s563 + $0xc] sm:$0xf]
      %v570 = vunpack.c.l.b16 %v561
      %v571 = vunpack.c.l.b16 %v562
      %v572 = vpack.c.b16 %v325, %v570
      %v573 = vpack.c.b16 %v571, %v326
      %vm574 = vcmask 1044480
      %v575 = vrot.slane %v572, 3
      %v576 = vrot.slane %v573, 3
      %v577 = vsel %vm574, %v575, %v576
      %v582 = vunpack.c.l.b16 %v564
      %v583 = vunpack.c.l.b16 %v565
      %v584 = vunpack.c.l.b16 %v566
      %v585 = vunpack.c.l.b16 %v567
      %v586 = vpack.c.b16 %v583, %v582
      %v587 = vpack.c.b16 %v585, %v584
      %v591 = vsel %vm358, %v577, 0
      %v594 = vsel %vm358, %v576, 0
      %596 = vmatprep.subr.bf16.mxu0 0
      %597 = vmatpush1.bf16.msra.mxu0 %v586
      %598 = vmatprep.subr.bf16.mxu0 0
      %599 = vmatpush1.bf16.msra.mxu0 %v587
      %600 = vmatprep.subr.bf16.mxu0 0
      %601 = vmatpush1.bf16.msra.mxu0 0
      %602 = vmatprep.subr.bf16.mxu0 0
      %603 = vmatpush1.bf16.msra.mxu0 0
      %604 = vmatprep.subr.bf16.mxu0 0
      %605 = vmatpush1.bf16.msra.mxu0 0
      %606 = vmatprep.subr.bf16.mxu0 0
      %607 = vmatpush1.bf16.msra.mxu0 0
      %608 = vmatprep.subr.bf16.mxu0 0
      %609 = vmatpush1.bf16.msra.mxu0 0
      %610 = vmatprep.subr.bf16.mxu0 0
      %611 = vmatpush1.bf16.msra.mxu0 0
      %612 = vmatprep.subr.bf16.mxu0 0
      %613 = vmatpush1.bf16.msra.mxu0 0
      %614 = vmatprep.subr.bf16.mxu0 0
      %615 = vmatpush1.bf16.msra.mxu0 0
      %616 = vmatprep.subr.bf16.mxu0 0
      %617 = vmatpush1.bf16.msra.mxu0 0
      %618 = vmatprep.subr.bf16.mxu0 0
      %619 = vmatpush1.bf16.msra.mxu0 0
      %620 = vmatprep.subr.bf16.mxu0 0
      %621 = vmatpush1.bf16.msra.mxu0 0
      %622 = vmatprep.subr.bf16.mxu0 0
      %623 = vmatpush1.bf16.msra.mxu0 0
      %624 = vmatprep.subr.bf16.mxu0 0
      %625 = vmatpush1.bf16.msra.mxu0 0
      %626 = vmatprep.subr.bf16.mxu0 0
      %627 = vmatpush1.bf16.msra.mxu0 0
      %628 = vmatprep.mubr.bf16.mxu0 0
      %629 = vmatmul.mubr.bf16.gmra.mrb[0].mxu0 %v591
      %v630 = vpop.f32.mrb[0].mxu0
      %v631 = vadd.f32 0.0, %v630
      %v632 = vpop.f32.mrb[0].mxu0
      %v633 = vpop.f32.mrb[0].mxu0
      %v634 = vadd.f32 0.0, %v633
      %v635 = vpop.f32.mrb[0].mxu0
      %636 = vmatprep.mubr.bf16.mxu0 0
      %637 = vmatmul.mubr.bf16.gmra.mrb[0].mxu0 %v594
      %v638 = vpop.f32.mrb[0].mxu0
      %v639 = vadd.f32 0.0, %v638
      %v640 = vpop.f32.mrb[0].mxu0
      %v641 = vpop.f32.mrb[0].mxu0
      %v642 = vpop.f32.mrb[0].mxu0
      %643 = vdwg.mxu0
      %v644 = vadd.f32 %v558, %v631
      %v645 = vadd.f32 %v559, %v634
      %v646 = vadd.f32 %v560, %v639
      %v647 = vld [vmem:[%s300 + $0xc] sm:$0xf]
      %s648 = scalar_lea.vmem %s1, 64
      %v649 = vld [vmem:[%s648] sm:$0xf]
      %v650 = vld [vmem:[%s648 + $0x4] sm:$0xf]
      %v651 = vld [vmem:[%s648 + $0x8] sm:$0xf]
      %v652 = vld [vmem:[%s648 + $0xc] sm:$0xf]
      %v654 = vunpack.c.l.b16 %v647
      %v655 = vpack.c.b16 %v654, %v326
      %vm656 = vsmask.f32 4352
      %v658 = vshrl.u32 %v572, 16
      %v660 = vrot.slane %v658, 3
      %v661 = vshll.u32 %v572, 16
      %v663 = vrot.slane %v661, 4
      %v664 = vor.u32 %v660, %v663
      %v666 = vshrl.u32 %v655, 16
      %v668 = vrot.slane %v666, 3
      %v669 = vshll.u32 %v655, 16
      %v671 = vrot.slane %v669, 4
      %v672 = vor.u32 %v668, %v671
      %v673 = vsel %vm656, %v664, %v672
      %v678 = vunpack.c.l.b16 %v649
      %v679 = vunpack.c.l.b16 %v650
      %v680 = vunpack.c.l.b16 %v651
      %v681 = vunpack.c.l.b16 %v652
      %v682 = vpack.c.b16 %v679, %v678
      %v683 = vpack.c.b16 %v681, %v680
      %v687 = vsel %vm358, %v673, 0
      %v690 = vsel %vm358, %v672, 0
      %692 = vmatprep.subr.bf16.mxu0 0
      %693 = vmatpush1.bf16.msra.mxu0 %v682
      %694 = vmatprep.subr.bf16.mxu0 0
      %695 = vmatpush1.bf16.msra.mxu0 %v683
      %696 = vmatprep.subr.bf16.mxu0 0
      %697 = vmatpush1.bf16.msra.mxu0 0
      %698 = vmatprep.subr.bf16.mxu0 0
      %699 = vmatpush1.bf16.msra.mxu0 0
      %700 = vmatprep.subr.bf16.mxu0 0
      %701 = vmatpush1.bf16.msra.mxu0 0
      %702 = vmatprep.subr.bf16.mxu0 0
      %703 = vmatpush1.bf16.msra.mxu0 0
      %704 = vmatprep.subr.bf16.mxu0 0
      %705 = vmatpush1.bf16.msra.mxu0 0
      %706 = vmatprep.subr.bf16.mxu0 0
      %707 = vmatpush1.bf16.msra.mxu0 0
      %708 = vmatprep.subr.bf16.mxu0 0
      %709 = vmatpush1.bf16.msra.mxu0 0
      %710 = vmatprep.subr.bf16.mxu0 0
      %711 = vmatpush1.bf16.msra.mxu0 0
      %712 = vmatprep.subr.bf16.mxu0 0
      %713 = vmatpush1.bf16.msra.mxu0 0
      %714 = vmatprep.subr.bf16.mxu0 0
      %715 = vmatpush1.bf16.msra.mxu0 0
      %716 = vmatprep.subr.bf16.mxu0 0
      %717 = vmatpush1.bf16.msra.mxu0 0
      %718 = vmatprep.subr.bf16.mxu0 0
      %719 = vmatpush1.bf16.msra.mxu0 0
      %720 = vmatprep.subr.bf16.mxu0 0
      %721 = vmatpush1.bf16.msra.mxu0 0
      %722 = vmatprep.subr.bf16.mxu0 0
      %723 = vmatpush1.bf16.msra.mxu0 0
      %724 = vmatprep.mubr.bf16.mxu0 0
      %725 = vmatmul.mubr.bf16.gmra.mrb[0].mxu0 %v687
      %v726 = vpop.f32.mrb[0].mxu0
      %v727 = vadd.f32 0.0, %v726
      %v728 = vpop.f32.mrb[0].mxu0
      %v729 = vpop.f32.mrb[0].mxu0
      %v730 = vadd.f32 0.0, %v729
      %v731 = vpop.f32.mrb[0].mxu0
      %732 = vmatprep.mubr.bf16.mxu0 0
      %733 = vmatmul.mubr.bf16.gmra.mrb[0].mxu0 %v690
      %v734 = vpop.f32.mrb[0].mxu0
      %v735 = vadd.f32 0.0, %v734
      %v736 = vpop.f32.mrb[0].mxu0
      %v737 = vpop.f32.mrb[0].mxu0
      %v738 = vpop.f32.mrb[0].mxu0
      %739 = vdwg.mxu0
      %v740 = vadd.f32 %v644, %v727
      %v741 = vadd.f32 %v645, %v730
      %v742 = vadd.f32 %v646, %v735
      %s743 = scalar_lea.vmem %s1, 80
      %v744 = vld [vmem:[%s743] sm:$0xf]
      %v745 = vld [vmem:[%s743 + $0x4] sm:$0xf]
      %v746 = vld [vmem:[%s743 + $0x8] sm:$0xf]
      %v747 = vld [vmem:[%s743 + $0xc] sm:$0xf]
      %v748 = vpack.c.b16 %v326, %v325
      %v749 = vpack.c.b16 %v654, %v654
      %v754 = vunpack.c.l.b16 %v744
      %v755 = vunpack.c.l.b16 %v745
      %v756 = vunpack.c.l.b16 %v746
      %v757 = vunpack.c.l.b16 %v747
      %v758 = vpack.c.b16 %v755, %v754
      %v759 = vpack.c.b16 %v757, %v756
      %v763 = vsel %vm358, %v748, 0
      %v766 = vsel %vm358, %v749, 0
      %768 = vmatprep.subr.bf16.mxu0 0
      %769 = vmatpush1.bf16.msra.mxu0 %v758
      %770 = vmatprep.subr.bf16.mxu0 0
      %771 = vmatpush1.bf16.msra.mxu0 %v759
      %772 = vmatprep.subr.bf16.mxu0 0
      %773 = vmatpush1.bf16.msra.mxu0 0
      %774 = vmatprep.subr.bf16.mxu0 0
      %775 = vmatpush1.bf16.msra.mxu0 0
      %776 = vmatprep.subr.bf16.mxu0 0
      %777 = vmatpush1.bf16.msra.mxu0 0
      %778 = vmatprep.subr.bf16.mxu0 0
      %779 = vmatpush1.bf16.msra.mxu0 0
      %780 = vmatprep.subr.bf16.mxu0 0
      %781 = vmatpush1.bf16.msra.mxu0 0
      %782 = vmatprep.subr.bf16.mxu0 0
      %783 = vmatpush1.bf16.msra.mxu0 0
      %784 = vmatprep.subr.bf16.mxu0 0
      %785 = vmatpush1.bf16.msra.mxu0 0
      %786 = vmatprep.subr.bf16.mxu0 0
      %787 = vmatpush1.bf16.msra.mxu0 0
      %788 = vmatprep.subr.bf16.mxu0 0
      %789 = vmatpush1.bf16.msra.mxu0 0
      %790 = vmatprep.subr.bf16.mxu0 0
      %791 = vmatpush1.bf16.msra.mxu0 0
      %792 = vmatprep.subr.bf16.mxu0 0
      %793 = vmatpush1.bf16.msra.mxu0 0
      %794 = vmatprep.subr.bf16.mxu0 0
      %795 = vmatpush1.bf16.msra.mxu0 0
      %796 = vmatprep.subr.bf16.mxu0 0
      %797 = vmatpush1.bf16.msra.mxu0 0
      %798 = vmatprep.subr.bf16.mxu0 0
      %799 = vmatpush1.bf16.msra.mxu0 0
      %800 = vmatprep.mubr.bf16.mxu0 0
      %801 = vmatmul.mubr.bf16.gmra.mrb[0].mxu0 %v763
      %v802 = vpop.f32.mrb[0].mxu0
      %v803 = vadd.f32 0.0, %v802
      %v804 = vpop.f32.mrb[0].mxu0
      %v805 = vpop.f32.mrb[0].mxu0
      %v806 = vadd.f32 0.0, %v805
      %v807 = vpop.f32.mrb[0].mxu0
      %808 = vmatprep.mubr.bf16.mxu0 0
      %809 = vmatmul.mubr.bf16.gmra.mrb[0].mxu0 %v766
      %v810 = vpop.f32.mrb[0].mxu0
      %v811 = vadd.f32 0.0, %v810
      %v812 = vpop.f32.mrb[0].mxu0
      %v813 = vpop.f32.mrb[0].mxu0
      %v814 = vpop.f32.mrb[0].mxu0
      %815 = vdwg.mxu0
      %v816 = vadd.f32 %v740, %v803
      %v817 = vadd.f32 %v741, %v806
      %v818 = vadd.f32 %v742, %v811
      %v819 = vld [vmem:[%s300 + $0x4] sm:$0xc]
      %v820 = vld [vmem:[%s300 + $0x8] sm:$0xf]
      %v821 = vld [vmem:[%s300 + $0xc] sm:$0xf]
      %v822 = vld [vmem:[%s300 + $0x10] sm:$0x3]
      %s823 = scalar_lea.vmem %s1, 96
      %v824 = vld [vmem:[%s823] sm:$0xf]
      %v825 = vld [vmem:[%s823 + $0x4] sm:$0xf]
      %v826 = vld [vmem:[%s823 + $0x8] sm:$0xf]
      %v827 = vld [vmem:[%s823 + $0xc] sm:$0xf]
      %v832 = vunpack.c.l.b16 %v819
      %v833 = vunpack.c.l.b16 %v820
      %v834 = vunpack.c.l.b16 %v821
      %v835 = vunpack.c.l.b16 %v822
      %v836 = vpack.c.b16 %v833, %v832
      %v837 = vpack.c.b16 %v835, %v834
      %vm838 = vcmask 1045504
      %v839 = vrot.slane %v836, 2
      %v840 = vrot.slane %v837, 2
      %v841 = vsel %vm838, %v839, %v840
      %v846 = vunpack.c.l.b16 %v824
      %v847 = vunpack.c.l.b16 %v825
      %v848 = vunpack.c.l.b16 %v826
      %v849 = vunpack.c.l.b16 %v827
      %v850 = vpack.c.b16 %v847, %v846
      %v851 = vpack.c.b16 %v849, %v848
      %v855 = vsel %vm358, %v841, 0
      %v858 = vsel %vm358, %v840, 0
      %860 = vmatprep.subr.bf16.mxu0 0
      %861 = vmatpush1.bf16.msra.mxu0 %v850
      %862 = vmatprep.subr.bf16.mxu0 0
      %863 = vmatpush1.bf16.msra.mxu0 %v851
      %864 = vmatprep.subr.bf16.mxu0 0
      %865 = vmatpush1.bf16.msra.mxu0 0
      %866 = vmatprep.subr.bf16.mxu0 0
      %867 = vmatpush1.bf16.msra.mxu0 0
      %868 = vmatprep.subr.bf16.mxu0 0
      %869 = vmatpush1.bf16.msra.mxu0 0
      %870 = vmatprep.subr.bf16.mxu0 0
      %871 = vmatpush1.bf16.msra.mxu0 0
      %872 = vmatprep.subr.bf16.mxu0 0
      %873 = vmatpush1.bf16.msra.mxu0 0
      %874 = vmatprep.subr.bf16.mxu0 0
      %875 = vmatpush1.bf16.msra.mxu0 0
      %876 = vmatprep.subr.bf16.mxu0 0
      %877 = vmatpush1.bf16.msra.mxu0 0
      %878 = vmatprep.subr.bf16.mxu0 0
      %879 = vmatpush1.bf16.msra.mxu0 0
      %880 = vmatprep.subr.bf16.mxu0 0
      %881 = vmatpush1.bf16.msra.mxu0 0
      %882 = vmatprep.subr.bf16.mxu0 0
      %883 = vmatpush1.bf16.msra.mxu0 0
      %884 = vmatprep.subr.bf16.mxu0 0
      %885 = vmatpush1.bf16.msra.mxu0 0
      %886 = vmatprep.subr.bf16.mxu0 0
      %887 = vmatpush1.bf16.msra.mxu0 0
      %888 = vmatprep.subr.bf16.mxu0 0
      %889 = vmatpush1.bf16.msra.mxu0 0
      %890 = vmatprep.subr.bf16.mxu0 0
      %891 = vmatpush1.bf16.msra.mxu0 0
      %892 = vmatprep.mubr.bf16.mxu0 0
      %893 = vmatmul.mubr.bf16.gmra.mrb[0].mxu0 %v855
      %v894 = vpop.f32.mrb[0].mxu0
      %v895 = vadd.f32 0.0, %v894
      %v896 = vpop.f32.mrb[0].mxu0
      %v897 = vpop.f32.mrb[0].mxu0
      %v898 = vadd.f32 0.0, %v897
      %v899 = vpop.f32.mrb[0].mxu0
      %900 = vmatprep.mubr.bf16.mxu0 0
      %901 = vmatmul.mubr.bf16.gmra.mrb[0].mxu0 %v858
      %v902 = vpop.f32.mrb[0].mxu0
      %v903 = vadd.f32 0.0, %v902
      %v904 = vpop.f32.mrb[0].mxu0
      %v905 = vpop.f32.mrb[0].mxu0
      %v906 = vpop.f32.mrb[0].mxu0
      %907 = vdwg.mxu0
      %v908 = vadd.f32 %v816, %v895
      %v909 = vadd.f32 %v817, %v898
      %v910 = vadd.f32 %v818, %v903
      %v911 = vld [vmem:[%s300 + $0x10] sm:$0x7]
      %s912 = scalar_lea.vmem %s1, 112
      %v913 = vld [vmem:[%s912] sm:$0xf]
      %v914 = vld [vmem:[%s912 + $0x4] sm:$0xf]
      %v915 = vld [vmem:[%s912 + $0x8] sm:$0xf]
      %v916 = vld [vmem:[%s912 + $0xc] sm:$0xf]
      %v918 = vunpack.c.l.b16 %v911
      %v919 = vpack.c.b16 %v918, %v834
      %vm920 = vsmask.f32 5376
      %v922 = vshrl.u32 %v836, 16
      %v924 = vrot.slane %v922, 2
      %v925 = vshll.u32 %v836, 16
      %v927 = vrot.slane %v925, 3
      %v928 = vor.u32 %v924, %v927
      %v930 = vshrl.u32 %v919, 16
      %v932 = vrot.slane %v930, 2
      %v933 = vshll.u32 %v919, 16
      %v935 = vrot.slane %v933, 3
      %v936 = vor.u32 %v932, %v935
      %v937 = vsel %vm920, %v928, %v936
      %v942 = vunpack.c.l.b16 %v913
      %v943 = vunpack.c.l.b16 %v914
      %v944 = vunpack.c.l.b16 %v915
      %v945 = vunpack.c.l.b16 %v916
      %v946 = vpack.c.b16 %v943, %v942
      %v947 = vpack.c.b16 %v945, %v944
      %v951 = vsel %vm358, %v937, 0
      %v954 = vsel %vm358, %v936, 0
      %956 = vmatprep.subr.bf16.mxu0 0
      %957 = vmatpush1.bf16.msra.mxu0 %v946
      %958 = vmatprep.subr.bf16.mxu0 0
      %959 = vmatpush1.bf16.msra.mxu0 %v947
      %960 = vmatprep.subr.bf16.mxu0 0
      %961 = vmatpush1.bf16.msra.mxu0 0
      %962 = vmatprep.subr.bf16.mxu0 0
      %963 = vmatpush1.bf16.msra.mxu0 0
      %964 = vmatprep.subr.bf16.mxu0 0
      %965 = vmatpush1.bf16.msra.mxu0 0
      %966 = vmatprep.subr.bf16.mxu0 0
      %967 = vmatpush1.bf16.msra.mxu0 0
      %968 = vmatprep.subr.bf16.mxu0 0
      %969 = vmatpush1.bf16.msra.mxu0 0
      %970 = vmatprep.subr.bf16.mxu0 0
      %971 = vmatpush1.bf16.msra.mxu0 0
      %972 = vmatprep.subr.bf16.mxu0 0
      %973 = vmatpush1.bf16.msra.mxu0 0
      %974 = vmatprep.subr.bf16.mxu0 0
      %975 = vmatpush1.bf16.msra.mxu0 0
      %976 = vmatprep.subr.bf16.mxu0 0
      %977 = vmatpush1.bf16.msra.mxu0 0
      %978 = vmatprep.subr.bf16.mxu0 0
      %979 = vmatpush1.bf16.msra.mxu0 0
      %980 = vmatprep.subr.bf16.mxu0 0
      %981 = vmatpush1.bf16.msra.mxu0 0
      %982 = vmatprep.subr.bf16.mxu0 0
      %983 = vmatpush1.bf16.msra.mxu0 0
      %984 = vmatprep.subr.bf16.mxu0 0
      %985 = vmatpush1.bf16.msra.mxu0 0
      %986 = vmatprep.subr.bf16.mxu0 0
      %987 = vmatpush1.bf16.msra.mxu0 0
      %988 = vmatprep.mubr.bf16.mxu0 0
      %989 = vmatmul.mubr.bf16.gmra.mrb[0].mxu0 %v951
      %v990 = vpop.f32.mrb[0].mxu0
      %v991 = vadd.f32 0.0, %v990
      %v992 = vpop.f32.mrb[0].mxu0
      %v993 = vpop.f32.mrb[0].mxu0
      %v994 = vadd.f32 0.0, %v993
      %v995 = vpop.f32.mrb[0].mxu0
      %996 = vmatprep.mubr.bf16.mxu0 0
      %997 = vmatmul.mubr.bf16.gmra.mrb[0].mxu0 %v954
      %v998 = vpop.f32.mrb[0].mxu0
      %v999 = vadd.f32 0.0, %v998
      %v1000 = vpop.f32.mrb[0].mxu0
      %v1001 = vpop.f32.mrb[0].mxu0
      %v1002 = vpop.f32.mrb[0].mxu0
      %1003 = vdwg.mxu0
      %v1004 = vadd.f32 %v908, %v991
      %v1005 = vadd.f32 %v909, %v994
      %v1006 = vadd.f32 %v910, %v999
      %v1007 = vld [vmem:[%s300 + $0x4] sm:$0x8]
      %s1008 = scalar_lea.vmem %s1, 128
      %v1009 = vld [vmem:[%s1008] sm:$0xf]
      %v1010 = vld [vmem:[%s1008 + $0x4] sm:$0xf]
      %v1011 = vld [vmem:[%s1008 + $0x8] sm:$0xf]
      %v1012 = vld [vmem:[%s1008 + $0xc] sm:$0xf]
      %v1014 = vunpack.c.l.b16 %v1007
      %v1015 = vpack.c.b16 %v833, %v1014
      %v1016 = vrot.slane %v1015, 3
      %v1017 = vrot.slane %v919, 3
      %v1018 = vsel %vm574, %v1016, %v1017
      %v1023 = vunpack.c.l.b16 %v1009
      %v1024 = vunpack.c.l.b16 %v1010
      %v1025 = vunpack.c.l.b16 %v1011
      %v1026 = vunpack.c.l.b16 %v1012
      %v1027 = vpack.c.b16 %v1024, %v1023
      %v1028 = vpack.c.b16 %v1026, %v1025
      %v1032 = vsel %vm358, %v1018, 0
      %v1035 = vsel %vm358, %v1017, 0
      %1037 = vmatprep.subr.bf16.mxu0 0
      %1038 = vmatpush1.bf16.msra.mxu0 %v1027
      %1039 = vmatprep.subr.bf16.mxu0 0
      %1040 = vmatpush1.bf16.msra.mxu0 %v1028
      %1041 = vmatprep.subr.bf16.mxu0 0
      %1042 = vmatpush1.bf16.msra.mxu0 0
      %1043 = vmatprep.subr.bf16.mxu0 0
      %1044 = vmatpush1.bf16.msra.mxu0 0
      %1045 = vmatprep.subr.bf16.mxu0 0
      %1046 = vmatpush1.bf16.msra.mxu0 0
      %1047 = vmatprep.subr.bf16.mxu0 0
      %1048 = vmatpush1.bf16.msra.mxu0 0
      %1049 = vmatprep.subr.bf16.mxu0 0
      %1050 = vmatpush1.bf16.msra.mxu0 0
      %1051 = vmatprep.subr.bf16.mxu0 0
      %1052 = vmatpush1.bf16.msra.mxu0 0
      %1053 = vmatprep.subr.bf16.mxu0 0
      %1054 = vmatpush1.bf16.msra.mxu0 0
      %1055 = vmatprep.subr.bf16.mxu0 0
      %1056 = vmatpush1.bf16.msra.mxu0 0
      %1057 = vmatprep.subr.bf16.mxu0 0
      %1058 = vmatpush1.bf16.msra.mxu0 0
      %1059 = vmatprep.subr.bf16.mxu0 0
      %1060 = vmatpush1.bf16.msra.mxu0 0
      %1061 = vmatprep.subr.bf16.mxu0 0
      %1062 = vmatpush1.bf16.msra.mxu0 0
      %1063 = vmatprep.subr.bf16.mxu0 0
      %1064 = vmatpush1.bf16.msra.mxu0 0
      %1065 = vmatprep.subr.bf16.mxu0 0
      %1066 = vmatpush1.bf16.msra.mxu0 0
      %1067 = vmatprep.subr.bf16.mxu0 0
      %1068 = vmatpush1.bf16.msra.mxu0 0
      %1069 = vmatprep.mubr.bf16.mxu0 0
      %1070 = vmatmul.mubr.bf16.gmra.mrb[0].mxu0 %v1032
      %v1071 = vpop.f32.mrb[0].mxu0
      %v1072 = vadd.f32 0.0, %v1071
      %v1073 = vpop.f32.mrb[0].mxu0
      %v1074 = vpop.f32.mrb[0].mxu0
      %v1075 = vadd.f32 0.0, %v1074
      %v1076 = vpop.f32.mrb[0].mxu0
      %1077 = vmatprep.mubr.bf16.mxu0 0
      %1078 = vmatmul.mubr.bf16.gmra.mrb[0].mxu0 %v1035
      %v1079 = vpop.f32.mrb[0].mxu0
      %v1080 = vadd.f32 0.0, %v1079
      %v1081 = vpop.f32.mrb[0].mxu0
      %v1082 = vpop.f32.mrb[0].mxu0
      %v1083 = vpop.f32.mrb[0].mxu0
      %1084 = vdwg.mxu0
      %v1085 = vadd.f32 %v1004, %v1072
      %v1086 = vadd.f32 %v1005, %v1075
      %v1087 = vadd.f32 %v1006, %v1080
      %v1088 = vld [vmem:[%s2] sm:$0x1]
      %v1090 = vlaneseq
      %v1091 = vshrl.u32 %v1090, 7
      %v1092 = vsub.s32 0, %v1091
      %v1093 = vrot.slane %v1088, %v1092
      %v1095 = vadd.f32 %v1085, %v1093
      %v1096 = vadd.f32 %v1086, %v1093
      %v1097 = vadd.f32 %v1087, %v1093
      %1098 = vst.msk [vmem:[#allocation2] sm:$0xff] %vm358, 0.0
      %1099 = vst.msk [vmem:[#allocation2 + $0x8] sm:$0xff] %vm358, 0.0
      %1100 = vst.msk [vmem:[#allocation2 + $0x10] sm:$0xff] %vm358, 0.0
      %1101 = vst.msk [vmem:[#allocation2 + $0x18] sm:$0xff] %vm358, 0.0
      %1102 = vst.msk [vmem:[#allocation2 + $0x20] sm:$0xff] %vm358, 0.0
      %vm1103 = vcmask 254976
      %1104 = vst.msk [vmem:[#allocation2 + $0x28] sm:$0x3] %vm1103, 0.0
      %v1105 = vld [vmem:[%s3] sm:$0xff]
      %v1106 = vld [vmem:[%s3 + $0x8] sm:$0xff]
      %v1107 = vld [vmem:[%s3 + $0x10] sm:$0xff]
      %1109 = vset.pattern.permute.xlu0 0
      %1110 = vperm.xlu0 %1109, %v1105
      %v1111 = vpop.permute.xlu0 %1110
      %1114 = vset.pattern.permute.xlu0 0
      %1115 = vperm.xlu0 %1114, %v1106
      %v1116 = vpop.permute.xlu0 %1115
      %1119 = vset.pattern.permute.xlu0 0
      %1120 = vperm.xlu0 %1119, %v1107
      %v1121 = vpop.permute.xlu0 %1120
      %v1123 = vmul.f32 %v1095, %v1111
      %v1124 = vmul.f32 %v1096, %v1116
      %v1125 = vmul.f32 %v1097, %v1121
      %1126 = vst.msk [vmem:[#allocation2 + $0x7] sm:$0xff] %vm358, %v1123
      %1127 = vst.msk [vmem:[#allocation2 + $0xf] sm:$0xff] %vm358, %v1124
      %1128 = vst.msk [vmem:[#allocation2 + $0x17] sm:$0xff] %vm358, %v1125
      %v1129 = vld [vmem:[#allocation2] sm:$0xff]
      %v1130 = vld [vmem:[#allocation2 + $0x8] sm:$0xff]
      %v1131 = vld [vmem:[#allocation2 + $0x10] sm:$0xff]
      %v1132 = vld [vmem:[#allocation2 + $0x18] sm:$0xff]
      %v1133 = vld [vmem:[#allocation2 + $0x20] sm:$0xff]
      %v1134 = vld [vmem:[#allocation2 + $0x28] sm:$0x3]
      %v1135 = vmax.f32 %v1129, 0.0
      %v1136 = vmax.f32 %v1130, 0.0
      %v1137 = vmax.f32 %v1131, 0.0
      %v1138 = vmax.f32 %v1132, 0.0
      %v1139 = vmax.f32 %v1133, 0.0
      %v1140 = vmax.f32 %v1134, 0.0
      %v1141 = vpack.c.bf16 %v1136, %v1135
      %v1142 = vpack.c.bf16 %v1138, %v1137
      %v1143 = vpack.c.bf16 %v1140, %v1139
      %v1147 = vunpack.c.l.b16 %v1141
      %v1148 = vunpack.c.h.b16 %v1141
      %v1149 = vunpack.c.l.b16 %v1142
      %v1150 = vunpack.c.h.b16 %v1142
      %v1151 = vunpack.c.l.b16 %v1143
      %v1152 = vunpack.c.h.b16 %v1143
      %v1153 = vpack.c.b16 %v1147, %v1147
      %v1154 = vpack.c.b16 %v1148, %v1148
      %v1155 = vpack.c.b16 %v1149, %v1149
      %v1156 = vpack.c.b16 %v1150, %v1150
      %v1157 = vpack.c.b16 %v1151, %v1151
      %v1158 = vpack.c.b16 %v1152, %v1152
      %vm1165 = vcmask 257024
      %1166 = vst.msk [vmem:[#allocation3] sm:$0xf] %vm1165, %v1153
      %1167 = vst.msk [vmem:[#allocation3 + $0x4] sm:$0xf] %vm1165, %v1154
      %1168 = vst.msk [vmem:[#allocation3 + $0x8] sm:$0xf] %vm1165, %v1155
      %1169 = vst.msk [vmem:[#allocation3 + $0xc] sm:$0xf] %vm1165, %v1156
      %1170 = vst.msk [vmem:[#allocation3 + $0x10] sm:$0xf] %vm1165, %v1157
      %vm1171 = vcmask 253952
      %1172 = vst.msk [vmem:[#allocation3 + $0x14] sm:$0x1] %vm1171, %v1158
      %v1173 = vld [vmem:[#allocation3] sm:$0xf]
      %v1174 = vld [vmem:[#allocation3 + $0x4] sm:$0xf]
      %v1175 = vld [vmem:[#allocation3 + $0x8] sm:$0xf]
      %v1176 = vld [vmem:[%s4] sm:$0xf]
      %v1177 = vld [vmem:[%s4 + $0x4] sm:$0xf]
      %v1178 = vld [vmem:[%s4 + $0x8] sm:$0xf]
      %v1179 = vld [vmem:[%s4 + $0xc] sm:$0xf]
      %v1180 = vld [vmem:[#allocation3 + $0xc] sm:$0x1]
      %s1181 = scalar_lea.vmem %s4, 16
      %v1182 = vld [vmem:[%s1181] sm:$0xf]
      %v1183 = vld [vmem:[%s1181 + $0x4] sm:$0xf]
      %v1184 = vld [vmem:[%s1181 + $0x8] sm:$0xf]
      %v1185 = vld [vmem:[%s1181 + $0xc] sm:$0xf]
      %v1190 = vunpack.c.l.b16 %v1173
      %v1191 = vunpack.c.l.b16 %v1174
      %v1192 = vunpack.c.l.b16 %v1175
      %v1193 = vunpack.c.l.b16 %v1180
      %v1194 = vpack.c.b16 %v1191, %v1190
      %v1195 = vpack.c.b16 %v1193, %v1192
      %v1197 = vshrl.u32 %v1194, 16
      %v1199 = vshll.u32 %v1194, 16
      %v1201 = vrot.slane %v1199, 1
      %v1202 = vor.u32 %v1197, %v1201
      %v1204 = vshll.u32 %v1195, 16
      %v1206 = vrot.slane %v1204, 1
      %v1207 = vsel %vm330, %v1202, %v1206
      %v1208 = vshrl.u32 %v1195, 16
      %v1210 = vor.u32 %v1208, %v1206
      %v1215 = vunpack.c.l.b16 %v1182
      %v1216 = vunpack.c.l.b16 %v1183
      %v1217 = vunpack.c.l.b16 %v1184
      %v1218 = vunpack.c.l.b16 %v1185
      %v1219 = vpack.c.b16 %v1216, %v1215
      %v1220 = vpack.c.b16 %v1218, %v1217
      %v1224 = vsel %vm358, %v1207, 0
      %v1227 = vsel %vm358, %v1210, 0
      %1229 = vmatprep.subr.bf16.mxu0 0
      %1230 = vmatpush1.bf16.msra.mxu0 %v1219
      %1231 = vmatprep.subr.bf16.mxu0 0
      %1232 = vmatpush1.bf16.msra.mxu0 %v1220
      %1233 = vmatprep.subr.bf16.mxu0 0
      %1234 = vmatpush1.bf16.msra.mxu0 0
      %1235 = vmatprep.subr.bf16.mxu0 0
      %1236 = vmatpush1.bf16.msra.mxu0 0
      %1237 = vmatprep.subr.bf16.mxu0 0
      %1238 = vmatpush1.bf16.msra.mxu0 0
      %1239 = vmatprep.subr.bf16.mxu0 0
      %1240 = vmatpush1.bf16.msra.mxu0 0
      %1241 = vmatprep.subr.bf16.mxu0 0
      %1242 = vmatpush1.bf16.msra.mxu0 0
      %1243 = vmatprep.subr.bf16.mxu0 0
      %1244 = vmatpush1.bf16.msra.mxu0 0
      %1245 = vmatprep.subr.bf16.mxu0 0
      %1246 = vmatpush1.bf16.msra.mxu0 0
      %1247 = vmatprep.subr.bf16.mxu0 0
      %1248 = vmatpush1.bf16.msra.mxu0 0
      %1249 = vmatprep.subr.bf16.mxu0 0
      %1250 = vmatpush1.bf16.msra.mxu0 0
      %1251 = vmatprep.subr.bf16.mxu0 0
      %1252 = vmatpush1.bf16.msra.mxu0 0
      %1253 = vmatprep.subr.bf16.mxu0 0
      %1254 = vmatpush1.bf16.msra.mxu0 0
      %1255 = vmatprep.subr.bf16.mxu0 0
      %1256 = vmatpush1.bf16.msra.mxu0 0
      %1257 = vmatprep.subr.bf16.mxu0 0
      %1258 = vmatpush1.bf16.msra.mxu0 0
      %1259 = vmatprep.subr.bf16.mxu0 0
      %1260 = vmatpush1.bf16.msra.mxu0 0
      %1261 = vmatprep.mubr.bf16.mxu0 0
      %1262 = vmatmul.mubr.bf16.gmra.mrb[0].mxu0 %v1224
      %v1263 = vpop.f32.mrb[0].mxu0
      %v1264 = vadd.f32 0.0, %v1263
      %v1265 = vpop.f32.mrb[0].mxu0
      %v1266 = vpop.f32.mrb[0].mxu0
      %v1267 = vadd.f32 0.0, %v1266
      %v1268 = vpop.f32.mrb[0].mxu0
      %1269 = vmatprep.mubr.bf16.mxu0 0
      %1270 = vmatmul.mubr.bf16.gmra.mrb[0].mxu0 %v1227
      %v1271 = vpop.f32.mrb[0].mxu0
      %v1272 = vadd.f32 0.0, %v1271
      %v1273 = vpop.f32.mrb[0].mxu0
      %v1274 = vpop.f32.mrb[0].mxu0
      %v1275 = vpop.f32.mrb[0].mxu0
      %1276 = vdwg.mxu0
      %v1277 = vpack.c.b16 %v1192, %v1192
      %v1282 = vunpack.c.l.b16 %v1176
      %v1283 = vunpack.c.l.b16 %v1177
      %v1284 = vunpack.c.l.b16 %v1178
      %v1285 = vunpack.c.l.b16 %v1179
      %v1286 = vpack.c.b16 %v1283, %v1282
      %v1287 = vpack.c.b16 %v1285, %v1284
      %v1290 = vsel %vm358, %v1194, 0
      %v1293 = vsel %vm358, %v1277, 0
      %1295 = vmatprep.subr.bf16.mxu0 0
      %1296 = vmatpush1.bf16.msra.mxu0 %v1286
      %1297 = vmatprep.subr.bf16.mxu0 0
      %1298 = vmatpush1.bf16.msra.mxu0 %v1287
      %1299 = vmatprep.subr.bf16.mxu0 0
      %1300 = vmatpush1.bf16.msra.mxu0 0
      %1301 = vmatprep.subr.bf16.mxu0 0
      %1302 = vmatpush1.bf16.msra.mxu0 0
      %1303 = vmatprep.subr.bf16.mxu0 0
      %1304 = vmatpush1.bf16.msra.mxu0 0
      %1305 = vmatprep.subr.bf16.mxu0 0
      %1306 = vmatpush1.bf16.msra.mxu0 0
      %1307 = vmatprep.subr.bf16.mxu0 0
      %1308 = vmatpush1.bf16.msra.mxu0 0
      %1309 = vmatprep.subr.bf16.mxu0 0
      %1310 = vmatpush1.bf16.msra.mxu0 0
      %1311 = vmatprep.subr.bf16.mxu0 0
      %1312 = vmatpush1.bf16.msra.mxu0 0
      %1313 = vmatprep.subr.bf16.mxu0 0
      %1314 = vmatpush1.bf16.msra.mxu0 0
      %1315 = vmatprep.subr.bf16.mxu0 0
      %1316 = vmatpush1.bf16.msra.mxu0 0
      %1317 = vmatprep.subr.bf16.mxu0 0
      %1318 = vmatpush1.bf16.msra.mxu0 0
      %1319 = vmatprep.subr.bf16.mxu0 0
      %1320 = vmatpush1.bf16.msra.mxu0 0
      %1321 = vmatprep.subr.bf16.mxu0 0
      %1322 = vmatpush1.bf16.msra.mxu0 0
      %1323 = vmatprep.subr.bf16.mxu0 0
      %1324 = vmatpush1.bf16.msra.mxu0 0
      %1325 = vmatprep.subr.bf16.mxu0 0
      %1326 = vmatpush1.bf16.msra.mxu0 0
      %1327 = vmatprep.mubr.bf16.mxu0 0
      %1328 = vmatmul.mubr.bf16.gmra.mrb[0].mxu0 %v1290
      %v1329 = vpop.f32.mrb[0].mxu0
      %v1330 = vadd.f32 %v1264, %v1329
      %v1331 = vpop.f32.mrb[0].mxu0
      %v1332 = vpop.f32.mrb[0].mxu0
      %v1333 = vadd.f32 %v1267, %v1332
      %v1334 = vpop.f32.mrb[0].mxu0
      %1335 = vmatprep.mubr.bf16.mxu0 0
      %1336 = vmatmul.mubr.bf16.gmra.mrb[0].mxu0 %v1293
      %v1337 = vpop.f32.mrb[0].mxu0
      %v1338 = vadd.f32 %v1272, %v1337
      %v1339 = vpop.f32.mrb[0].mxu0
      %v1340 = vpop.f32.mrb[0].mxu0
      %v1341 = vpop.f32.mrb[0].mxu0
      %1342 = vdwg.mxu0
      %v1343 = vld [vmem:[#allocation3] sm:$0xe]
      %s1344 = scalar_lea.vmem %s4, 32
      %v1345 = vld [vmem:[%s1344] sm:$0xf]
      %v1346 = vld [vmem:[%s1344 + $0x4] sm:$0xf]
      %v1347 = vld [vmem:[%s1344 + $0x8] sm:$0xf]
      %v1348 = vld [vmem:[%s1344 + $0xc] sm:$0xf]
      %v1350 = vunpack.c.l.b16 %v1343
      %v1351 = vpack.c.b16 %v1191, %v1350
      %v1352 = vrot.slane %v1351, 1
      %v1353 = vrot.slane %v1195, 1
      %v1354 = vsel %vm488, %v1352, %v1353
      %v1359 = vunpack.c.l.b16 %v1345
      %v1360 = vunpack.c.l.b16 %v1346
      %v1361 = vunpack.c.l.b16 %v1347
      %v1362 = vunpack.c.l.b16 %v1348
      %v1363 = vpack.c.b16 %v1360, %v1359
      %v1364 = vpack.c.b16 %v1362, %v1361
      %v1368 = vsel %vm358, %v1354, 0
      %v1371 = vsel %vm358, %v1353, 0
      %1373 = vmatprep.subr.bf16.mxu0 0
      %1374 = vmatpush1.bf16.msra.mxu0 %v1363
      %1375 = vmatprep.subr.bf16.mxu0 0
      %1376 = vmatpush1.bf16.msra.mxu0 %v1364
      %1377 = vmatprep.subr.bf16.mxu0 0
      %1378 = vmatpush1.bf16.msra.mxu0 0
      %1379 = vmatprep.subr.bf16.mxu0 0
      %1380 = vmatpush1.bf16.msra.mxu0 0
      %1381 = vmatprep.subr.bf16.mxu0 0
      %1382 = vmatpush1.bf16.msra.mxu0 0
      %1383 = vmatprep.subr.bf16.mxu0 0
      %1384 = vmatpush1.bf16.msra.mxu0 0
      %1385 = vmatprep.subr.bf16.mxu0 0
      %1386 = vmatpush1.bf16.msra.mxu0 0
      %1387 = vmatprep.subr.bf16.mxu0 0
      %1388 = vmatpush1.bf16.msra.mxu0 0
      %1389 = vmatprep.subr.bf16.mxu0 0
      %1390 = vmatpush1.bf16.msra.mxu0 0
      %1391 = vmatprep.subr.bf16.mxu0 0
      %1392 = vmatpush1.bf16.msra.mxu0 0
      %1393 = vmatprep.subr.bf16.mxu0 0
      %1394 = vmatpush1.bf16.msra.mxu0 0
      %1395 = vmatprep.subr.bf16.mxu0 0
      %1396 = vmatpush1.bf16.msra.mxu0 0
      %1397 = vmatprep.subr.bf16.mxu0 0
      %1398 = vmatpush1.bf16.msra.mxu0 0
      %1399 = vmatprep.subr.bf16.mxu0 0
      %1400 = vmatpush1.bf16.msra.mxu0 0
      %1401 = vmatprep.subr.bf16.mxu0 0
      %1402 = vmatpush1.bf16.msra.mxu0 0
      %1403 = vmatprep.subr.bf16.mxu0 0
      %1404 = vmatpush1.bf16.msra.mxu0 0
      %1405 = vmatprep.mubr.bf16.mxu0 0
      %1406 = vmatmul.mubr.bf16.gmra.mrb[0].mxu0 %v1368
      %v1407 = vpop.f32.mrb[0].mxu0
      %v1408 = vadd.f32 0.0, %v1407
      %v1409 = vpop.f32.mrb[0].mxu0
      %v1410 = vpop.f32.mrb[0].mxu0
      %v1411 = vadd.f32 0.0, %v1410
      %v1412 = vpop.f32.mrb[0].mxu0
      %1413 = vmatprep.mubr.bf16.mxu0 0
      %1414 = vmatmul.mubr.bf16.gmra.mrb[0].mxu0 %v1371
      %v1415 = vpop.f32.mrb[0].mxu0
      %v1416 = vadd.f32 0.0, %v1415
      %v1417 = vpop.f32.mrb[0].mxu0
      %v1418 = vpop.f32.mrb[0].mxu0
      %v1419 = vpop.f32.mrb[0].mxu0
      %1420 = vdwg.mxu0
      %v1421 = vadd.f32 %v1330, %v1408
      %v1422 = vadd.f32 %v1333, %v1411
      %v1423 = vadd.f32 %v1338, %v1416
      %v1424 = vld [vmem:[#allocation3] sm:$0x8]
      %v1425 = vld [vmem:[#allocation3 + $0xc] sm:$0x7]
      %s1426 = scalar_lea.vmem %s4, 48
      %v1427 = vld [vmem:[%s1426] sm:$0xf]
      %v1428 = vld [vmem:[%s1426 + $0x4] sm:$0xf]
      %v1429 = vld [vmem:[%s1426 + $0x8] sm:$0xf]
      %v1430 = vld [vmem:[%s1426 + $0xc] sm:$0xf]
      %v1433 = vunpack.c.l.b16 %v1424
      %v1434 = vunpack.c.l.b16 %v1425
      %v1435 = vpack.c.b16 %v1191, %v1433
      %v1436 = vpack.c.b16 %v1434, %v1192
      %v1437 = vrot.slane %v1435, 3
      %v1438 = vrot.slane %v1436, 3
      %v1439 = vsel %vm574, %v1437, %v1438
      %v1444 = vunpack.c.l.b16 %v1427
      %v1445 = vunpack.c.l.b16 %v1428
      %v1446 = vunpack.c.l.b16 %v1429
      %v1447 = vunpack.c.l.b16 %v1430
      %v1448 = vpack.c.b16 %v1445, %v1444
      %v1449 = vpack.c.b16 %v1447, %v1446
      %v1453 = vsel %vm358, %v1439, 0
      %v1456 = vsel %vm358, %v1438, 0
      %1458 = vmatprep.subr.bf16.mxu0 0
      %1459 = vmatpush1.bf16.msra.mxu0 %v1448
      %1460 = vmatprep.subr.bf16.mxu0 0
      %1461 = vmatpush1.bf16.msra.mxu0 %v1449
      %1462 = vmatprep.subr.bf16.mxu0 0
      %1463 = vmatpush1.bf16.msra.mxu0 0
      %1464 = vmatprep.subr.bf16.mxu0 0
      %1465 = vmatpush1.bf16.msra.mxu0 0
      %1466 = vmatprep.subr.bf16.mxu0 0
      %1467 = vmatpush1.bf16.msra.mxu0 0
      %1468 = vmatprep.subr.bf16.mxu0 0
      %1469 = vmatpush1.bf16.msra.mxu0 0
      %1470 = vmatprep.subr.bf16.mxu0 0
      %1471 = vmatpush1.bf16.msra.mxu0 0
      %1472 = vmatprep.subr.bf16.mxu0 0
      %1473 = vmatpush1.bf16.msra.mxu0 0
      %1474 = vmatprep.subr.bf16.mxu0 0
      %1475 = vmatpush1.bf16.msra.mxu0 0
      %1476 = vmatprep.subr.bf16.mxu0 0
      %1477 = vmatpush1.bf16.msra.mxu0 0
      %1478 = vmatprep.subr.bf16.mxu0 0
      %1479 = vmatpush1.bf16.msra.mxu0 0
      %1480 = vmatprep.subr.bf16.mxu0 0
      %1481 = vmatpush1.bf16.msra.mxu0 0
      %1482 = vmatprep.subr.bf16.mxu0 0
      %1483 = vmatpush1.bf16.msra.mxu0 0
      %1484 = vmatprep.subr.bf16.mxu0 0
      %1485 = vmatpush1.bf16.msra.mxu0 0
      %1486 = vmatprep.subr.bf16.mxu0 0
      %1487 = vmatpush1.bf16.msra.mxu0 0
      %1488 = vmatprep.subr.bf16.mxu0 0
      %1489 = vmatpush1.bf16.msra.mxu0 0
      %1490 = vmatprep.mubr.bf16.mxu0 0
      %1491 = vmatmul.mubr.bf16.gmra.mrb[0].mxu0 %v1453
      %v1492 = vpop.f32.mrb[0].mxu0
      %v1493 = vadd.f32 0.0, %v1492
      %v1494 = vpop.f32.mrb[0].mxu0
      %v1495 = vpop.f32.mrb[0].mxu0
      %v1496 = vadd.f32 0.0, %v1495
      %v1497 = vpop.f32.mrb[0].mxu0
      %1498 = vmatprep.mubr.bf16.mxu0 0
      %1499 = vmatmul.mubr.bf16.gmra.mrb[0].mxu0 %v1456
      %v1500 = vpop.f32.mrb[0].mxu0
      %v1501 = vadd.f32 0.0, %v1500
      %v1502 = vpop.f32.mrb[0].mxu0
      %v1503 = vpop.f32.mrb[0].mxu0
      %v1504 = vpop.f32.mrb[0].mxu0
      %1505 = vdwg.mxu0
      %v1506 = vadd.f32 %v1421, %v1493
      %v1507 = vadd.f32 %v1422, %v1496
      %v1508 = vadd.f32 %v1423, %v1501
      %v1509 = vld [vmem:[#allocation3 + $0xc] sm:$0xf]
      %s1510 = scalar_lea.vmem %s4, 64
      %v1511 = vld [vmem:[%s1510] sm:$0xf]
      %v1512 = vld [vmem:[%s1510 + $0x4] sm:$0xf]
      %v1513 = vld [vmem:[%s1510 + $0x8] sm:$0xf]
      %v1514 = vld [vmem:[%s1510 + $0xc] sm:$0xf]
      %v1516 = vunpack.c.l.b16 %v1509
      %v1517 = vpack.c.b16 %v1516, %v1192
      %v1519 = vshrl.u32 %v1435, 16
      %v1521 = vrot.slane %v1519, 3
      %v1522 = vshll.u32 %v1435, 16
      %v1524 = vrot.slane %v1522, 4
      %v1525 = vor.u32 %v1521, %v1524
      %v1527 = vshrl.u32 %v1517, 16
      %v1529 = vrot.slane %v1527, 3
      %v1530 = vshll.u32 %v1517, 16
      %v1532 = vrot.slane %v1530, 4
      %v1533 = vor.u32 %v1529, %v1532
      %v1534 = vsel %vm656, %v1525, %v1533
      %v1539 = vunpack.c.l.b16 %v1511
      %v1540 = vunpack.c.l.b16 %v1512
      %v1541 = vunpack.c.l.b16 %v1513
      %v1542 = vunpack.c.l.b16 %v1514
      %v1543 = vpack.c.b16 %v1540, %v1539
      %v1544 = vpack.c.b16 %v1542, %v1541
      %v1548 = vsel %vm358, %v1534, 0
      %v1551 = vsel %vm358, %v1533, 0
      %1553 = vmatprep.subr.bf16.mxu0 0
      %1554 = vmatpush1.bf16.msra.mxu0 %v1543
      %1555 = vmatprep.subr.bf16.mxu0 0
      %1556 = vmatpush1.bf16.msra.mxu0 %v1544
      %1557 = vmatprep.subr.bf16.mxu0 0
      %1558 = vmatpush1.bf16.msra.mxu0 0
      %1559 = vmatprep.subr.bf16.mxu0 0
      %1560 = vmatpush1.bf16.msra.mxu0 0
      %1561 = vmatprep.subr.bf16.mxu0 0
      %1562 = vmatpush1.bf16.msra.mxu0 0
      %1563 = vmatprep.subr.bf16.mxu0 0
      %1564 = vmatpush1.bf16.msra.mxu0 0
      %1565 = vmatprep.subr.bf16.mxu0 0
      %1566 = vmatpush1.bf16.msra.mxu0 0
      %1567 = vmatprep.subr.bf16.mxu0 0
      %1568 = vmatpush1.bf16.msra.mxu0 0
      %1569 = vmatprep.subr.bf16.mxu0 0
      %1570 = vmatpush1.bf16.msra.mxu0 0
      %1571 = vmatprep.subr.bf16.mxu0 0
      %1572 = vmatpush1.bf16.msra.mxu0 0
      %1573 = vmatprep.subr.bf16.mxu0 0
      %1574 = vmatpush1.bf16.msra.mxu0 0
      %1575 = vmatprep.subr.bf16.mxu0 0
      %1576 = vmatpush1.bf16.msra.mxu0 0
      %1577 = vmatprep.subr.bf16.mxu0 0
      %1578 = vmatpush1.bf16.msra.mxu0 0
      %1579 = vmatprep.subr.bf16.mxu0 0
      %1580 = vmatpush1.bf16.msra.mxu0 0
      %1581 = vmatprep.subr.bf16.mxu0 0
      %1582 = vmatpush1.bf16.msra.mxu0 0
      %1583 = vmatprep.subr.bf16.mxu0 0
      %1584 = vmatpush1.bf16.msra.mxu0 0
      %1585 = vmatprep.mubr.bf16.mxu0 0
      %1586 = vmatmul.mubr.bf16.gmra.mrb[0].mxu0 %v1548
      %v1587 = vpop.f32.mrb[0].mxu0
      %v1588 = vadd.f32 0.0, %v1587
      %v1589 = vpop.f32.mrb[0].mxu0
      %v1590 = vpop.f32.mrb[0].mxu0
      %v1591 = vadd.f32 0.0, %v1590
      %v1592 = vpop.f32.mrb[0].mxu0
      %1593 = vmatprep.mubr.bf16.mxu0 0
      %1594 = vmatmul.mubr.bf16.gmra.mrb[0].mxu0 %v1551
      %v1595 = vpop.f32.mrb[0].mxu0
      %v1596 = vadd.f32 0.0, %v1595
      %v1597 = vpop.f32.mrb[0].mxu0
      %v1598 = vpop.f32.mrb[0].mxu0
      %v1599 = vpop.f32.mrb[0].mxu0
      %1600 = vdwg.mxu0
      %v1601 = vadd.f32 %v1506, %v1588
      %v1602 = vadd.f32 %v1507, %v1591
      %v1603 = vadd.f32 %v1508, %v1596
      %s1604 = scalar_lea.vmem %s4, 80
      %v1605 = vld [vmem:[%s1604] sm:$0xf]
      %v1606 = vld [vmem:[%s1604 + $0x4] sm:$0xf]
      %v1607 = vld [vmem:[%s1604 + $0x8] sm:$0xf]
      %v1608 = vld [vmem:[%s1604 + $0xc] sm:$0xf]
      %v1609 = vpack.c.b16 %v1192, %v1191
      %v1610 = vpack.c.b16 %v1516, %v1516
      %v1615 = vunpack.c.l.b16 %v1605
      %v1616 = vunpack.c.l.b16 %v1606
      %v1617 = vunpack.c.l.b16 %v1607
      %v1618 = vunpack.c.l.b16 %v1608
      %v1619 = vpack.c.b16 %v1616, %v1615
      %v1620 = vpack.c.b16 %v1618, %v1617
      %v1624 = vsel %vm358, %v1609, 0
      %v1627 = vsel %vm358, %v1610, 0
      %1629 = vmatprep.subr.bf16.mxu0 0
      %1630 = vmatpush1.bf16.msra.mxu0 %v1619
      %1631 = vmatprep.subr.bf16.mxu0 0
      %1632 = vmatpush1.bf16.msra.mxu0 %v1620
      %1633 = vmatprep.subr.bf16.mxu0 0
      %1634 = vmatpush1.bf16.msra.mxu0 0
      %1635 = vmatprep.subr.bf16.mxu0 0
      %1636 = vmatpush1.bf16.msra.mxu0 0
      %1637 = vmatprep.subr.bf16.mxu0 0
      %1638 = vmatpush1.bf16.msra.mxu0 0
      %1639 = vmatprep.subr.bf16.mxu0 0
      %1640 = vmatpush1.bf16.msra.mxu0 0
      %1641 = vmatprep.subr.bf16.mxu0 0
      %1642 = vmatpush1.bf16.msra.mxu0 0
      %1643 = vmatprep.subr.bf16.mxu0 0
      %1644 = vmatpush1.bf16.msra.mxu0 0
      %1645 = vmatprep.subr.bf16.mxu0 0
      %1646 = vmatpush1.bf16.msra.mxu0 0
      %1647 = vmatprep.subr.bf16.mxu0 0
      %1648 = vmatpush1.bf16.msra.mxu0 0
      %1649 = vmatprep.subr.bf16.mxu0 0
      %1650 = vmatpush1.bf16.msra.mxu0 0
      %1651 = vmatprep.subr.bf16.mxu0 0
      %1652 = vmatpush1.bf16.msra.mxu0 0
      %1653 = vmatprep.subr.bf16.mxu0 0
      %1654 = vmatpush1.bf16.msra.mxu0 0
      %1655 = vmatprep.subr.bf16.mxu0 0
      %1656 = vmatpush1.bf16.msra.mxu0 0
      %1657 = vmatprep.subr.bf16.mxu0 0
      %1658 = vmatpush1.bf16.msra.mxu0 0
      %1659 = vmatprep.subr.bf16.mxu0 0
      %1660 = vmatpush1.bf16.msra.mxu0 0
      %1661 = vmatprep.mubr.bf16.mxu0 0
      %1662 = vmatmul.mubr.bf16.gmra.mrb[0].mxu0 %v1624
      %v1663 = vpop.f32.mrb[0].mxu0
      %v1664 = vadd.f32 0.0, %v1663
      %v1665 = vpop.f32.mrb[0].mxu0
      %v1666 = vpop.f32.mrb[0].mxu0
      %v1667 = vadd.f32 0.0, %v1666
      %v1668 = vpop.f32.mrb[0].mxu0
      %1669 = vmatprep.mubr.bf16.mxu0 0
      %1670 = vmatmul.mubr.bf16.gmra.mrb[0].mxu0 %v1627
      %v1671 = vpop.f32.mrb[0].mxu0
      %v1672 = vadd.f32 0.0, %v1671
      %v1673 = vpop.f32.mrb[0].mxu0
      %v1674 = vpop.f32.mrb[0].mxu0
      %v1675 = vpop.f32.mrb[0].mxu0
      %1676 = vdwg.mxu0
      %v1677 = vadd.f32 %v1601, %v1664
      %v1678 = vadd.f32 %v1602, %v1667
      %v1679 = vadd.f32 %v1603, %v1672
      %v1680 = vld [vmem:[#allocation3 + $0x4] sm:$0xc]
      %v1681 = vld [vmem:[#allocation3 + $0x8] sm:$0xf]
      %v1682 = vld [vmem:[#allocation3 + $0xc] sm:$0xf]
      %v1683 = vld [vmem:[#allocation3 + $0x10] sm:$0x3]
      %s1684 = scalar_lea.vmem %s4, 96
      %v1685 = vld [vmem:[%s1684] sm:$0xf]
      %v1686 = vld [vmem:[%s1684 + $0x4] sm:$0xf]
      %v1687 = vld [vmem:[%s1684 + $0x8] sm:$0xf]
      %v1688 = vld [vmem:[%s1684 + $0xc] sm:$0xf]
      %v1693 = vunpack.c.l.b16 %v1680
      %v1694 = vunpack.c.l.b16 %v1681
      %v1695 = vunpack.c.l.b16 %v1682
      %v1696 = vunpack.c.l.b16 %v1683
      %v1697 = vpack.c.b16 %v1694, %v1693
      %v1698 = vpack.c.b16 %v1696, %v1695
      %v1699 = vrot.slane %v1697, 2
      %v1700 = vrot.slane %v1698, 2
      %v1701 = vsel %vm838, %v1699, %v1700
      %v1706 = vunpack.c.l.b16 %v1685
      %v1707 = vunpack.c.l.b16 %v1686
      %v1708 = vunpack.c.l.b16 %v1687
      %v1709 = vunpack.c.l.b16 %v1688
      %v1710 = vpack.c.b16 %v1707, %v1706
      %v1711 = vpack.c.b16 %v1709, %v1708
      %v1715 = vsel %vm358, %v1701, 0
      %v1718 = vsel %vm358, %v1700, 0
      %1720 = vmatprep.subr.bf16.mxu0 0
      %1721 = vmatpush1.bf16.msra.mxu0 %v1710
      %1722 = vmatprep.subr.bf16.mxu0 0
      %1723 = vmatpush1.bf16.msra.mxu0 %v1711
      %1724 = vmatprep.subr.bf16.mxu0 0
      %1725 = vmatpush1.bf16.msra.mxu0 0
      %1726 = vmatprep.subr.bf16.mxu0 0
      %1727 = vmatpush1.bf16.msra.mxu0 0
      %1728 = vmatprep.subr.bf16.mxu0 0
      %1729 = vmatpush1.bf16.msra.mxu0 0
      %1730 = vmatprep.subr.bf16.mxu0 0
      %1731 = vmatpush1.bf16.msra.mxu0 0
      %1732 = vmatprep.subr.bf16.mxu0 0
      %1733 = vmatpush1.bf16.msra.mxu0 0
      %1734 = vmatprep.subr.bf16.mxu0 0
      %1735 = vmatpush1.bf16.msra.mxu0 0
      %1736 = vmatprep.subr.bf16.mxu0 0
      %1737 = vmatpush1.bf16.msra.mxu0 0
      %1738 = vmatprep.subr.bf16.mxu0 0
      %1739 = vmatpush1.bf16.msra.mxu0 0
      %1740 = vmatprep.subr.bf16.mxu0 0
      %1741 = vmatpush1.bf16.msra.mxu0 0
      %1742 = vmatprep.subr.bf16.mxu0 0
      %1743 = vmatpush1.bf16.msra.mxu0 0
      %1744 = vmatprep.subr.bf16.mxu0 0
      %1745 = vmatpush1.bf16.msra.mxu0 0
      %1746 = vmatprep.subr.bf16.mxu0 0
      %1747 = vmatpush1.bf16.msra.mxu0 0
      %1748 = vmatprep.subr.bf16.mxu0 0
      %1749 = vmatpush1.bf16.msra.mxu0 0
      %1750 = vmatprep.subr.bf16.mxu0 0
      %1751 = vmatpush1.bf16.msra.mxu0 0
      %1752 = vmatprep.mubr.bf16.mxu0 0
      %1753 = vmatmul.mubr.bf16.gmra.mrb[0].mxu0 %v1715
      %v1754 = vpop.f32.mrb[0].mxu0
      %v1755 = vadd.f32 0.0, %v1754
      %v1756 = vpop.f32.mrb[0].mxu0
      %v1757 = vpop.f32.mrb[0].mxu0
      %v1758 = vadd.f32 0.0, %v1757
      %v1759 = vpop.f32.mrb[0].mxu0
      %1760 = vmatprep.mubr.bf16.mxu0 0
      %1761 = vmatmul.mubr.bf16.gmra.mrb[0].mxu0 %v1718
      %v1762 = vpop.f32.mrb[0].mxu0
      %v1763 = vadd.f32 0.0, %v1762
      %v1764 = vpop.f32.mrb[0].mxu0
      %v1765 = vpop.f32.mrb[0].mxu0
      %v1766 = vpop.f32.mrb[0].mxu0
      %1767 = vdwg.mxu0
      %v1768 = vadd.f32 %v1677, %v1755
      %v1769 = vadd.f32 %v1678, %v1758
      %v1770 = vadd.f32 %v1679, %v1763
      %v1771 = vld [vmem:[#allocation3 + $0x10] sm:$0x7]
      %s1772 = scalar_lea.vmem %s4, 112
      %v1773 = vld [vmem:[%s1772] sm:$0xf]
      %v1774 = vld [vmem:[%s1772 + $0x4] sm:$0xf]
      %v1775 = vld [vmem:[%s1772 + $0x8] sm:$0xf]
      %v1776 = vld [vmem:[%s1772 + $0xc] sm:$0xf]
      %v1778 = vunpack.c.l.b16 %v1771
      %v1779 = vpack.c.b16 %v1778, %v1695
      %v1781 = vshrl.u32 %v1697, 16
      %v1783 = vrot.slane %v1781, 2
      %v1784 = vshll.u32 %v1697, 16
      %v1786 = vrot.slane %v1784, 3
      %v1787 = vor.u32 %v1783, %v1786
      %v1789 = vshrl.u32 %v1779, 16
      %v1791 = vrot.slane %v1789, 2
      %v1792 = vshll.u32 %v1779, 16
      %v1794 = vrot.slane %v1792, 3
      %v1795 = vor.u32 %v1791, %v1794
      %v1796 = vsel %vm920, %v1787, %v1795
      %v1801 = vunpack.c.l.b16 %v1773
      %v1802 = vunpack.c.l.b16 %v1774
      %v1803 = vunpack.c.l.b16 %v1775
      %v1804 = vunpack.c.l.b16 %v1776
      %v1805 = vpack.c.b16 %v1802, %v1801
      %v1806 = vpack.c.b16 %v1804, %v1803
      %v1810 = vsel %vm358, %v1796, 0
      %v1813 = vsel %vm358, %v1795, 0
      %1815 = vmatprep.subr.bf16.mxu0 0
      %1816 = vmatpush1.bf16.msra.mxu0 %v1805
      %1817 = vmatprep.subr.bf16.mxu0 0
      %1818 = vmatpush1.bf16.msra.mxu0 %v1806
      %1819 = vmatprep.subr.bf16.mxu0 0
      %1820 = vmatpush1.bf16.msra.mxu0 0
      %1821 = vmatprep.subr.bf16.mxu0 0
      %1822 = vmatpush1.bf16.msra.mxu0 0
      %1823 = vmatprep.subr.bf16.mxu0 0
      %1824 = vmatpush1.bf16.msra.mxu0 0
      %1825 = vmatprep.subr.bf16.mxu0 0
      %1826 = vmatpush1.bf16.msra.mxu0 0
      %1827 = vmatprep.subr.bf16.mxu0 0
      %1828 = vmatpush1.bf16.msra.mxu0 0
      %1829 = vmatprep.subr.bf16.mxu0 0
      %1830 = vmatpush1.bf16.msra.mxu0 0
      %1831 = vmatprep.subr.bf16.mxu0 0
      %1832 = vmatpush1.bf16.msra.mxu0 0
      %1833 = vmatprep.subr.bf16.mxu0 0
      %1834 = vmatpush1.bf16.msra.mxu0 0
      %1835 = vmatprep.subr.bf16.mxu0 0
      %1836 = vmatpush1.bf16.msra.mxu0 0
      %1837 = vmatprep.subr.bf16.mxu0 0
      %1838 = vmatpush1.bf16.msra.mxu0 0
      %1839 = vmatprep.subr.bf16.mxu0 0
      %1840 = vmatpush1.bf16.msra.mxu0 0
      %1841 = vmatprep.subr.bf16.mxu0 0
      %1842 = vmatpush1.bf16.msra.mxu0 0
      %1843 = vmatprep.subr.bf16.mxu0 0
      %1844 = vmatpush1.bf16.msra.mxu0 0
      %1845 = vmatprep.subr.bf16.mxu0 0
      %1846 = vmatpush1.bf16.msra.mxu0 0
      %1847 = vmatprep.mubr.bf16.mxu0 0
      %1848 = vmatmul.mubr.bf16.gmra.mrb[0].mxu0 %v1810
      %v1849 = vpop.f32.mrb[0].mxu0
      %v1850 = vadd.f32 0.0, %v1849
      %v1851 = vpop.f32.mrb[0].mxu0
      %v1852 = vpop.f32.mrb[0].mxu0
      %v1853 = vadd.f32 0.0, %v1852
      %v1854 = vpop.f32.mrb[0].mxu0
      %1855 = vmatprep.mubr.bf16.mxu0 0
      %1856 = vmatmul.mubr.bf16.gmra.mrb[0].mxu0 %v1813
      %v1857 = vpop.f32.mrb[0].mxu0
      %v1858 = vadd.f32 0.0, %v1857
      %v1859 = vpop.f32.mrb[0].mxu0
      %v1860 = vpop.f32.mrb[0].mxu0
      %v1861 = vpop.f32.mrb[0].mxu0
      %1862 = vdwg.mxu0
      %v1863 = vadd.f32 %v1768, %v1850
      %v1864 = vadd.f32 %v1769, %v1853
      %v1865 = vadd.f32 %v1770, %v1858
      %v1866 = vld [vmem:[#allocation3 + $0x4] sm:$0x8]
      %s1867 = scalar_lea.vmem %s4, 128
      %v1868 = vld [vmem:[%s1867] sm:$0xf]
      %v1869 = vld [vmem:[%s1867 + $0x4] sm:$0xf]
      %v1870 = vld [vmem:[%s1867 + $0x8] sm:$0xf]
      %v1871 = vld [vmem:[%s1867 + $0xc] sm:$0xf]
      %v1873 = vunpack.c.l.b16 %v1866
      %v1874 = vpack.c.b16 %v1694, %v1873
      %v1875 = vrot.slane %v1874, 3
      %v1876 = vrot.slane %v1779, 3
      %v1877 = vsel %vm574, %v1875, %v1876
      %v1882 = vunpack.c.l.b16 %v1868
      %v1883 = vunpack.c.l.b16 %v1869
      %v1884 = vunpack.c.l.b16 %v1870
      %v1885 = vunpack.c.l.b16 %v1871
      %v1886 = vpack.c.b16 %v1883, %v1882
      %v1887 = vpack.c.b16 %v1885, %v1884
      %v1891 = vsel %vm358, %v1877, 0
      %v1894 = vsel %vm358, %v1876, 0
      %1896 = vmatprep.subr.bf16.mxu0 0
      %1897 = vmatpush1.bf16.msra.mxu0 %v1886
      %1898 = vmatprep.subr.bf16.mxu0 0
      %1899 = vmatpush1.bf16.msra.mxu0 %v1887
      %1900 = vmatprep.subr.bf16.mxu0 0
      %1901 = vmatpush1.bf16.msra.mxu0 0
      %1902 = vmatprep.subr.bf16.mxu0 0
      %1903 = vmatpush1.bf16.msra.mxu0 0
      %1904 = vmatprep.subr.bf16.mxu0 0
      %1905 = vmatpush1.bf16.msra.mxu0 0
      %1906 = vmatprep.subr.bf16.mxu0 0
      %1907 = vmatpush1.bf16.msra.mxu0 0
      %1908 = vmatprep.subr.bf16.mxu0 0
      %1909 = vmatpush1.bf16.msra.mxu0 0
      %1910 = vmatprep.subr.bf16.mxu0 0
      %1911 = vmatpush1.bf16.msra.mxu0 0
      %1912 = vmatprep.subr.bf16.mxu0 0
      %1913 = vmatpush1.bf16.msra.mxu0 0
      %1914 = vmatprep.subr.bf16.mxu0 0
      %1915 = vmatpush1.bf16.msra.mxu0 0
      %1916 = vmatprep.subr.bf16.mxu0 0
      %1917 = vmatpush1.bf16.msra.mxu0 0
      %1918 = vmatprep.subr.bf16.mxu0 0
      %1919 = vmatpush1.bf16.msra.mxu0 0
      %1920 = vmatprep.subr.bf16.mxu0 0
      %1921 = vmatpush1.bf16.msra.mxu0 0
      %1922 = vmatprep.subr.bf16.mxu0 0
      %1923 = vmatpush1.bf16.msra.mxu0 0
      %1924 = vmatprep.subr.bf16.mxu0 0
      %1925 = vmatpush1.bf16.msra.mxu0 0
      %1926 = vmatprep.subr.bf16.mxu0 0
      %1927 = vmatpush1.bf16.msra.mxu0 0
      %1928 = vmatprep.mubr.bf16.mxu0 0
      %1929 = vmatmul.mubr.bf16.gmra.mrb[0].mxu0 %v1891
      %v1930 = vpop.f32.mrb[0].mxu0
      %v1931 = vadd.f32 0.0, %v1930
      %v1932 = vpop.f32.mrb[0].mxu0
      %v1933 = vpop.f32.mrb[0].mxu0
      %v1934 = vadd.f32 0.0, %v1933
      %v1935 = vpop.f32.mrb[0].mxu0
      %1936 = vmatprep.mubr.bf16.mxu0 0
      %1937 = vmatmul.mubr.bf16.gmra.mrb[0].mxu0 %v1894
      %v1938 = vpop.f32.mrb[0].mxu0
      %v1939 = vadd.f32 0.0, %v1938
      %v1940 = vpop.f32.mrb[0].mxu0
      %v1941 = vpop.f32.mrb[0].mxu0
      %v1942 = vpop.f32.mrb[0].mxu0
      %1943 = vdwg.mxu0
      %v1944 = vadd.f32 %v1863, %v1931
      %v1945 = vadd.f32 %v1864, %v1934
      %v1946 = vadd.f32 %v1865, %v1939
      %v1947 = vld [vmem:[%s5] sm:$0x1]
      %v1949 = vlaneseq
      %v1950 = vshrl.u32 %v1949, 7
      %v1951 = vsub.s32 0, %v1950
      %v1952 = vrot.slane %v1947, %v1951
      %v1954 = vadd.f32 %v1944, %v1952
      %v1955 = vadd.f32 %v1945, %v1952
      %v1956 = vadd.f32 %v1946, %v1952
      %v1957 = vmax.f32 %v1954, 0.0
      %v1958 = vmax.f32 %v1955, 0.0
      %v1959 = vmax.f32 %v1956, 0.0
      %v1960 = vld [vmem:[#allocation2 + $0x7] sm:$0xff]
      %v1961 = vld [vmem:[#allocation2 + $0xf] sm:$0xff]
      %v1962 = vld [vmem:[#allocation2 + $0x17] sm:$0xff]
      %v1963 = vpack.c.bf16 %v1958, %v1957
      %v1964 = vpack.c.bf16 %v1959, %v1959
      %v1965 = vld [vmem:[%s6] sm:$0xf]
      %v1966 = vld [vmem:[%s7] sm:$0x1]
      %v1968 = vlaneseq
      %v1969 = vshrl.u32 %v1968, 7
      %v1970 = vsub.s32 0, %v1969
      %v1971 = vrot.slane %v1966, %v1970
      %vm1973 = vcmask 64512
      %v1975 = vsel %vm1973, %v1963, 0
      %v1978 = vsel %vm1973, %v1964, 0
      %vm1980 = vcmask 1043456
      %v1982 = vsel %vm1980, %v1965, 0
      %1984 = vmatprep.subr.bf16.mxu0 0
      %1985 = vmatpush1.bf16.msra.mxu0 %v1982
      %1986 = vmatprep.subr.bf16.mxu0 0
      %1987 = vmatpush1.bf16.msra.mxu0 0
      %1988 = vmatprep.subr.bf16.mxu0 0
      %1989 = vmatpush1.bf16.msra.mxu0 0
      %1990 = vmatprep.subr.bf16.mxu0 0
      %1991 = vmatpush1.bf16.msra.mxu0 0
      %1992 = vmatprep.subr.bf16.mxu0 0
      %1993 = vmatpush1.bf16.msra.mxu0 0
      %1994 = vmatprep.subr.bf16.mxu0 0
      %1995 = vmatpush1.bf16.msra.mxu0 0
      %1996 = vmatprep.subr.bf16.mxu0 0
      %1997 = vmatpush1.bf16.msra.mxu0 0
      %1998 = vmatprep.subr.bf16.mxu0 0
      %1999 = vmatpush1.bf16.msra.mxu0 0
      %2000 = vmatprep.subr.bf16.mxu0 0
      %2001 = vmatpush1.bf16.msra.mxu0 0
      %2002 = vmatprep.subr.bf16.mxu0 0
      %2003 = vmatpush1.bf16.msra.mxu0 0
      %2004 = vmatprep.subr.bf16.mxu0 0
      %2005 = vmatpush1.bf16.msra.mxu0 0
      %2006 = vmatprep.subr.bf16.mxu0 0
      %2007 = vmatpush1.bf16.msra.mxu0 0
      %2008 = vmatprep.subr.bf16.mxu0 0
      %2009 = vmatpush1.bf16.msra.mxu0 0
      %2010 = vmatprep.subr.bf16.mxu0 0
      %2011 = vmatpush1.bf16.msra.mxu0 0
      %2012 = vmatprep.subr.bf16.mxu0 0
      %2013 = vmatpush1.bf16.msra.mxu0 0
      %2014 = vmatprep.subr.bf16.mxu0 0
      %2015 = vmatpush1.bf16.msra.mxu0 0
      %2016 = vmatprep.mubr.bf16.mxu0 0
      %2017 = vmatmul.mubr.bf16.gmra.mrb[0].mxu0 %v1975
      %v2018 = vpop.f32.mrb[0].mxu0
      %v2019 = vadd.f32 %v1971, %v2018
      %v2020 = vpop.f32.mrb[0].mxu0
      %v2021 = vpop.f32.mrb[0].mxu0
      %v2022 = vadd.f32 %v1971, %v2021
      %v2023 = vpop.f32.mrb[0].mxu0
      %2024 = vmatprep.mubr.bf16.mxu0 0
      %2025 = vmatmul.mubr.bf16.gmra.mrb[0].mxu0 %v1978
      %v2026 = vpop.f32.mrb[0].mxu0
      %v2027 = vadd.f32 %v1971, %v2026
      %v2028 = vpop.f32.mrb[0].mxu0
      %v2029 = vpop.f32.mrb[0].mxu0
      %v2030 = vpop.f32.mrb[0].mxu0
      %2031 = vdwg.mxu0
      %v2032 = vadd.f32 %v2019, %v1960
      %v2033 = vadd.f32 %v2022, %v1961
      %v2034 = vadd.f32 %v2027, %v1962
      %v2035 = vld [vmem:[%s3] sm:$0xff]
      %v2036 = vld [vmem:[%s3 + $0x8] sm:$0xff]
      %v2037 = vld [vmem:[%s3 + $0x10] sm:$0xff]
      %2039 = vset.pattern.permute.xlu0 0
      %2040 = vperm.xlu0 %2039, %v2035
      %v2041 = vpop.permute.xlu0 %2040
      %2044 = vset.pattern.permute.xlu0 0
      %2045 = vperm.xlu0 %2044, %v2036
      %v2046 = vpop.permute.xlu0 %2045
      %2049 = vset.pattern.permute.xlu0 0
      %2050 = vperm.xlu0 %2049, %v2037
      %v2051 = vpop.permute.xlu0 %2050
      %v2053 = vmul.f32 %v2032, %v2041
      %v2054 = vmul.f32 %v2033, %v2046
      %v2055 = vmul.f32 %v2034, %v2051
      %2056 = vst.msk [vmem:[#allocation2 + $0x7] sm:$0xff] %vm358, %v2053
      %2057 = vst.msk [vmem:[#allocation2 + $0xf] sm:$0xff] %vm358, %v2054
      %2058 = vst.msk [vmem:[#allocation2 + $0x17] sm:$0xff] %vm358, %v2055
      %v2059 = vld [vmem:[#allocation2] sm:$0xff]
      %v2060 = vld [vmem:[#allocation2 + $0x8] sm:$0xff]
      %v2061 = vld [vmem:[#allocation2 + $0x10] sm:$0xff]
      %v2062 = vld [vmem:[#allocation2 + $0x18] sm:$0xff]
      %v2063 = vld [vmem:[#allocation2 + $0x20] sm:$0xff]
      %v2064 = vld [vmem:[#allocation2 + $0x28] sm:$0x3]
      %v2065 = vmax.f32 %v2059, 0.0
      %v2066 = vmax.f32 %v2060, 0.0
      %v2067 = vmax.f32 %v2061, 0.0
      %v2068 = vmax.f32 %v2062, 0.0
      %v2069 = vmax.f32 %v2063, 0.0
      %v2070 = vmax.f32 %v2064, 0.0
      %v2071 = vpack.c.bf16 %v2066, %v2065
      %v2072 = vpack.c.bf16 %v2068, %v2067
      %v2073 = vpack.c.bf16 %v2070, %v2069
      %v2077 = vunpack.c.l.b16 %v2071
      %v2078 = vunpack.c.h.b16 %v2071
      %v2079 = vunpack.c.l.b16 %v2072
      %v2080 = vunpack.c.h.b16 %v2072
      %v2081 = vunpack.c.l.b16 %v2073
      %v2082 = vunpack.c.h.b16 %v2073
      %v2083 = vpack.c.b16 %v2077, %v2077
      %v2084 = vpack.c.b16 %v2078, %v2078
      %v2085 = vpack.c.b16 %v2079, %v2079
      %v2086 = vpack.c.b16 %v2080, %v2080
      %v2087 = vpack.c.b16 %v2081, %v2081
      %v2088 = vpack.c.b16 %v2082, %v2082
      %2095 = vst.msk [vmem:[#allocation3] sm:$0xf] %vm1165, %v2083
      %2096 = vst.msk [vmem:[#allocation3 + $0x4] sm:$0xf] %vm1165, %v2084
      %2097 = vst.msk [vmem:[#allocation3 + $0x8] sm:$0xf] %vm1165, %v2085
      %2098 = vst.msk [vmem:[#allocation3 + $0xc] sm:$0xf] %vm1165, %v2086
      %2099 = vst.msk [vmem:[#allocation3 + $0x10] sm:$0xf] %vm1165, %v2087
      %2100 = vst.msk [vmem:[#allocation3 + $0x14] sm:$0x1] %vm1171, %v2088
      %v2101 = vld [vmem:[#allocation3] sm:$0xf]
      %v2102 = vld [vmem:[#allocation3 + $0x4] sm:$0xf]
      %v2103 = vld [vmem:[#allocation3 + $0x8] sm:$0xf]
      %s2104 = scalar_lea.vmem %s4, 144
      %v2105 = vld [vmem:[%s2104] sm:$0xf]
      %v2106 = vld [vmem:[%s2104 + $0x4] sm:$0xf]
      %v2107 = vld [vmem:[%s2104 + $0x8] sm:$0xf]
      %v2108 = vld [vmem:[%s2104 + $0xc] sm:$0xf]
      %v2109 = vld [vmem:[#allocation3 + $0xc] sm:$0x1]
      %s2110 = scalar_lea.vmem %s4, 160
      %v2111 = vld [vmem:[%s2110] sm:$0xf]
      %v2112 = vld [vmem:[%s2110 + $0x4] sm:$0xf]
      %v2113 = vld [vmem:[%s2110 + $0x8] sm:$0xf]
      %v2114 = vld [vmem:[%s2110 + $0xc] sm:$0xf]
      %v2119 = vunpack.c.l.b16 %v2101
      %v2120 = vunpack.c.l.b16 %v2102
      %v2121 = vunpack.c.l.b16 %v2103
      %v2122 = vunpack.c.l.b16 %v2109
      %v2123 = vpack.c.b16 %v2120, %v2119
      %v2124 = vpack.c.b16 %v2122, %v2121
      %v2126 = vshrl.u32 %v2123, 16
      %v2128 = vshll.u32 %v2123, 16
      %v2130 = vrot.slane %v2128, 1
      %v2131 = vor.u32 %v2126, %v2130
      %v2133 = vshll.u32 %v2124, 16
      %v2135 = vrot.slane %v2133, 1
      %v2136 = vsel %vm330, %v2131, %v2135
      %v2137 = vshrl.u32 %v2124, 16
      %v2139 = vor.u32 %v2137, %v2135
      %v2144 = vunpack.c.l.b16 %v2111
      %v2145 = vunpack.c.l.b16 %v2112
      %v2146 = vunpack.c.l.b16 %v2113
      %v2147 = vunpack.c.l.b16 %v2114
      %v2148 = vpack.c.b16 %v2145, %v2144
      %v2149 = vpack.c.b16 %v2147, %v2146
      %v2153 = vsel %vm358, %v2136, 0
      %v2156 = vsel %vm358, %v2139, 0
      %2158 = vmatprep.subr.bf16.mxu0 0
      %2159 = vmatpush1.bf16.msra.mxu0 %v2148
      %2160 = vmatprep.subr.bf16.mxu0 0
      %2161 = vmatpush1.bf16.msra.mxu0 %v2149
      %2162 = vmatprep.subr.bf16.mxu0 0
      %2163 = vmatpush1.bf16.msra.mxu0 0
      %2164 = vmatprep.subr.bf16.mxu0 0
      %2165 = vmatpush1.bf16.msra.mxu0 0
      %2166 = vmatprep.subr.bf16.mxu0 0
      %2167 = vmatpush1.bf16.msra.mxu0 0
      %2168 = vmatprep.subr.bf16.mxu0 0
      %2169 = vmatpush1.bf16.msra.mxu0 0
      %2170 = vmatprep.subr.bf16.mxu0 0
      %2171 = vmatpush1.bf16.msra.mxu0 0
      %2172 = vmatprep.subr.bf16.mxu0 0
      %2173 = vmatpush1.bf16.msra.mxu0 0
      %2174 = vmatprep.subr.bf16.mxu0 0
      %2175 = vmatpush1.bf16.msra.mxu0 0
      %2176 = vmatprep.subr.bf16.mxu0 0
      %2177 = vmatpush1.bf16.msra.mxu0 0
      %2178 = vmatprep.subr.bf16.mxu0 0
      %2179 = vmatpush1.bf16.msra.mxu0 0
      %2180 = vmatprep.subr.bf16.mxu0 0
      %2181 = vmatpush1.bf16.msra.mxu0 0
      %2182 = vmatprep.subr.bf16.mxu0 0
      %2183 = vmatpush1.bf16.msra.mxu0 0
      %2184 = vmatprep.subr.bf16.mxu0 0
      %2185 = vmatpush1.bf16.msra.mxu0 0
      %2186 = vmatprep.subr.bf16.mxu0 0
      %2187 = vmatpush1.bf16.msra.mxu0 0
      %2188 = vmatprep.subr.bf16.mxu0 0
      %2189 = vmatpush1.bf16.msra.mxu0 0
      %2190 = vmatprep.mubr.bf16.mxu0 0
      %2191 = vmatmul.mubr.bf16.gmra.mrb[0].mxu0 %v2153
      %v2192 = vpop.f32.mrb[0].mxu0
      %v2193 = vadd.f32 0.0, %v2192
      %v2194 = vpop.f32.mrb[0].mxu0
      %v2195 = vpop.f32.mrb[0].mxu0
      %v2196 = vadd.f32 0.0, %v2195
      %v2197 = vpop.f32.mrb[0].mxu0
      %2198 = vmatprep.mubr.bf16.mxu0 0
      %2199 = vmatmul.mubr.bf16.gmra.mrb[0].mxu0 %v2156
      %v2200 = vpop.f32.mrb[0].mxu0
      %v2201 = vadd.f32 0.0, %v2200
      %v2202 = vpop.f32.mrb[0].mxu0
      %v2203 = vpop.f32.mrb[0].mxu0
      %v2204 = vpop.f32.mrb[0].mxu0
      %2205 = vdwg.mxu0
      %v2206 = vpack.c.b16 %v2121, %v2121
      %v2211 = vunpack.c.l.b16 %v2105
      %v2212 = vunpack.c.l.b16 %v2106
      %v2213 = vunpack.c.l.b16 %v2107
      %v2214 = vunpack.c.l.b16 %v2108
      %v2215 = vpack.c.b16 %v2212, %v2211
      %v2216 = vpack.c.b16 %v2214, %v2213
      %v2219 = vsel %vm358, %v2123, 0
      %v2222 = vsel %vm358, %v2206, 0
      %2224 = vmatprep.subr.bf16.mxu0 0
      %2225 = vmatpush1.bf16.msra.mxu0 %v2215
      %2226 = vmatprep.subr.bf16.mxu0 0
      %2227 = vmatpush1.bf16.msra.mxu0 %v2216
      %2228 = vmatprep.subr.bf16.mxu0 0
      %2229 = vmatpush1.bf16.msra.mxu0 0
      %2230 = vmatprep.subr.bf16.mxu0 0
      %2231 = vmatpush1.bf16.msra.mxu0 0
      %2232 = vmatprep.subr.bf16.mxu0 0
      %2233 = vmatpush1.bf16.msra.mxu0 0
      %2234 = vmatprep.subr.bf16.mxu0 0
      %2235 = vmatpush1.bf16.msra.mxu0 0
      %2236 = vmatprep.subr.bf16.mxu0 0
      %2237 = vmatpush1.bf16.msra.mxu0 0
      %2238 = vmatprep.subr.bf16.mxu0 0
      %2239 = vmatpush1.bf16.msra.mxu0 0
      %2240 = vmatprep.subr.bf16.mxu0 0
      %2241 = vmatpush1.bf16.msra.mxu0 0
      %2242 = vmatprep.subr.bf16.mxu0 0
      %2243 = vmatpush1.bf16.msra.mxu0 0
      %2244 = vmatprep.subr.bf16.mxu0 0
      %2245 = vmatpush1.bf16.msra.mxu0 0
      %2246 = vmatprep.subr.bf16.mxu0 0
      %2247 = vmatpush1.bf16.msra.mxu0 0
      %2248 = vmatprep.subr.bf16.mxu0 0
      %2249 = vmatpush1.bf16.msra.mxu0 0
      %2250 = vmatprep.subr.bf16.mxu0 0
      %2251 = vmatpush1.bf16.msra.mxu0 0
      %2252 = vmatprep.subr.bf16.mxu0 0
      %2253 = vmatpush1.bf16.msra.mxu0 0
      %2254 = vmatprep.subr.bf16.mxu0 0
      %2255 = vmatpush1.bf16.msra.mxu0 0
      %2256 = vmatprep.mubr.bf16.mxu0 0
      %2257 = vmatmul.mubr.bf16.gmra.mrb[0].mxu0 %v2219
      %v2258 = vpop.f32.mrb[0].mxu0
      %v2259 = vadd.f32 %v2193, %v2258
      %v2260 = vpop.f32.mrb[0].mxu0
      %v2261 = vpop.f32.mrb[0].mxu0
      %v2262 = vadd.f32 %v2196, %v2261
      %v2263 = vpop.f32.mrb[0].mxu0
      %2264 = vmatprep.mubr.bf16.mxu0 0
      %2265 = vmatmul.mubr.bf16.gmra.mrb[0].mxu0 %v2222
      %v2266 = vpop.f32.mrb[0].mxu0
      %v2267 = vadd.f32 %v2201, %v2266
      %v2268 = vpop.f32.mrb[0].mxu0
      %v2269 = vpop.f32.mrb[0].mxu0
      %v2270 = vpop.f32.mrb[0].mxu0
      %2271 = vdwg.mxu0
      %v2272 = vld [vmem:[#allocation3] sm:$0xe]
      %s2273 = scalar_lea.vmem %s4, 176
      %v2274 = vld [vmem:[%s2273] sm:$0xf]
      %v2275 = vld [vmem:[%s2273 + $0x4] sm:$0xf]
      %v2276 = vld [vmem:[%s2273 + $0x8] sm:$0xf]
      %v2277 = vld [vmem:[%s2273 + $0xc] sm:$0xf]
      %v2279 = vunpack.c.l.b16 %v2272
      %v2280 = vpack.c.b16 %v2120, %v2279
      %v2281 = vrot.slane %v2280, 1
      %v2282 = vrot.slane %v2124, 1
      %v2283 = vsel %vm488, %v2281, %v2282
      %v2288 = vunpack.c.l.b16 %v2274
      %v2289 = vunpack.c.l.b16 %v2275
      %v2290 = vunpack.c.l.b16 %v2276
      %v2291 = vunpack.c.l.b16 %v2277
      %v2292 = vpack.c.b16 %v2289, %v2288
      %v2293 = vpack.c.b16 %v2291, %v2290
      %v2297 = vsel %vm358, %v2283, 0
      %v2300 = vsel %vm358, %v2282, 0
      %2302 = vmatprep.subr.bf16.mxu0 0
      %2303 = vmatpush1.bf16.msra.mxu0 %v2292
      %2304 = vmatprep.subr.bf16.mxu0 0
      %2305 = vmatpush1.bf16.msra.mxu0 %v2293
      %2306 = vmatprep.subr.bf16.mxu0 0
      %2307 = vmatpush1.bf16.msra.mxu0 0
      %2308 = vmatprep.subr.bf16.mxu0 0
      %2309 = vmatpush1.bf16.msra.mxu0 0
      %2310 = vmatprep.subr.bf16.mxu0 0
      %2311 = vmatpush1.bf16.msra.mxu0 0
      %2312 = vmatprep.subr.bf16.mxu0 0
      %2313 = vmatpush1.bf16.msra.mxu0 0
      %2314 = vmatprep.subr.bf16.mxu0 0
      %2315 = vmatpush1.bf16.msra.mxu0 0
      %2316 = vmatprep.subr.bf16.mxu0 0
      %2317 = vmatpush1.bf16.msra.mxu0 0
      %2318 = vmatprep.subr.bf16.mxu0 0
      %2319 = vmatpush1.bf16.msra.mxu0 0
      %2320 = vmatprep.subr.bf16.mxu0 0
      %2321 = vmatpush1.bf16.msra.mxu0 0
      %2322 = vmatprep.subr.bf16.mxu0 0
      %2323 = vmatpush1.bf16.msra.mxu0 0
      %2324 = vmatprep.subr.bf16.mxu0 0
      %2325 = vmatpush1.bf16.msra.mxu0 0
      %2326 = vmatprep.subr.bf16.mxu0 0
      %2327 = vmatpush1.bf16.msra.mxu0 0
      %2328 = vmatprep.subr.bf16.mxu0 0
      %2329 = vmatpush1.bf16.msra.mxu0 0
      %2330 = vmatprep.subr.bf16.mxu0 0
      %2331 = vmatpush1.bf16.msra.mxu0 0
      %2332 = vmatprep.subr.bf16.mxu0 0
      %2333 = vmatpush1.bf16.msra.mxu0 0
      %2334 = vmatprep.mubr.bf16.mxu0 0
      %2335 = vmatmul.mubr.bf16.gmra.mrb[0].mxu0 %v2297
      %v2336 = vpop.f32.mrb[0].mxu0
      %v2337 = vadd.f32 0.0, %v2336
      %v2338 = vpop.f32.mrb[0].mxu0
      %v2339 = vpop.f32.mrb[0].mxu0
      %v2340 = vadd.f32 0.0, %v2339
      %v2341 = vpop.f32.mrb[0].mxu0
      %2342 = vmatprep.mubr.bf16.mxu0 0
      %2343 = vmatmul.mubr.bf16.gmra.mrb[0].mxu0 %v2300
      %v2344 = vpop.f32.mrb[0].mxu0
      %v2345 = vadd.f32 0.0, %v2344
      %v2346 = vpop.f32.mrb[0].mxu0
      %v2347 = vpop.f32.mrb[0].mxu0
      %v2348 = vpop.f32.mrb[0].mxu0
      %2349 = vdwg.mxu0
      %v2350 = vadd.f32 %v2259, %v2337
      %v2351 = vadd.f32 %v2262, %v2340
      %v2352 = vadd.f32 %v2267, %v2345
      %v2353 = vld [vmem:[#allocation3] sm:$0x8]
      %v2354 = vld [vmem:[#allocation3 + $0xc] sm:$0x7]
      %s2355 = scalar_lea.vmem %s4, 192
      %v2356 = vld [vmem:[%s2355] sm:$0xf]
      %v2357 = vld [vmem:[%s2355 + $0x4] sm:$0xf]
      %v2358 = vld [vmem:[%s2355 + $0x8] sm:$0xf]
      %v2359 = vld [vmem:[%s2355 + $0xc] sm:$0xf]
      %v2362 = vunpack.c.l.b16 %v2353
      %v2363 = vunpack.c.l.b16 %v2354
      %v2364 = vpack.c.b16 %v2120, %v2362
      %v2365 = vpack.c.b16 %v2363, %v2121
      %v2366 = vrot.slane %v2364, 3
      %v2367 = vrot.slane %v2365, 3
      %v2368 = vsel %vm574, %v2366, %v2367
      %v2373 = vunpack.c.l.b16 %v2356
      %v2374 = vunpack.c.l.b16 %v2357
      %v2375 = vunpack.c.l.b16 %v2358
      %v2376 = vunpack.c.l.b16 %v2359
      %v2377 = vpack.c.b16 %v2374, %v2373
      %v2378 = vpack.c.b16 %v2376, %v2375
      %v2382 = vsel %vm358, %v2368, 0
      %v2385 = vsel %vm358, %v2367, 0
      %2387 = vmatprep.subr.bf16.mxu0 0
      %2388 = vmatpush1.bf16.msra.mxu0 %v2377
      %2389 = vmatprep.subr.bf16.mxu0 0
      %2390 = vmatpush1.bf16.msra.mxu0 %v2378
      %2391 = vmatprep.subr.bf16.mxu0 0
      %2392 = vmatpush1.bf16.msra.mxu0 0
      %2393 = vmatprep.subr.bf16.mxu0 0
      %2394 = vmatpush1.bf16.msra.mxu0 0
      %2395 = vmatprep.subr.bf16.mxu0 0
      %2396 = vmatpush1.bf16.msra.mxu0 0
      %2397 = vmatprep.subr.bf16.mxu0 0
      %2398 = vmatpush1.bf16.msra.mxu0 0
      %2399 = vmatprep.subr.bf16.mxu0 0
      %2400 = vmatpush1.bf16.msra.mxu0 0
      %2401 = vmatprep.subr.bf16.mxu0 0
      %2402 = vmatpush1.bf16.msra.mxu0 0
      %2403 = vmatprep.subr.bf16.mxu0 0
      %2404 = vmatpush1.bf16.msra.mxu0 0
      %2405 = vmatprep.subr.bf16.mxu0 0
      %2406 = vmatpush1.bf16.msra.mxu0 0
      %2407 = vmatprep.subr.bf16.mxu0 0
      %2408 = vmatpush1.bf16.msra.mxu0 0
      %2409 = vmatprep.subr.bf16.mxu0 0
      %2410 = vmatpush1.bf16.msra.mxu0 0
      %2411 = vmatprep.subr.bf16.mxu0 0
      %2412 = vmatpush1.bf16.msra.mxu0 0
      %2413 = vmatprep.subr.bf16.mxu0 0
      %2414 = vmatpush1.bf16.msra.mxu0 0
      %2415 = vmatprep.subr.bf16.mxu0 0
      %2416 = vmatpush1.bf16.msra.mxu0 0
      %2417 = vmatprep.subr.bf16.mxu0 0
      %2418 = vmatpush1.bf16.msra.mxu0 0
      %2419 = vmatprep.mubr.bf16.mxu0 0
      %2420 = vmatmul.mubr.bf16.gmra.mrb[0].mxu0 %v2382
      %v2421 = vpop.f32.mrb[0].mxu0
      %v2422 = vadd.f32 0.0, %v2421
      %v2423 = vpop.f32.mrb[0].mxu0
      %v2424 = vpop.f32.mrb[0].mxu0
      %v2425 = vadd.f32 0.0, %v2424
      %v2426 = vpop.f32.mrb[0].mxu0
      %2427 = vmatprep.mubr.bf16.mxu0 0
      %2428 = vmatmul.mubr.bf16.gmra.mrb[0].mxu0 %v2385
      %v2429 = vpop.f32.mrb[0].mxu0
      %v2430 = vadd.f32 0.0, %v2429
      %v2431 = vpop.f32.mrb[0].mxu0
      %v2432 = vpop.f32.mrb[0].mxu0
      %v2433 = vpop.f32.mrb[0].mxu0
      %2434 = vdwg.mxu0
      %v2435 = vadd.f32 %v2350, %v2422
      %v2436 = vadd.f32 %v2351, %v2425
      %v2437 = vadd.f32 %v2352, %v2430
      %v2438 = vld [vmem:[#allocation3 + $0xc] sm:$0xf]
      %s2439 = scalar_lea.vmem %s4, 208
      %v2440 = vld [vmem:[%s2439] sm:$0xf]
      %v2441 = vld [vmem:[%s2439 + $0x4] sm:$0xf]
      %v2442 = vld [vmem:[%s2439 + $0x8] sm:$0xf]
      %v2443 = vld [vmem:[%s2439 + $0xc] sm:$0xf]
      %v2445 = vunpack.c.l.b16 %v2438
      %v2446 = vpack.c.b16 %v2445, %v2121
      %v2448 = vshrl.u32 %v2364, 16
      %v2450 = vrot.slane %v2448, 3
      %v2451 = vshll.u32 %v2364, 16
      %v2453 = vrot.slane %v2451, 4
      %v2454 = vor.u32 %v2450, %v2453
      %v2456 = vshrl.u32 %v2446, 16
      %v2458 = vrot.slane %v2456, 3
      %v2459 = vshll.u32 %v2446, 16
      %v2461 = vrot.slane %v2459, 4
      %v2462 = vor.u32 %v2458, %v2461
      %v2463 = vsel %vm656, %v2454, %v2462
      %v2468 = vunpack.c.l.b16 %v2440
      %v2469 = vunpack.c.l.b16 %v2441
      %v2470 = vunpack.c.l.b16 %v2442
      %v2471 = vunpack.c.l.b16 %v2443
      %v2472 = vpack.c.b16 %v2469, %v2468
      %v2473 = vpack.c.b16 %v2471, %v2470
      %v2477 = vsel %vm358, %v2463, 0
      %v2480 = vsel %vm358, %v2462, 0
      %2482 = vmatprep.subr.bf16.mxu0 0
      %2483 = vmatpush1.bf16.msra.mxu0 %v2472
      %2484 = vmatprep.subr.bf16.mxu0 0
      %2485 = vmatpush1.bf16.msra.mxu0 %v2473
      %2486 = vmatprep.subr.bf16.mxu0 0
      %2487 = vmatpush1.bf16.msra.mxu0 0
      %2488 = vmatprep.subr.bf16.mxu0 0
      %2489 = vmatpush1.bf16.msra.mxu0 0
      %2490 = vmatprep.subr.bf16.mxu0 0
      %2491 = vmatpush1.bf16.msra.mxu0 0
      %2492 = vmatprep.subr.bf16.mxu0 0
      %2493 = vmatpush1.bf16.msra.mxu0 0
      %2494 = vmatprep.subr.bf16.mxu0 0
      %2495 = vmatpush1.bf16.msra.mxu0 0
      %2496 = vmatprep.subr.bf16.mxu0 0
      %2497 = vmatpush1.bf16.msra.mxu0 0
      %2498 = vmatprep.subr.bf16.mxu0 0
      %2499 = vmatpush1.bf16.msra.mxu0 0
      %2500 = vmatprep.subr.bf16.mxu0 0
      %2501 = vmatpush1.bf16.msra.mxu0 0
      %2502 = vmatprep.subr.bf16.mxu0 0
      %2503 = vmatpush1.bf16.msra.mxu0 0
      %2504 = vmatprep.subr.bf16.mxu0 0
      %2505 = vmatpush1.bf16.msra.mxu0 0
      %2506 = vmatprep.subr.bf16.mxu0 0
      %2507 = vmatpush1.bf16.msra.mxu0 0
      %2508 = vmatprep.subr.bf16.mxu0 0
      %2509 = vmatpush1.bf16.msra.mxu0 0
      %2510 = vmatprep.subr.bf16.mxu0 0
      %2511 = vmatpush1.bf16.msra.mxu0 0
      %2512 = vmatprep.subr.bf16.mxu0 0
      %2513 = vmatpush1.bf16.msra.mxu0 0
      %2514 = vmatprep.mubr.bf16.mxu0 0
      %2515 = vmatmul.mubr.bf16.gmra.mrb[0].mxu0 %v2477
      %v2516 = vpop.f32.mrb[0].mxu0
      %v2517 = vadd.f32 0.0, %v2516
      %v2518 = vpop.f32.mrb[0].mxu0
      %v2519 = vpop.f32.mrb[0].mxu0
      %v2520 = vadd.f32 0.0, %v2519
      %v2521 = vpop.f32.mrb[0].mxu0
      %2522 = vmatprep.mubr.bf16.mxu0 0
      %2523 = vmatmul.mubr.bf16.gmra.mrb[0].mxu0 %v2480
      %v2524 = vpop.f32.mrb[0].mxu0
      %v2525 = vadd.f32 0.0, %v2524
      %v2526 = vpop.f32.mrb[0].mxu0
      %v2527 = vpop.f32.mrb[0].mxu0
      %v2528 = vpop.f32.mrb[0].mxu0
      %2529 = vdwg.mxu0
      %v2530 = vadd.f32 %v2435, %v2517
      %v2531 = vadd.f32 %v2436, %v2520
      %v2532 = vadd.f32 %v2437, %v2525
      %s2533 = scalar_lea.vmem %s4, 224
      %v2534 = vld [vmem:[%s2533] sm:$0xf]
      %v2535 = vld [vmem:[%s2533 + $0x4] sm:$0xf]
      %v2536 = vld [vmem:[%s2533 + $0x8] sm:$0xf]
      %v2537 = vld [vmem:[%s2533 + $0xc] sm:$0xf]
      %v2538 = vpack.c.b16 %v2121, %v2120
      %v2539 = vpack.c.b16 %v2445, %v2445
      %v2544 = vunpack.c.l.b16 %v2534
      %v2545 = vunpack.c.l.b16 %v2535
      %v2546 = vunpack.c.l.b16 %v2536
      %v2547 = vunpack.c.l.b16 %v2537
      %v2548 = vpack.c.b16 %v2545, %v2544
      %v2549 = vpack.c.b16 %v2547, %v2546
      %v2553 = vsel %vm358, %v2538, 0
      %v2556 = vsel %vm358, %v2539, 0
      %2558 = vmatprep.subr.bf16.mxu0 0
      %2559 = vmatpush1.bf16.msra.mxu0 %v2548
      %2560 = vmatprep.subr.bf16.mxu0 0
      %2561 = vmatpush1.bf16.msra.mxu0 %v2549
      %2562 = vmatprep.subr.bf16.mxu0 0
      %2563 = vmatpush1.bf16.msra.mxu0 0
      %2564 = vmatprep.subr.bf16.mxu0 0
      %2565 = vmatpush1.bf16.msra.mxu0 0
      %2566 = vmatprep.subr.bf16.mxu0 0
      %2567 = vmatpush1.bf16.msra.mxu0 0
      %2568 = vmatprep.subr.bf16.mxu0 0
      %2569 = vmatpush1.bf16.msra.mxu0 0
      %2570 = vmatprep.subr.bf16.mxu0 0
      %2571 = vmatpush1.bf16.msra.mxu0 0
      %2572 = vmatprep.subr.bf16.mxu0 0
      %2573 = vmatpush1.bf16.msra.mxu0 0
      %2574 = vmatprep.subr.bf16.mxu0 0
      %2575 = vmatpush1.bf16.msra.mxu0 0
      %2576 = vmatprep.subr.bf16.mxu0 0
      %2577 = vmatpush1.bf16.msra.mxu0 0
      %2578 = vmatprep.subr.bf16.mxu0 0
      %2579 = vmatpush1.bf16.msra.mxu0 0
      %2580 = vmatprep.subr.bf16.mxu0 0
      %2581 = vmatpush1.bf16.msra.mxu0 0
      %2582 = vmatprep.subr.bf16.mxu0 0
      %2583 = vmatpush1.bf16.msra.mxu0 0
      %2584 = vmatprep.subr.bf16.mxu0 0
      %2585 = vmatpush1.bf16.msra.mxu0 0
      %2586 = vmatprep.subr.bf16.mxu0 0
      %2587 = vmatpush1.bf16.msra.mxu0 0
      %2588 = vmatprep.subr.bf16.mxu0 0
      %2589 = vmatpush1.bf16.msra.mxu0 0
      %2590 = vmatprep.mubr.bf16.mxu0 0
      %2591 = vmatmul.mubr.bf16.gmra.mrb[0].mxu0 %v2553
      %v2592 = vpop.f32.mrb[0].mxu0
      %v2593 = vadd.f32 0.0, %v2592
      %v2594 = vpop.f32.mrb[0].mxu0
      %v2595 = vpop.f32.mrb[0].mxu0
      %v2596 = vadd.f32 0.0, %v2595
      %v2597 = vpop.f32.mrb[0].mxu0
      %2598 = vmatprep.mubr.bf16.mxu0 0
      %2599 = vmatmul.mubr.bf16.gmra.mrb[0].mxu0 %v2556
      %v2600 = vpop.f32.mrb[0].mxu0
      %v2601 = vadd.f32 0.0, %v2600
      %v2602 = vpop.f32.mrb[0].mxu0
      %v2603 = vpop.f32.mrb[0].mxu0
      %v2604 = vpop.f32.mrb[0].mxu0
      %2605 = vdwg.mxu0
      %v2606 = vadd.f32 %v2530, %v2593
      %v2607 = vadd.f32 %v2531, %v2596
      %v2608 = vadd.f32 %v2532, %v2601
      %v2609 = vld [vmem:[#allocation3 + $0x4] sm:$0xc]
      %v2610 = vld [vmem:[#allocation3 + $0x8] sm:$0xf]
      %v2611 = vld [vmem:[#allocation3 + $0xc] sm:$0xf]
      %v2612 = vld [vmem:[#allocation3 + $0x10] sm:$0x3]
      %s2613 = scalar_lea.vmem %s4, 240
      %v2614 = vld [vmem:[%s2613] sm:$0xf]
      %v2615 = vld [vmem:[%s2613 + $0x4] sm:$0xf]
      %v2616 = vld [vmem:[%s2613 + $0x8] sm:$0xf]
      %v2617 = vld [vmem:[%s2613 + $0xc] sm:$0xf]
      %v2622 = vunpack.c.l.b16 %v2609
      %v2623 = vunpack.c.l.b16 %v2610
      %v2624 = vunpack.c.l.b16 %v2611
      %v2625 = vunpack.c.l.b16 %v2612
      %v2626 = vpack.c.b16 %v2623, %v2622
      %v2627 = vpack.c.b16 %v2625, %v2624
      %v2628 = vrot.slane %v2626, 2
      %v2629 = vrot.slane %v2627, 2
      %v2630 = vsel %vm838, %v2628, %v2629
      %v2635 = vunpack.c.l.b16 %v2614
      %v2636 = vunpack.c.l.b16 %v2615
      %v2637 = vunpack.c.l.b16 %v2616
      %v2638 = vunpack.c.l.b16 %v2617
      %v2639 = vpack.c.b16 %v2636, %v2635
      %v2640 = vpack.c.b16 %v2638, %v2637
      %v2644 = vsel %vm358, %v2630, 0
      %v2647 = vsel %vm358, %v2629, 0
      %2649 = vmatprep.subr.bf16.mxu0 0
      %2650 = vmatpush1.bf16.msra.mxu0 %v2639
      %2651 = vmatprep.subr.bf16.mxu0 0
      %2652 = vmatpush1.bf16.msra.mxu0 %v2640
      %2653 = vmatprep.subr.bf16.mxu0 0
      %2654 = vmatpush1.bf16.msra.mxu0 0
      %2655 = vmatprep.subr.bf16.mxu0 0
      %2656 = vmatpush1.bf16.msra.mxu0 0
      %2657 = vmatprep.subr.bf16.mxu0 0
      %2658 = vmatpush1.bf16.msra.mxu0 0
      %2659 = vmatprep.subr.bf16.mxu0 0
      %2660 = vmatpush1.bf16.msra.mxu0 0
      %2661 = vmatprep.subr.bf16.mxu0 0
      %2662 = vmatpush1.bf16.msra.mxu0 0
      %2663 = vmatprep.subr.bf16.mxu0 0
      %2664 = vmatpush1.bf16.msra.mxu0 0
      %2665 = vmatprep.subr.bf16.mxu0 0
      %2666 = vmatpush1.bf16.msra.mxu0 0
      %2667 = vmatprep.subr.bf16.mxu0 0
      %2668 = vmatpush1.bf16.msra.mxu0 0
      %2669 = vmatprep.subr.bf16.mxu0 0
      %2670 = vmatpush1.bf16.msra.mxu0 0
      %2671 = vmatprep.subr.bf16.mxu0 0
      %2672 = vmatpush1.bf16.msra.mxu0 0
      %2673 = vmatprep.subr.bf16.mxu0 0
      %2674 = vmatpush1.bf16.msra.mxu0 0
      %2675 = vmatprep.subr.bf16.mxu0 0
      %2676 = vmatpush1.bf16.msra.mxu0 0
      %2677 = vmatprep.subr.bf16.mxu0 0
      %2678 = vmatpush1.bf16.msra.mxu0 0
      %2679 = vmatprep.subr.bf16.mxu0 0
      %2680 = vmatpush1.bf16.msra.mxu0 0
      %2681 = vmatprep.mubr.bf16.mxu0 0
      %2682 = vmatmul.mubr.bf16.gmra.mrb[0].mxu0 %v2644
      %v2683 = vpop.f32.mrb[0].mxu0
      %v2684 = vadd.f32 0.0, %v2683
      %v2685 = vpop.f32.mrb[0].mxu0
      %v2686 = vpop.f32.mrb[0].mxu0
      %v2687 = vadd.f32 0.0, %v2686
      %v2688 = vpop.f32.mrb[0].mxu0
      %2689 = vmatprep.mubr.bf16.mxu0 0
      %2690 = vmatmul.mubr.bf16.gmra.mrb[0].mxu0 %v2647
      %v2691 = vpop.f32.mrb[0].mxu0
      %v2692 = vadd.f32 0.0, %v2691
      %v2693 = vpop.f32.mrb[0].mxu0
      %v2694 = vpop.f32.mrb[0].mxu0
      %v2695 = vpop.f32.mrb[0].mxu0
      %2696 = vdwg.mxu0
      %v2697 = vadd.f32 %v2606, %v2684
      %v2698 = vadd.f32 %v2607, %v2687
      %v2699 = vadd.f32 %v2608, %v2692
      %v2700 = vld [vmem:[#allocation3 + $0x10] sm:$0x7]
      %s2701 = scalar_lea.vmem %s4, 256
      %v2702 = vld [vmem:[%s2701] sm:$0xf]
      %v2703 = vld [vmem:[%s2701 + $0x4] sm:$0xf]
      %v2704 = vld [vmem:[%s2701 + $0x8] sm:$0xf]
      %v2705 = vld [vmem:[%s2701 + $0xc] sm:$0xf]
      %v2707 = vunpack.c.l.b16 %v2700
      %v2708 = vpack.c.b16 %v2707, %v2624
      %v2710 = vshrl.u32 %v2626, 16
      %v2712 = vrot.slane %v2710, 2
      %v2713 = vshll.u32 %v2626, 16
      %v2715 = vrot.slane %v2713, 3
      %v2716 = vor.u32 %v2712, %v2715
      %v2718 = vshrl.u32 %v2708, 16
      %v2720 = vrot.slane %v2718, 2
      %v2721 = vshll.u32 %v2708, 16
      %v2723 = vrot.slane %v2721, 3
      %v2724 = vor.u32 %v2720, %v2723
      %v2725 = vsel %vm920, %v2716, %v2724
      %v2730 = vunpack.c.l.b16 %v2702
      %v2731 = vunpack.c.l.b16 %v2703
      %v2732 = vunpack.c.l.b16 %v2704
      %v2733 = vunpack.c.l.b16 %v2705
      %v2734 = vpack.c.b16 %v2731, %v2730
      %v2735 = vpack.c.b16 %v2733, %v2732
      %v2739 = vsel %vm358, %v2725, 0
      %v2742 = vsel %vm358, %v2724, 0
      %2744 = vmatprep.subr.bf16.mxu0 0
      %2745 = vmatpush1.bf16.msra.mxu0 %v2734
      %2746 = vmatprep.subr.bf16.mxu0 0
      %2747 = vmatpush1.bf16.msra.mxu0 %v2735
      %2748 = vmatprep.subr.bf16.mxu0 0
      %2749 = vmatpush1.bf16.msra.mxu0 0
      %2750 = vmatprep.subr.bf16.mxu0 0
      %2751 = vmatpush1.bf16.msra.mxu0 0
      %2752 = vmatprep.subr.bf16.mxu0 0
      %2753 = vmatpush1.bf16.msra.mxu0 0
      %2754 = vmatprep.subr.bf16.mxu0 0
      %2755 = vmatpush1.bf16.msra.mxu0 0
      %2756 = vmatprep.subr.bf16.mxu0 0
      %2757 = vmatpush1.bf16.msra.mxu0 0
      %2758 = vmatprep.subr.bf16.mxu0 0
      %2759 = vmatpush1.bf16.msra.mxu0 0
      %2760 = vmatprep.subr.bf16.mxu0 0
      %2761 = vmatpush1.bf16.msra.mxu0 0
      %2762 = vmatprep.subr.bf16.mxu0 0
      %2763 = vmatpush1.bf16.msra.mxu0 0
      %2764 = vmatprep.subr.bf16.mxu0 0
      %2765 = vmatpush1.bf16.msra.mxu0 0
      %2766 = vmatprep.subr.bf16.mxu0 0
      %2767 = vmatpush1.bf16.msra.mxu0 0
      %2768 = vmatprep.subr.bf16.mxu0 0
      %2769 = vmatpush1.bf16.msra.mxu0 0
      %2770 = vmatprep.subr.bf16.mxu0 0
      %2771 = vmatpush1.bf16.msra.mxu0 0
      %2772 = vmatprep.subr.bf16.mxu0 0
      %2773 = vmatpush1.bf16.msra.mxu0 0
      %2774 = vmatprep.subr.bf16.mxu0 0
      %2775 = vmatpush1.bf16.msra.mxu0 0
      %2776 = vmatprep.mubr.bf16.mxu0 0
      %2777 = vmatmul.mubr.bf16.gmra.mrb[0].mxu0 %v2739
      %v2778 = vpop.f32.mrb[0].mxu0
      %v2779 = vadd.f32 0.0, %v2778
      %v2780 = vpop.f32.mrb[0].mxu0
      %v2781 = vpop.f32.mrb[0].mxu0
      %v2782 = vadd.f32 0.0, %v2781
      %v2783 = vpop.f32.mrb[0].mxu0
      %2784 = vmatprep.mubr.bf16.mxu0 0
      %2785 = vmatmul.mubr.bf16.gmra.mrb[0].mxu0 %v2742
      %v2786 = vpop.f32.mrb[0].mxu0
      %v2787 = vadd.f32 0.0, %v2786
      %v2788 = vpop.f32.mrb[0].mxu0
      %v2789 = vpop.f32.mrb[0].mxu0
      %v2790 = vpop.f32.mrb[0].mxu0
      %2791 = vdwg.mxu0
      %v2792 = vadd.f32 %v2697, %v2779
      %v2793 = vadd.f32 %v2698, %v2782
      %v2794 = vadd.f32 %v2699, %v2787
      %v2795 = vld [vmem:[#allocation3 + $0x4] sm:$0x8]
      %s2796 = scalar_lea.vmem %s4, 272
      %v2797 = vld [vmem:[%s2796] sm:$0xf]
      %v2798 = vld [vmem:[%s2796 + $0x4] sm:$0xf]
      %v2799 = vld [vmem:[%s2796 + $0x8] sm:$0xf]
      %v2800 = vld [vmem:[%s2796 + $0xc] sm:$0xf]
      %v2802 = vunpack.c.l.b16 %v2795
      %v2803 = vpack.c.b16 %v2623, %v2802
      %v2804 = vrot.slane %v2803, 3
      %v2805 = vrot.slane %v2708, 3
      %v2806 = vsel %vm574, %v2804, %v2805
      %v2811 = vunpack.c.l.b16 %v2797
      %v2812 = vunpack.c.l.b16 %v2798
      %v2813 = vunpack.c.l.b16 %v2799
      %v2814 = vunpack.c.l.b16 %v2800
      %v2815 = vpack.c.b16 %v2812, %v2811
      %v2816 = vpack.c.b16 %v2814, %v2813
      %v2820 = vsel %vm358, %v2806, 0
      %v2823 = vsel %vm358, %v2805, 0
      %2825 = vmatprep.subr.bf16.mxu0 0
      %2826 = vmatpush1.bf16.msra.mxu0 %v2815
      %2827 = vmatprep.subr.bf16.mxu0 0
      %2828 = vmatpush1.bf16.msra.mxu0 %v2816
      %2829 = vmatprep.subr.bf16.mxu0 0
      %2830 = vmatpush1.bf16.msra.mxu0 0
      %2831 = vmatprep.subr.bf16.mxu0 0
      %2832 = vmatpush1.bf16.msra.mxu0 0
      %2833 = vmatprep.subr.bf16.mxu0 0
      %2834 = vmatpush1.bf16.msra.mxu0 0
      %2835 = vmatprep.subr.bf16.mxu0 0
      %2836 = vmatpush1.bf16.msra.mxu0 0
      %2837 = vmatprep.subr.bf16.mxu0 0
      %2838 = vmatpush1.bf16.msra.mxu0 0
      %2839 = vmatprep.subr.bf16.mxu0 0
      %2840 = vmatpush1.bf16.msra.mxu0 0
      %2841 = vmatprep.subr.bf16.mxu0 0
      %2842 = vmatpush1.bf16.msra.mxu0 0
      %2843 = vmatprep.subr.bf16.mxu0 0
      %2844 = vmatpush1.bf16.msra.mxu0 0
      %2845 = vmatprep.subr.bf16.mxu0 0
      %2846 = vmatpush1.bf16.msra.mxu0 0
      %2847 = vmatprep.subr.bf16.mxu0 0
      %2848 = vmatpush1.bf16.msra.mxu0 0
      %2849 = vmatprep.subr.bf16.mxu0 0
      %2850 = vmatpush1.bf16.msra.mxu0 0
      %2851 = vmatprep.subr.bf16.mxu0 0
      %2852 = vmatpush1.bf16.msra.mxu0 0
      %2853 = vmatprep.subr.bf16.mxu0 0
      %2854 = vmatpush1.bf16.msra.mxu0 0
      %2855 = vmatprep.subr.bf16.mxu0 0
      %2856 = vmatpush1.bf16.msra.mxu0 0
      %2857 = vmatprep.mubr.bf16.mxu0 0
      %2858 = vmatmul.mubr.bf16.gmra.mrb[0].mxu0 %v2820
      %v2859 = vpop.f32.mrb[0].mxu0
      %v2860 = vadd.f32 0.0, %v2859
      %v2861 = vpop.f32.mrb[0].mxu0
      %v2862 = vpop.f32.mrb[0].mxu0
      %v2863 = vadd.f32 0.0, %v2862
      %v2864 = vpop.f32.mrb[0].mxu0
      %2865 = vmatprep.mubr.bf16.mxu0 0
      %2866 = vmatmul.mubr.bf16.gmra.mrb[0].mxu0 %v2823
      %v2867 = vpop.f32.mrb[0].mxu0
      %v2868 = vadd.f32 0.0, %v2867
      %v2869 = vpop.f32.mrb[0].mxu0
      %v2870 = vpop.f32.mrb[0].mxu0
      %v2871 = vpop.f32.mrb[0].mxu0
      %2872 = vdwg.mxu0
      %v2873 = vadd.f32 %v2792, %v2860
      %v2874 = vadd.f32 %v2793, %v2863
      %v2875 = vadd.f32 %v2794, %v2868
      %s2876 = scalar_lea.vmem %s5, 1
      %v2877 = vld [vmem:[%s2876] sm:$0x1]
      %v2879 = vlaneseq
      %v2880 = vshrl.u32 %v2879, 7
      %v2881 = vsub.s32 0, %v2880
      %v2882 = vrot.slane %v2877, %v2881
      %v2884 = vadd.f32 %v2873, %v2882
      %v2885 = vadd.f32 %v2874, %v2882
      %v2886 = vadd.f32 %v2875, %v2882
      %v2887 = vmax.f32 %v2884, 0.0
      %v2888 = vmax.f32 %v2885, 0.0
      %v2889 = vmax.f32 %v2886, 0.0
      %v2890 = vld [vmem:[#allocation2 + $0x7] sm:$0xff]
      %v2891 = vld [vmem:[#allocation2 + $0xf] sm:$0xff]
      %v2892 = vld [vmem:[#allocation2 + $0x17] sm:$0xff]
      %v2893 = vpack.c.bf16 %v2888, %v2887
      %v2894 = vpack.c.bf16 %v2889, %v2889
      %s2895 = scalar_lea.vmem %s6, 4
      %v2896 = vld [vmem:[%s2895] sm:$0xf]
      %s2897 = scalar_lea.vmem %s7, 1
      %v2898 = vld [vmem:[%s2897] sm:$0x1]
      %v2900 = vlaneseq
      %v2901 = vshrl.u32 %v2900, 7
      %v2902 = vsub.s32 0, %v2901
      %v2903 = vrot.slane %v2898, %v2902
      %v2906 = vsel %vm1973, %v2893, 0
      %v2909 = vsel %vm1973, %v2894, 0
      %v2912 = vsel %vm1980, %v2896, 0
      %2914 = vmatprep.subr.bf16.mxu0 0
      %2915 = vmatpush1.bf16.msra.mxu0 %v2912
      %2916 = vmatprep.subr.bf16.mxu0 0
      %2917 = vmatpush1.bf16.msra.mxu0 0
      %2918 = vmatprep.subr.bf16.mxu0 0
      %2919 = vmatpush1.bf16.msra.mxu0 0
      %2920 = vmatprep.subr.bf16.mxu0 0
      %2921 = vmatpush1.bf16.msra.mxu0 0
      %2922 = vmatprep.subr.bf16.mxu0 0
      %2923 = vmatpush1.bf16.msra.mxu0 0
      %2924 = vmatprep.subr.bf16.mxu0 0
      %2925 = vmatpush1.bf16.msra.mxu0 0
      %2926 = vmatprep.subr.bf16.mxu0 0
      %2927 = vmatpush1.bf16.msra.mxu0 0
      %2928 = vmatprep.subr.bf16.mxu0 0
      %2929 = vmatpush1.bf16.msra.mxu0 0
      %2930 = vmatprep.subr.bf16.mxu0 0
      %2931 = vmatpush1.bf16.msra.mxu0 0
      %2932 = vmatprep.subr.bf16.mxu0 0
      %2933 = vmatpush1.bf16.msra.mxu0 0
      %2934 = vmatprep.subr.bf16.mxu0 0
      %2935 = vmatpush1.bf16.msra.mxu0 0
      %2936 = vmatprep.subr.bf16.mxu0 0
      %2937 = vmatpush1.bf16.msra.mxu0 0
      %2938 = vmatprep.subr.bf16.mxu0 0
      %2939 = vmatpush1.bf16.msra.mxu0 0
      %2940 = vmatprep.subr.bf16.mxu0 0
      %2941 = vmatpush1.bf16.msra.mxu0 0
      %2942 = vmatprep.subr.bf16.mxu0 0
      %2943 = vmatpush1.bf16.msra.mxu0 0
      %2944 = vmatprep.subr.bf16.mxu0 0
      %2945 = vmatpush1.bf16.msra.mxu0 0
      %2946 = vmatprep.mubr.bf16.mxu0 0
      %2947 = vmatmul.mubr.bf16.gmra.mrb[0].mxu0 %v2906
      %v2948 = vpop.f32.mrb[0].mxu0
      %v2949 = vadd.f32 %v2903, %v2948
      %v2950 = vpop.f32.mrb[0].mxu0
      %v2951 = vpop.f32.mrb[0].mxu0
      %v2952 = vadd.f32 %v2903, %v2951
      %v2953 = vpop.f32.mrb[0].mxu0
      %2954 = vmatprep.mubr.bf16.mxu0 0
      %2955 = vmatmul.mubr.bf16.gmra.mrb[0].mxu0 %v2909
      %v2956 = vpop.f32.mrb[0].mxu0
      %v2957 = vadd.f32 %v2903, %v2956
      %v2958 = vpop.f32.mrb[0].mxu0
      %v2959 = vpop.f32.mrb[0].mxu0
      %v2960 = vpop.f32.mrb[0].mxu0
      %2961 = vdwg.mxu0
      %v2962 = vadd.f32 %v2949, %v2890
      %v2963 = vadd.f32 %v2952, %v2891
      %v2964 = vadd.f32 %v2957, %v2892
      %v2965 = vmax.f32 %v2962, 0.0
      %v2966 = vmax.f32 %v2963, 0.0
      %v2967 = vmax.f32 %v2964, 0.0
      %2968 = vst.msk [vmem:[%s305] sm:$0xff] %vm358, %v2965
      %2969 = vst.msk [vmem:[%s305 + $0x8] sm:$0xff] %vm358, %v2966
      %2970 = vst.msk [vmem:[%s305 + $0x10] sm:$0xff] %vm358, %v2967
      %p2971 = scmp.lt.s32.totalorder %s19, 1
      %s2972 = scalar_select %p2971, %s19, 1
      %s2973 = smul.addr %s2972, 3
      %s2974 = smul.addr %s2973, 8
      %s2975 = scalar_lea.vmem %s8, %s2974
      // Predicated region
      $region53: #{encoder_forward.5} parent=51 // pred_check
        %p2976 = pneg %p210
      $region54: #{encoder_forward.5} parent=51 // pred_check_branch
        %2978 = sbr.rel (%p2976) target = $region56
      $region55: #{encoder_forward.5} parent=51 // pred_region
        _
      $region56: #{encoder_forward.5} parent=51 // pred_fallthru
        _
    $region52: #{encoder_forward.5} parent=5 // pred_fallthru
      _
    %p2979 = scmp.le.s32.totalorder 2, %s14
    // Predicated region
    $region57: #{encoder_forward.5} parent=5 // pred_check
      %p2980 = pneg %p2979
    $region58: #{encoder_forward.5} parent=5 // pred_check_branch
      %2982 = sbr.rel (%p2980) target = $region60
    $region59: #{encoder_forward.5} parent=5 // pred_region
      %s2983 = ssub.s32 %s14, 2
      // Predicated region
      $region61: #{encoder_forward.5} parent=59 // pred_check
        %p2984 = pneg %p216
      $region62: #{encoder_forward.5} parent=59 // pred_check_branch
        %2986 = sbr.rel (%p2984) target = $region64
      $region63: #{encoder_forward.5} parent=59 // pred_region
        %p2987 = scmp.lt.s32.totalorder %s20, 1
        %s2988 = scalar_select %p2987, %s20, 1
        %s2989 = smul.addr %s2988, 3
        %s2990 = smul.addr %s2989, 8
        %s2991 = scalar_lea.vmem %s8, %s2990
      $region64: #{encoder_forward.5} parent=59 // pred_fallthru
        _
    $region60: #{encoder_forward.5} parent=5 // pred_fallthru
      _
  $region6: #{encoder_forward.5} parent=0 // loop_footer
    %s18 = sadd.s32 1, %s14
  $region7: #{encoder_forward.5} parent=0 // loop_footer_branch
    %13 = sbr.rel target = $region3
  $region8: #{encoder_forward.5} parent=0 // loop_exit
    _

</llo_original>
